<compile_context>
chip_gen: v7x
topology: tpu7x:2x2x1
jax: 0.10.0
libtpu: 0.0.40
codegen_flags: <defaults>
</compile_context>

<pallas_src>
import functools

import jax
import jax.numpy as jnp
from jax.experimental import pallas as pl
from jax.experimental.pallas import tpu as pltpu

EPS = 1e-5  # torch.nn.LayerNorm default


def _layernorm(x, gamma, beta):
    mu = jnp.mean(x, axis=-1, keepdims=True)
    var = jnp.mean((x - mu) ** 2, axis=-1, keepdims=True)
    return (x - mu) * jax.lax.rsqrt(var + EPS) * gamma + beta


def encoder_block_kernel(
    x_ref,                               # (Bblk, T, C)  f32
    g1_ref, be1_ref,                     # ln1 gamma / beta        (1, C)  f32
    wkqv_ref,                            # fused k|q|v weights     (C, 3C) bf16
    wp_ref, bp_ref,                      # attention out proj      (C, C) bf16, (1, C) f32
    g2_ref, be2_ref,                     # ln2 gamma / beta        (1, C)  f32
    w1_ref, b1_ref,                      # ffwd fc1                (C, 4C) bf16, (1, 4C) f32
    w2_ref, b2_ref,                      # ffwd fc2                (4C, C) bf16, (1, C) f32
    o_ref,                               # (Bblk, T, C)
    *,
    mxu_dtype,
):
    Bblk, T, C = x_ref.shape
    rows = Bblk * T
    x = x_ref[...].astype(jnp.float32).reshape(rows, C)

    # ---- x + SelfAttention(LayerNorm1(x)) --------------------------------
    h = _layernorm(x, g1_ref[0], be1_ref[0])

    # fused QKV projection: one (rows, C) x (C, 3C) matmul, f32 accumulation.
    kqv = jnp.dot(h.astype(mxu_dtype), wkqv_ref[...],
                  preferred_element_type=jnp.float32)            # (rows, 3C)
    k = kqv[:, 0 * C:1 * C].reshape(Bblk, T, C)
    q = kqv[:, 1 * C:2 * C].reshape(Bblk, T, C)
    v = kqv[:, 2 * C:3 * C].reshape(Bblk, T, C)

    # scores: contract last dims of q and k (no explicit transpose); scale by
    # C**-0.5 (C == head_size here since n_head == 1), matching the reference.
    wei = jnp.einsum("btd,bsd->bts", q.astype(mxu_dtype), k.astype(mxu_dtype),
                     preferred_element_type=jnp.float32) * (C ** -0.5)
    wei = wei - jnp.max(wei, axis=-1, keepdims=True)
    p = jnp.exp(wei)
    p = p * pl.reciprocal(jnp.sum(p, axis=-1, keepdims=True), approx=True)

    att = jnp.einsum("bts,bsd->btd", p.astype(mxu_dtype), v.astype(mxu_dtype),
                     preferred_element_type=jnp.float32)         # (Bblk, T, C)
    att = att.reshape(rows, C)

    sa = jnp.dot(att.astype(mxu_dtype), wp_ref[...],
                 preferred_element_type=jnp.float32) + bp_ref[0]
    x1 = x + sa

    # ---- x + FeedForward(LayerNorm2(x)) ----------------------------------
    h2 = _layernorm(x1, g2_ref[0], be2_ref[0])
    hidden = jnp.dot(h2.astype(mxu_dtype), w1_ref[...],
                     preferred_element_type=jnp.float32) + b1_ref[0]
    hidden = jnp.maximum(hidden, 0.0)
    ff = jnp.dot(hidden.astype(mxu_dtype), w2_ref[...],
                 preferred_element_type=jnp.float32) + b2_ref[0]

    o_ref[...] = (x1 + ff).reshape(Bblk, T, C).astype(o_ref.dtype)


def _choose_block_batch(B, T):
    """Batch elements per grid step: fill MXU rows but keep >=2 grid steps (v7x)."""
    target_rows = 256
    bblk = max(1, min(B, target_rows // max(T, 1)))
    while bblk > 1 and B % bblk != 0:
        bblk -= 1
    if bblk > 1 and B // bblk < 2:           # leave work for the 2nd TensorCore
        bblk = max(1, bblk // 2)
        while bblk > 1 and B % bblk != 0:
            bblk -= 1
    return bblk


def encoder_block(x, params, *, mxu_dtype=jnp.bfloat16):
    """x: (B, T, C) float32.  params: dict of f32 weights (see init_params)."""
    B, T, C = x.shape
    bblk = _choose_block_batch(B, T)
    grid = (B // bblk,)

    # Fuse K/Q/V weights; cast MXU operands to bf16, keep LN params/biases f32.
    wkqv = jnp.concatenate([params["wk"], params["wq"], params["wv"]], axis=1)
    param_arrays = [
        params["ln1_g"], params["ln1_b"],
        wkqv.astype(mxu_dtype),
        params["wproj"].astype(mxu_dtype), params["bproj"],
        params["ln2_g"], params["ln2_b"],
        params["w1"].astype(mxu_dtype), params["b1"],
        params["w2"].astype(mxu_dtype), params["b2"],
    ]

    def full_spec(a):
        nd = a.ndim
        return pl.BlockSpec(a.shape, lambda b, _nd=nd: (0,) * _nd)

    in_specs = [pl.BlockSpec((bblk, T, C), lambda b: (b, 0, 0))]
    in_specs += [full_spec(a) for a in param_arrays]

    # Advisory cost hint for XLA scheduling around the custom call.
    flops = 24 * B * T * C * C + 4 * B * T * T * C
    bytes_accessed = (2 * x.size * x.dtype.itemsize
                      + sum(int(a.size) * a.dtype.itemsize for a in param_arrays))
    cost = pl.CostEstimate(flops=flops, transcendentals=B * T * T,
                           bytes_accessed=bytes_accessed)

    return pl.pallas_call(
        functools.partial(encoder_block_kernel, mxu_dtype=mxu_dtype),
        out_shape=jax.ShapeDtypeStruct((B, T, C), x.dtype),
        grid=grid,
        in_specs=in_specs,
        out_specs=pl.BlockSpec((bblk, T, C), lambda b: (b, 0, 0)),
        compiler_params=pltpu.CompilerParams(
            dimension_semantics=("parallel",),
            vmem_limit_bytes=32 * 1024 * 1024,
        ),
        cost_estimate=cost,
    )(x, *param_arrays)


def init_params(key, n_embd):
    """Deterministic synthetic parameters matching EncoderBlock's shapes (f32)."""
    C = n_embd
    H = C          # head_size = n_embd // n_head, n_head = 1
    hid = 4 * C
    ks = jax.random.split(key, 8)
    scale = 0.02
    return {
        "ln1_g": jnp.ones((1, C), jnp.float32),
        "ln1_b": jnp.zeros((1, C), jnp.float32),
        "wk": scale * jax.random.normal(ks[0], (C, H), jnp.float32),
        "wq": scale * jax.random.normal(ks[1], (C, H), jnp.float32),
        "wv": scale * jax.random.normal(ks[2], (C, H), jnp.float32),
        "wproj": scale * jax.random.normal(ks[3], (C, C), jnp.float32),
        "bproj": scale * jax.random.normal(ks[4], (1, C), jnp.float32),
        "ln2_g": jnp.ones((1, C), jnp.float32),
        "ln2_b": jnp.zeros((1, C), jnp.float32),
        "w1": scale * jax.random.normal(ks[5], (C, hid), jnp.float32),
        "b1": jnp.zeros((1, hid), jnp.float32),
        "w2": scale * jax.random.normal(ks[6], (hid, C), jnp.float32),
        "b2": jnp.zeros((1, C), jnp.float32),
    }


def encoder_block_ref(x, p):
    """Pure-JAX f32 reference mirroring the PyTorch forward (dropout=0)."""
    C = x.shape[-1]
    h = _layernorm(x, p["ln1_g"][0], p["ln1_b"][0])
    k = h @ p["wk"]
    q = h @ p["wq"]
    v = h @ p["wv"]
    wei = jnp.einsum("btd,bsd->bts", q, k) * (C ** -0.5)
    wei = jax.nn.softmax(wei, axis=-1)
    att = jnp.einsum("bts,bsd->btd", wei, v)
    sa = att @ p["wproj"] + p["bproj"][0]
    x1 = x + sa
    h2 = _layernorm(x1, p["ln2_g"][0], p["ln2_b"][0])
    ff = jnp.maximum(h2 @ p["w1"] + p["b1"][0], 0.0) @ p["w2"] + p["b2"][0]
    return x1 + ff


if __name__ == "__main__":
    # n_embd = 256 as in the module spec (keeps last dims lane-dense);
    # small batch / sequence so the script stays quick.
    B, T, C = 4, 64, 256
    key = jax.random.PRNGKey(0)
    kx, kp = jax.random.split(key)
    x = jax.random.normal(kx, (B, T, C), jnp.float32)
    params = init_params(kp, C)

    out = jax.block_until_ready(encoder_block(x, params))

    ref = encoder_block_ref(x, params)
    assert out.shape == (B, T, C)
    # bf16 MXU operands + approx reciprocal -> loosen tolerance (precision, not a bug).
    max_err = float(jnp.max(jnp.abs(out - ref)))
    assert jnp.allclose(out, ref, atol=5e-2, rtol=5e-2), max_err
    print("KERNEL_OK")
</pallas_src>

<mosaic_0001>
module attributes {stable_mosaic.version = 11 : i64} {
  func.func @encoder_block_kernel(%arg0: i32, %arg1: memref<2x64x256xf32, #tpu.memory_space<vmem>>, %arg2: memref<1x256xf32, #tpu.memory_space<vmem>>, %arg3: memref<1x256xf32, #tpu.memory_space<vmem>>, %arg4: memref<256x768xbf16, #tpu.memory_space<vmem>>, %arg5: memref<256x256xbf16, #tpu.memory_space<vmem>>, %arg6: memref<1x256xf32, #tpu.memory_space<vmem>>, %arg7: memref<1x256xf32, #tpu.memory_space<vmem>>, %arg8: memref<1x256xf32, #tpu.memory_space<vmem>>, %arg9: memref<256x1024xbf16, #tpu.memory_space<vmem>>, %arg10: memref<1x1024xf32, #tpu.memory_space<vmem>>, %arg11: memref<1024x256xbf16, #tpu.memory_space<vmem>>, %arg12: memref<1x256xf32, #tpu.memory_space<vmem>>, %arg13: memref<2x64x256xf32, #tpu.memory_space<vmem>>) attributes {dimension_semantics = [#tpu.dimension_semantics<parallel>], iteration_bounds = array<i64: 2>, scalar_prefetch = 0 : i64, scratch_operands = 0 : i64, tpu.core_type = #tpu.core_type<tc>, window_params = [{transform_indices = @transform_0, window_bounds = array<i64: 2, 64, 256>}, {pipeline_mode = #tpu.pipeline_mode<synchronous>, transform_indices = @transform_1, window_bounds = array<i64: 1, 256>}, {pipeline_mode = #tpu.pipeline_mode<synchronous>, transform_indices = @transform_2, window_bounds = array<i64: 1, 256>}, {pipeline_mode = #tpu.pipeline_mode<synchronous>, transform_indices = @transform_3, window_bounds = array<i64: 256, 768>}, {pipeline_mode = #tpu.pipeline_mode<synchronous>, transform_indices = @transform_4, window_bounds = array<i64: 256, 256>}, {pipeline_mode = #tpu.pipeline_mode<synchronous>, transform_indices = @transform_5, window_bounds = array<i64: 1, 256>}, {pipeline_mode = #tpu.pipeline_mode<synchronous>, transform_indices = @transform_6, window_bounds = array<i64: 1, 256>}, {pipeline_mode = #tpu.pipeline_mode<synchronous>, transform_indices = @transform_7, window_bounds = array<i64: 1, 256>}, {pipeline_mode = #tpu.pipeline_mode<synchronous>, transform_indices = @transform_8, window_bounds = array<i64: 256, 1024>}, {pipeline_mode = #tpu.pipeline_mode<synchronous>, transform_indices = @transform_9, window_bounds = array<i64: 1, 1024>}, {pipeline_mode = #tpu.pipeline_mode<synchronous>, transform_indices = @transform_10, window_bounds = array<i64: 1024, 256>}, {pipeline_mode = #tpu.pipeline_mode<synchronous>, transform_indices = @transform_11, window_bounds = array<i64: 1, 256>}, {transform_indices = @transform_12, window_bounds = array<i64: 2, 64, 256>}]} {
    %c0 = arith.constant 0 : index
    %c0_0 = arith.constant 0 : index
    %c0_1 = arith.constant 0 : index
    %0 = vector.load %arg1[%c0, %c0_0, %c0_1] : memref<2x64x256xf32, #tpu.memory_space<vmem>>, vector<2x64x256xf32>
    %1 = vector.shape_cast %0 : vector<2x64x256xf32> to vector<128x256xf32>
    %c0_2 = arith.constant 0 : index
    %c0_3 = arith.constant 0 : index
    %2 = vector.load %arg2[%c0_2, %c0_3] : memref<1x256xf32, #tpu.memory_space<vmem>>, vector<1x256xf32>
    %3 = vector.shape_cast %2 : vector<1x256xf32> to vector<256xf32>
    %c0_4 = arith.constant 0 : index
    %c0_5 = arith.constant 0 : index
    %4 = vector.load %arg3[%c0_4, %c0_5] : memref<1x256xf32, #tpu.memory_space<vmem>>, vector<1x256xf32>
    %5 = vector.shape_cast %4 : vector<1x256xf32> to vector<256xf32>
    %cst = arith.constant dense<0.000000e+00> : vector<128xf32>
    %6 = vector.multi_reduction <add>, %1, %cst [1] : vector<128x256xf32> to vector<128xf32>
    %7 = vector.shape_cast %6 : vector<128xf32> to vector<128x1xf32>
    %cst_6 = arith.constant 2.560000e+02 : f32
    %8 = vector.broadcast %cst_6 : f32 to vector<128x1xf32>
    %9 = arith.divf %7, %8 : vector<128x1xf32>
    %10 = vector.broadcast %9 : vector<128x1xf32> to vector<128x256xf32>
    %11 = arith.subf %1, %10 : vector<128x256xf32>
    %12 = arith.mulf %11, %11 : vector<128x256xf32>
    %cst_7 = arith.constant dense<0.000000e+00> : vector<128xf32>
    %13 = vector.multi_reduction <add>, %12, %cst_7 [1] : vector<128x256xf32> to vector<128xf32>
    %14 = vector.shape_cast %13 : vector<128xf32> to vector<128x1xf32>
    %cst_8 = arith.constant 2.560000e+02 : f32
    %15 = vector.broadcast %cst_8 : f32 to vector<128x1xf32>
    %16 = arith.divf %14, %15 : vector<128x1xf32>
    %17 = vector.broadcast %9 : vector<128x1xf32> to vector<128x256xf32>
    %18 = arith.subf %1, %17 : vector<128x256xf32>
    %cst_9 = arith.constant 9.99999974E-6 : f32
    %19 = vector.broadcast %cst_9 : f32 to vector<128x1xf32>
    %20 = arith.addf %16, %19 : vector<128x1xf32>
    %21 = math.rsqrt %20 : vector<128x1xf32>
    %22 = vector.broadcast %21 : vector<128x1xf32> to vector<128x256xf32>
    %23 = arith.mulf %18, %22 : vector<128x256xf32>
    %24 = vector.shape_cast %3 : vector<256xf32> to vector<1x256xf32>
    %25 = vector.broadcast %24 : vector<1x256xf32> to vector<128x256xf32>
    %26 = arith.mulf %23, %25 : vector<128x256xf32>
    %27 = vector.shape_cast %5 : vector<256xf32> to vector<1x256xf32>
    %28 = vector.broadcast %27 : vector<1x256xf32> to vector<128x256xf32>
    %29 = arith.addf %26, %28 : vector<128x256xf32>
    %30 = arith.truncf %29 : vector<128x256xf32> to vector<128x256xbf16>
    %c0_10 = arith.constant 0 : index
    %c0_11 = arith.constant 0 : index
    %31 = vector.load %arg4[%c0_10, %c0_11] : memref<256x768xbf16, #tpu.memory_space<vmem>>, vector<256x768xbf16>
    %cst_12 = arith.constant dense<0.000000e+00> : vector<128x768xf32>
    %32 = tpu.matmul %30, %31, %cst_12 {dimension_numbers = #tpu.dot_dimension_numbers<[1], [0], [0], [1], [0, 0, 1, 1], [], []>} : vector<128x256xbf16>, vector<256x768xbf16>, vector<128x768xf32> -> vector<128x768xf32>
    %33 = vector.extract_strided_slice %32 {offsets = [0, 0], sizes = [128, 256], strides = [1, 1]} : vector<128x768xf32> to vector<128x256xf32>
    %34 = vector.shape_cast %33 : vector<128x256xf32> to vector<2x64x256xf32>
    %35 = vector.extract_strided_slice %32 {offsets = [0, 256], sizes = [128, 256], strides = [1, 1]} : vector<128x768xf32> to vector<128x256xf32>
    %36 = vector.shape_cast %35 : vector<128x256xf32> to vector<2x64x256xf32>
    %37 = vector.extract_strided_slice %32 {offsets = [0, 512], sizes = [128, 256], strides = [1, 1]} : vector<128x768xf32> to vector<128x256xf32>
    %38 = vector.shape_cast %37 : vector<128x256xf32> to vector<2x64x256xf32>
    %39 = arith.truncf %36 : vector<2x64x256xf32> to vector<2x64x256xbf16>
    %40 = arith.truncf %34 : vector<2x64x256xf32> to vector<2x64x256xbf16>
    "tpu.trace_start"() <{level = 10 : i32, message = "btd,bsd->bts"}> : () -> ()
    %cst_13 = arith.constant dense<0.000000e+00> : vector<2x64x64xf32>
    %41 = tpu.matmul %39, %40, %cst_13 {dimension_numbers = #tpu.dot_dimension_numbers<[2], [2], [1], [1], [0, 0, 0, 1, 1, 1], [0], [0]>} : vector<2x64x256xbf16>, vector<2x64x256xbf16>, vector<2x64x64xf32> -> vector<2x64x64xf32>
    "tpu.trace_stop"() : () -> ()
    %cst_14 = arith.constant 6.250000e-02 : f32
    %42 = vector.broadcast %cst_14 : f32 to vector<2x64x64xf32>
    %43 = arith.mulf %41, %42 : vector<2x64x64xf32>
    %cst_15 = arith.constant dense<0xFF800000> : vector<2x64xf32>
    %44 = vector.multi_reduction <maximumf>, %43, %cst_15 [2] : vector<2x64x64xf32> to vector<2x64xf32>
    %45 = vector.shape_cast %44 : vector<2x64xf32> to vector<2x64x1xf32>
    %46 = vector.broadcast %45 : vector<2x64x1xf32> to vector<2x64x64xf32>
    %47 = arith.subf %43, %46 : vector<2x64x64xf32>
    %48 = math.exp %47 : vector<2x64x64xf32>
    %cst_16 = arith.constant dense<0.000000e+00> : vector<2x64xf32>
    %49 = vector.multi_reduction <add>, %48, %cst_16 [2] : vector<2x64x64xf32> to vector<2x64xf32>
    %50 = vector.shape_cast %49 : vector<2x64xf32> to vector<2x64x1xf32>
    %51 = tpu.reciprocal %50 {approx = true} : vector<2x64x1xf32> -> vector<2x64x1xf32>
    %52 = vector.broadcast %51 : vector<2x64x1xf32> to vector<2x64x64xf32>
    %53 = arith.mulf %48, %52 : vector<2x64x64xf32>
    %54 = arith.truncf %53 : vector<2x64x64xf32> to vector<2x64x64xbf16>
    %55 = arith.truncf %38 : vector<2x64x256xf32> to vector<2x64x256xbf16>
    "tpu.trace_start"() <{level = 10 : i32, message = "bts,bsd->btd"}> : () -> ()
    %cst_17 = arith.constant dense<0.000000e+00> : vector<2x64x256xf32>
    %56 = tpu.matmul %54, %55, %cst_17 {dimension_numbers = #tpu.dot_dimension_numbers<[2], [1], [1], [2], [0, 0, 0, 1, 1, 2], [0], [0]>} : vector<2x64x64xbf16>, vector<2x64x256xbf16>, vector<2x64x256xf32> -> vector<2x64x256xf32>
    "tpu.trace_stop"() : () -> ()
    %57 = vector.shape_cast %56 : vector<2x64x256xf32> to vector<128x256xf32>
    %58 = arith.truncf %57 : vector<128x256xf32> to vector<128x256xbf16>
    %c0_18 = arith.constant 0 : index
    %c0_19 = arith.constant 0 : index
    %59 = vector.load %arg5[%c0_18, %c0_19] : memref<256x256xbf16, #tpu.memory_space<vmem>>, vector<256x256xbf16>
    %cst_20 = arith.constant dense<0.000000e+00> : vector<128x256xf32>
    %60 = tpu.matmul %58, %59, %cst_20 {dimension_numbers = #tpu.dot_dimension_numbers<[1], [0], [0], [1], [0, 0, 1, 1], [], []>} : vector<128x256xbf16>, vector<256x256xbf16>, vector<128x256xf32> -> vector<128x256xf32>
    %c0_21 = arith.constant 0 : index
    %c0_22 = arith.constant 0 : index
    %61 = vector.load %arg6[%c0_21, %c0_22] : memref<1x256xf32, #tpu.memory_space<vmem>>, vector<1x256xf32>
    %62 = vector.shape_cast %61 : vector<1x256xf32> to vector<256xf32>
    %63 = vector.shape_cast %62 : vector<256xf32> to vector<1x256xf32>
    %64 = vector.broadcast %63 : vector<1x256xf32> to vector<128x256xf32>
    %65 = arith.addf %60, %64 : vector<128x256xf32>
    %66 = arith.addf %1, %65 : vector<128x256xf32>
    %c0_23 = arith.constant 0 : index
    %c0_24 = arith.constant 0 : index
    %67 = vector.load %arg7[%c0_23, %c0_24] : memref<1x256xf32, #tpu.memory_space<vmem>>, vector<1x256xf32>
    %68 = vector.shape_cast %67 : vector<1x256xf32> to vector<256xf32>
    %c0_25 = arith.constant 0 : index
    %c0_26 = arith.constant 0 : index
    %69 = vector.load %arg8[%c0_25, %c0_26] : memref<1x256xf32, #tpu.memory_space<vmem>>, vector<1x256xf32>
    %70 = vector.shape_cast %69 : vector<1x256xf32> to vector<256xf32>
    %cst_27 = arith.constant dense<0.000000e+00> : vector<128xf32>
    %71 = vector.multi_reduction <add>, %66, %cst_27 [1] : vector<128x256xf32> to vector<128xf32>
    %72 = vector.shape_cast %71 : vector<128xf32> to vector<128x1xf32>
    %cst_28 = arith.constant 2.560000e+02 : f32
    %73 = vector.broadcast %cst_28 : f32 to vector<128x1xf32>
    %74 = arith.divf %72, %73 : vector<128x1xf32>
    %75 = vector.broadcast %74 : vector<128x1xf32> to vector<128x256xf32>
    %76 = arith.subf %66, %75 : vector<128x256xf32>
    %77 = arith.mulf %76, %76 : vector<128x256xf32>
    %cst_29 = arith.constant dense<0.000000e+00> : vector<128xf32>
    %78 = vector.multi_reduction <add>, %77, %cst_29 [1] : vector<128x256xf32> to vector<128xf32>
    %79 = vector.shape_cast %78 : vector<128xf32> to vector<128x1xf32>
    %cst_30 = arith.constant 2.560000e+02 : f32
    %80 = vector.broadcast %cst_30 : f32 to vector<128x1xf32>
    %81 = arith.divf %79, %80 : vector<128x1xf32>
    %82 = vector.broadcast %74 : vector<128x1xf32> to vector<128x256xf32>
    %83 = arith.subf %66, %82 : vector<128x256xf32>
    %cst_31 = arith.constant 9.99999974E-6 : f32
    %84 = vector.broadcast %cst_31 : f32 to vector<128x1xf32>
    %85 = arith.addf %81, %84 : vector<128x1xf32>
    %86 = math.rsqrt %85 : vector<128x1xf32>
    %87 = vector.broadcast %86 : vector<128x1xf32> to vector<128x256xf32>
    %88 = arith.mulf %83, %87 : vector<128x256xf32>
    %89 = vector.shape_cast %68 : vector<256xf32> to vector<1x256xf32>
    %90 = vector.broadcast %89 : vector<1x256xf32> to vector<128x256xf32>
    %91 = arith.mulf %88, %90 : vector<128x256xf32>
    %92 = vector.shape_cast %70 : vector<256xf32> to vector<1x256xf32>
    %93 = vector.broadcast %92 : vector<1x256xf32> to vector<128x256xf32>
    %94 = arith.addf %91, %93 : vector<128x256xf32>
    %95 = arith.truncf %94 : vector<128x256xf32> to vector<128x256xbf16>
    %c0_32 = arith.constant 0 : index
    %c0_33 = arith.constant 0 : index
    %96 = vector.load %arg9[%c0_32, %c0_33] : memref<256x1024xbf16, #tpu.memory_space<vmem>>, vector<256x1024xbf16>
    %cst_34 = arith.constant dense<0.000000e+00> : vector<128x1024xf32>
    %97 = tpu.matmul %95, %96, %cst_34 {dimension_numbers = #tpu.dot_dimension_numbers<[1], [0], [0], [1], [0, 0, 1, 1], [], []>} : vector<128x256xbf16>, vector<256x1024xbf16>, vector<128x1024xf32> -> vector<128x1024xf32>
    %c0_35 = arith.constant 0 : index
    %c0_36 = arith.constant 0 : index
    %98 = vector.load %arg10[%c0_35, %c0_36] : memref<1x1024xf32, #tpu.memory_space<vmem>>, vector<1x1024xf32>
    %99 = vector.shape_cast %98 : vector<1x1024xf32> to vector<1024xf32>
    %100 = vector.shape_cast %99 : vector<1024xf32> to vector<1x1024xf32>
    %101 = vector.broadcast %100 : vector<1x1024xf32> to vector<128x1024xf32>
    %102 = arith.addf %97, %101 : vector<128x1024xf32>
    %cst_37 = arith.constant 0.000000e+00 : f32
    %103 = vector.broadcast %cst_37 : f32 to vector<128x1024xf32>
    %104 = arith.maximumf %102, %103 : vector<128x1024xf32>
    %105 = arith.truncf %104 : vector<128x1024xf32> to vector<128x1024xbf16>
    %c0_38 = arith.constant 0 : index
    %c0_39 = arith.constant 0 : index
    %106 = vector.load %arg11[%c0_38, %c0_39] : memref<1024x256xbf16, #tpu.memory_space<vmem>>, vector<1024x256xbf16>
    %cst_40 = arith.constant dense<0.000000e+00> : vector<128x256xf32>
    %107 = tpu.matmul %105, %106, %cst_40 {dimension_numbers = #tpu.dot_dimension_numbers<[1], [0], [0], [1], [0, 0, 1, 1], [], []>} : vector<128x1024xbf16>, vector<1024x256xbf16>, vector<128x256xf32> -> vector<128x256xf32>
    %c0_41 = arith.constant 0 : index
    %c0_42 = arith.constant 0 : index
    %108 = vector.load %arg12[%c0_41, %c0_42] : memref<1x256xf32, #tpu.memory_space<vmem>>, vector<1x256xf32>
    %109 = vector.shape_cast %108 : vector<1x256xf32> to vector<256xf32>
    %110 = vector.shape_cast %109 : vector<256xf32> to vector<1x256xf32>
    %111 = vector.broadcast %110 : vector<1x256xf32> to vector<128x256xf32>
    %112 = arith.addf %107, %111 : vector<128x256xf32>
    %113 = arith.addf %66, %112 : vector<128x256xf32>
    %114 = vector.shape_cast %113 : vector<128x256xf32> to vector<2x64x256xf32>
    %c0_43 = arith.constant 0 : index
    %c0_44 = arith.constant 0 : index
    %c0_45 = arith.constant 0 : index
    %115 = vector.load %arg13[%c0_43, %c0_44, %c0_45] : memref<2x64x256xf32, #tpu.memory_space<vmem>>, vector<2x64x256xf32>
    tpu.vector_store %arg13[%c0_43, %c0_44, %c0_45], %114 {strides = array<i32>} : memref<2x64x256xf32, #tpu.memory_space<vmem>>, vector<2x64x256xf32>,
    return
  }
  func.func @transform_0(%arg0: i32) -> (i32, i32, i32) {
    %c0_i32 = arith.constant 0 : i32
    %c0_i32_0 = arith.constant 0 : i32
    %c0_i32_1 = arith.constant 0 : i32
    return %arg0, %c0_i32, %c0_i32_0 : i32, i32, i32
  }
  func.func @transform_1(%arg0: i32) -> (i32, i32) {
    %c0_i32 = arith.constant 0 : i32
    %c0_i32_0 = arith.constant 0 : i32
    %c0_i32_1 = arith.constant 0 : i32
    return %c0_i32, %c0_i32_0 : i32, i32
  }
  func.func @transform_2(%arg0: i32) -> (i32, i32) {
    %c0_i32 = arith.constant 0 : i32
    %c0_i32_0 = arith.constant 0 : i32
    %c0_i32_1 = arith.constant 0 : i32
    return %c0_i32, %c0_i32_0 : i32, i32
  }
  func.func @transform_3(%arg0: i32) -> (i32, i32) {
    %c0_i32 = arith.constant 0 : i32
    %c0_i32_0 = arith.constant 0 : i32
    %c0_i32_1 = arith.constant 0 : i32
    return %c0_i32, %c0_i32_0 : i32, i32
  }
  func.func @transform_4(%arg0: i32) -> (i32, i32) {
    %c0_i32 = arith.constant 0 : i32
    %c0_i32_0 = arith.constant 0 : i32
    %c0_i32_1 = arith.constant 0 : i32
    return %c0_i32, %c0_i32_0 : i32, i32
  }
  func.func @transform_5(%arg0: i32) -> (i32, i32) {
    %c0_i32 = arith.constant 0 : i32
    %c0_i32_0 = arith.constant 0 : i32
    %c0_i32_1 = arith.constant 0 : i32
    return %c0_i32, %c0_i32_0 : i32, i32
  }
  func.func @transform_6(%arg0: i32) -> (i32, i32) {
    %c0_i32 = arith.constant 0 : i32
    %c0_i32_0 = arith.constant 0 : i32
    %c0_i32_1 = arith.constant 0 : i32
    return %c0_i32, %c0_i32_0 : i32, i32
  }
  func.func @transform_7(%arg0: i32) -> (i32, i32) {
    %c0_i32 = arith.constant 0 : i32
    %c0_i32_0 = arith.constant 0 : i32
    %c0_i32_1 = arith.constant 0 : i32
    return %c0_i32, %c0_i32_0 : i32, i32
  }
  func.func @transform_8(%arg0: i32) -> (i32, i32) {
    %c0_i32 = arith.constant 0 : i32
    %c0_i32_0 = arith.constant 0 : i32
    %c0_i32_1 = arith.constant 0 : i32
    return %c0_i32, %c0_i32_0 : i32, i32
  }
  func.func @transform_9(%arg0: i32) -> (i32, i32) {
    %c0_i32 = arith.constant 0 : i32
    %c0_i32_0 = arith.constant 0 : i32
    %c0_i32_1 = arith.constant 0 : i32
    return %c0_i32, %c0_i32_0 : i32, i32
  }
  func.func @transform_10(%arg0: i32) -> (i32, i32) {
    %c0_i32 = arith.constant 0 : i32
    %c0_i32_0 = arith.constant 0 : i32
    %c0_i32_1 = arith.constant 0 : i32
    return %c0_i32, %c0_i32_0 : i32, i32
  }
  func.func @transform_11(%arg0: i32) -> (i32, i32) {
    %c0_i32 = arith.constant 0 : i32
    %c0_i32_0 = arith.constant 0 : i32
    %c0_i32_1 = arith.constant 0 : i32
    return %c0_i32, %c0_i32_0 : i32, i32
  }
  func.func @transform_12(%arg0: i32) -> (i32, i32, i32) {
    %c0_i32 = arith.constant 0 : i32
    %c0_i32_0 = arith.constant 0 : i32
    %c0_i32_1 = arith.constant 0 : i32
    return %arg0, %c0_i32, %c0_i32_0 : i32, i32, i32
  }
}

</mosaic_0001>

<llo_original>
// kernel: tpu_custom_call.1
$region0: #{tpu_custom_call.1}
  #allocation0 [shape = 'u32[]', space=smem, size = 0x4, offset = 0x4, fixed_abs, tag = 'smem constant byte address 0x4 - core index']
  #allocation1 [shape = 'u32[144,128]{1,0:T(1,128)}', space=vmem, size = 0x12000, scoped, tag = 'internal scratch']
  %s0 = inlined_call_operand.hbm [shape: f32[4,64,256], index: 0, kind: input, shape index: {}]
  %s1 = inlined_call_operand.vmem [shape: f32[1,256], index: 1, kind: input, shape index: {}]
  %s2 = inlined_call_operand.vmem [shape: f32[1,256], index: 2, kind: input, shape index: {}]
  %s3 = inlined_call_operand.hbm [shape: bf16[256,768], index: 3, kind: input, shape index: {}]
  %s4 = inlined_call_operand.hbm [shape: bf16[256,256], index: 4, kind: input, shape index: {}]
  %s5 = inlined_call_operand.vmem [shape: f32[1,256], index: 5, kind: input, shape index: {}]
  %s6 = inlined_call_operand.vmem [shape: f32[1,256], index: 6, kind: input, shape index: {}]
  %s7 = inlined_call_operand.vmem [shape: f32[1,256], index: 7, kind: input, shape index: {}]
  %s8 = inlined_call_operand.hbm [shape: bf16[256,1024], index: 8, kind: input, shape index: {}]
  %s9 = inlined_call_operand.vmem [shape: f32[1,1024], index: 9, kind: input, shape index: {}]
  %s10 = inlined_call_operand.hbm [shape: bf16[1024,256], index: 10, kind: input, shape index: {}]
  %s11 = inlined_call_operand.vmem [shape: f32[1,256], index: 11, kind: input, shape index: {}]
  %s12 = inlined_call_operand.hbm [shape: f32[4,64,256], index: 12, kind: output, shape index: {}]
  %s13 = sld [smem:[#allocation0]]
  $region101: #{tpu_custom_call.1} parent=0
    _
  %s15 = ssub.s32 1, %s13
  %s16 = scalar_select 0, %s15, %s13
  $region1: #{tpu_custom_call.1} parent=0
    #allocation2 [shape = 'u8[262144]{0}', space=vmem, size = 0x40000, scoped, tag = 'input window, operand 0']
    #allocation3 [shape = 's32[2]{0}', space=sflag, size = 0x8, scoped, tag = 'scoped memory for tpu_custom_call.1']
    #allocation4 [shape = 's32[2]{0}', space=sflag, size = 0x8, scoped, tag = 'scoped memory for tpu_custom_call.1']
    #allocation5 [shape = 'u8[393216]{0}', space=vmem, size = 0x60000, scoped, tag = 'input window, operand 3, single buffered']
    #allocation6 [shape = 's32[1]{0}', space=sflag, size = 0x4, scoped, tag = 'scoped memory for tpu_custom_call.1']
    #allocation7 [shape = 'u8[131072]{0}', space=vmem, size = 0x20000, scoped, tag = 'input window, operand 4, single buffered']
    #allocation8 [shape = 'u8[524288]{0}', space=vmem, size = 0x80000, scoped, tag = 'input window, operand 8, single buffered']
    #allocation9 [shape = 's32[1]{0}', space=sflag, size = 0x4, scoped, tag = 'scoped memory for tpu_custom_call.1']
    #allocation10 [shape = 'u8[524288]{0}', space=vmem, size = 0x80000, scoped, tag = 'input window, operand 10, single buffered']
    #allocation11 [shape = 'u8[262144]{0}', space=vmem, size = 0x40000, scoped, tag = 'output window, operand 0']
    %17 = vsyncpa [#allocation3], 0
    %s18 = scalar_lea.sflag [#allocation3], 1
    %19 = vsyncpa %s18, 0
    %20 = vsyncpa [#allocation6], 0
    %21 = vsyncpa [#allocation9], 0
    %22 = vsyncpa [#allocation4], 0
    %s23 = scalar_lea.sflag [#allocation4], 1
    %24 = vsyncpa %s23, 0
    loop: start=0, step=1, limit=4
    $region2: #{tpu_custom_call.1} parent=1 // loop_pre_header
      _
    $region3: #{tpu_custom_call.1} parent=1 // loop_header
      %s26 = sphi 0, %s30
      %p27 = scmp.ge.s32.totalorder %s26, 4
      %s36 = sphi 0, %s38
      %s39 = sphi 0, %s36
      %s40 = sphi 0, %s39
      %s56 = sphi 0, %s40
      %s60 = sphi 0, %s60
      %s62 = sphi 0, %s60
      %s63 = sphi 0, %s62
      %s77 = sphi 0, %s63
      %s81 = sphi 0, %s81
      %s83 = sphi 0, %s81
      %s84 = sphi 0, %s83
      %s98 = sphi 0, %s84
      %s102 = sphi 0, %s102
      %s104 = sphi 0, %s102
      %s105 = sphi 0, %s104
      %s119 = sphi 0, %s105
      %s123 = sphi 0, %s123
      %s125 = sphi 0, %s123
      %s126 = sphi 0, %s125
      %s140 = sphi 0, %s126
      %s144 = sphi 0, %s144
      %s146 = sphi 0, %s144
      %s147 = sphi 0, %s146
      %s161 = sphi 0, %s147
      %s165 = sphi 0, %s165
      %s167 = sphi 0, %s165
      %s168 = sphi 0, %s167
      %s182 = sphi 0, %s168
      %s186 = sphi 0, %s186
      %s188 = sphi 0, %s186
      %s189 = sphi 0, %s188
      %s203 = sphi 0, %s189
      %s207 = sphi 0, %s207
      %s209 = sphi 0, %s207
      %s210 = sphi 0, %s209
      %s224 = sphi 0, %s210
      %s228 = sphi 0, %s228
      %s230 = sphi 0, %s228
      %s231 = sphi 0, %s230
      %s245 = sphi 0, %s231
      %s249 = sphi 0, %s249
      %s251 = sphi 0, %s249
      %s252 = sphi 0, %s251
      %s266 = sphi 0, %s252
      %s270 = sphi 0, %s270
      %s272 = sphi 0, %s270
      %s273 = sphi 0, %s272
      %s287 = sphi 0, %s273
      %s293 = sphi 0, %s295
      %s296 = sphi 0, %s293
      %s297 = sphi 0, %s296
      %s313 = sphi 0, %s297
    $region4: #{tpu_custom_call.1} parent=1 // loop_header_branch
      %29 = sbr.rel (%p27) target = $region8
    $region5: #{tpu_custom_call.1} parent=1 // loop_body
      %s31 = ssub.s32 %s26, 1
      %s32 = ssub.s32 %s26, 2
      %s33 = sadd.s32 %s26, 1
      %s34 = ssub.s32 %s26, %s33
      %p35 = scmp.eq.s32.totalorder %s34, 0
      %s37 = sadd.s32 %s36, 1
      %s38 = scalar_select %p35, %s36, %s37
      %p41 = pneg %p35
      %p42 = scmp.eq.s32.totalorder %s26, 1
      %p43 = por %p41, %p42
      %p44 = scmp.ne.s32.totalorder %s36, %s39
      %p45 = scmp.eq.s32.totalorder %s26, 0
      %p46 = por %p44, %p45
      %p47 = scmp.ne.s32.totalorder %s36, %s39
      %p48 = scmp.eq.s32.totalorder %s31, 1
      %p49 = por %p47, %p48
      %p50 = scmp.ne.s32.totalorder %s39, %s40
      %p51 = scmp.eq.s32.totalorder %s31, 0
      %p52 = por %p50, %p51
      %p53 = scmp.ne.s32.totalorder %s39, %s40
      %p54 = scmp.eq.s32.totalorder %s32, 1
      %p55 = por %p53, %p54
      %p57 = scmp.ne.s32.totalorder %s40, %s56
      %p58 = scmp.eq.s32.totalorder %s32, 0
      %p59 = por %p57, %p58
      %s61 = sadd.s32 %s60, 1
      %p64 = scmp.eq.s32.totalorder %s26, 1
      %p65 = scmp.ne.s32.totalorder %s60, %s62
      %p66 = scmp.eq.s32.totalorder %s26, 0
      %p67 = por %p65, %p66
      %p68 = scmp.ne.s32.totalorder %s60, %s62
      %p69 = scmp.eq.s32.totalorder %s31, 1
      %p70 = por %p68, %p69
      %p71 = scmp.ne.s32.totalorder %s62, %s63
      %p72 = scmp.eq.s32.totalorder %s31, 0
      %p73 = por %p71, %p72
      %p74 = scmp.ne.s32.totalorder %s62, %s63
      %p75 = scmp.eq.s32.totalorder %s32, 1
      %p76 = por %p74, %p75
      %p78 = scmp.ne.s32.totalorder %s63, %s77
      %p79 = scmp.eq.s32.totalorder %s32, 0
      %p80 = por %p78, %p79
      %s82 = sadd.s32 %s81, 1
      %p85 = scmp.eq.s32.totalorder %s26, 1
      %p86 = scmp.ne.s32.totalorder %s81, %s83
      %p87 = scmp.eq.s32.totalorder %s26, 0
      %p88 = por %p86, %p87
      %p89 = scmp.ne.s32.totalorder %s81, %s83
      %p90 = scmp.eq.s32.totalorder %s31, 1
      %p91 = por %p89, %p90
      %p92 = scmp.ne.s32.totalorder %s83, %s84
      %p93 = scmp.eq.s32.totalorder %s31, 0
      %p94 = por %p92, %p93
      %p95 = scmp.ne.s32.totalorder %s83, %s84
      %p96 = scmp.eq.s32.totalorder %s32, 1
      %p97 = por %p95, %p96
      %p99 = scmp.ne.s32.totalorder %s84, %s98
      %p100 = scmp.eq.s32.totalorder %s32, 0
      %p101 = por %p99, %p100
      %s103 = sadd.s32 %s102, 1
      %p106 = scmp.eq.s32.totalorder %s26, 1
      %p107 = scmp.ne.s32.totalorder %s102, %s104
      %p108 = scmp.eq.s32.totalorder %s26, 0
      %p109 = por %p107, %p108
      %p110 = scmp.ne.s32.totalorder %s102, %s104
      %p111 = scmp.eq.s32.totalorder %s31, 1
      %p112 = por %p110, %p111
      %p113 = scmp.ne.s32.totalorder %s104, %s105
      %p114 = scmp.eq.s32.totalorder %s31, 0
      %p115 = por %p113, %p114
      %p116 = scmp.ne.s32.totalorder %s104, %s105
      %p117 = scmp.eq.s32.totalorder %s32, 1
      %p118 = por %p116, %p117
      %p120 = scmp.ne.s32.totalorder %s105, %s119
      %p121 = scmp.eq.s32.totalorder %s32, 0
      %p122 = por %p120, %p121
      %s124 = sadd.s32 %s123, 1
      %p127 = scmp.eq.s32.totalorder %s26, 1
      %p128 = scmp.ne.s32.totalorder %s123, %s125
      %p129 = scmp.eq.s32.totalorder %s26, 0
      %p130 = por %p128, %p129
      %p131 = scmp.ne.s32.totalorder %s123, %s125
      %p132 = scmp.eq.s32.totalorder %s31, 1
      %p133 = por %p131, %p132
      %p134 = scmp.ne.s32.totalorder %s125, %s126
      %p135 = scmp.eq.s32.totalorder %s31, 0
      %p136 = por %p134, %p135
      %p137 = scmp.ne.s32.totalorder %s125, %s126
      %p138 = scmp.eq.s32.totalorder %s32, 1
      %p139 = por %p137, %p138
      %p141 = scmp.ne.s32.totalorder %s126, %s140
      %p142 = scmp.eq.s32.totalorder %s32, 0
      %p143 = por %p141, %p142
      %s145 = sadd.s32 %s144, 1
      %p148 = scmp.eq.s32.totalorder %s26, 1
      %p149 = scmp.ne.s32.totalorder %s144, %s146
      %p150 = scmp.eq.s32.totalorder %s26, 0
      %p151 = por %p149, %p150
      %p152 = scmp.ne.s32.totalorder %s144, %s146
      %p153 = scmp.eq.s32.totalorder %s31, 1
      %p154 = por %p152, %p153
      %p155 = scmp.ne.s32.totalorder %s146, %s147
      %p156 = scmp.eq.s32.totalorder %s31, 0
      %p157 = por %p155, %p156
      %p158 = scmp.ne.s32.totalorder %s146, %s147
      %p159 = scmp.eq.s32.totalorder %s32, 1
      %p160 = por %p158, %p159
      %p162 = scmp.ne.s32.totalorder %s147, %s161
      %p163 = scmp.eq.s32.totalorder %s32, 0
      %p164 = por %p162, %p163
      %s166 = sadd.s32 %s165, 1
      %p169 = scmp.eq.s32.totalorder %s26, 1
      %p170 = scmp.ne.s32.totalorder %s165, %s167
      %p171 = scmp.eq.s32.totalorder %s26, 0
      %p172 = por %p170, %p171
      %p173 = scmp.ne.s32.totalorder %s165, %s167
      %p174 = scmp.eq.s32.totalorder %s31, 1
      %p175 = por %p173, %p174
      %p176 = scmp.ne.s32.totalorder %s167, %s168
      %p177 = scmp.eq.s32.totalorder %s31, 0
      %p178 = por %p176, %p177
      %p179 = scmp.ne.s32.totalorder %s167, %s168
      %p180 = scmp.eq.s32.totalorder %s32, 1
      %p181 = por %p179, %p180
      %p183 = scmp.ne.s32.totalorder %s168, %s182
      %p184 = scmp.eq.s32.totalorder %s32, 0
      %p185 = por %p183, %p184
      %s187 = sadd.s32 %s186, 1
      %p190 = scmp.eq.s32.totalorder %s26, 1
      %p191 = scmp.ne.s32.totalorder %s186, %s188
      %p192 = scmp.eq.s32.totalorder %s26, 0
      %p193 = por %p191, %p192
      %p194 = scmp.ne.s32.totalorder %s186, %s188
      %p195 = scmp.eq.s32.totalorder %s31, 1
      %p196 = por %p194, %p195
      %p197 = scmp.ne.s32.totalorder %s188, %s189
      %p198 = scmp.eq.s32.totalorder %s31, 0
      %p199 = por %p197, %p198
      %p200 = scmp.ne.s32.totalorder %s188, %s189
      %p201 = scmp.eq.s32.totalorder %s32, 1
      %p202 = por %p200, %p201
      %p204 = scmp.ne.s32.totalorder %s189, %s203
      %p205 = scmp.eq.s32.totalorder %s32, 0
      %p206 = por %p204, %p205
      %s208 = sadd.s32 %s207, 1
      %p211 = scmp.eq.s32.totalorder %s26, 1
      %p212 = scmp.ne.s32.totalorder %s207, %s209
      %p213 = scmp.eq.s32.totalorder %s26, 0
      %p214 = por %p212, %p213
      %p215 = scmp.ne.s32.totalorder %s207, %s209
      %p216 = scmp.eq.s32.totalorder %s31, 1
      %p217 = por %p215, %p216
      %p218 = scmp.ne.s32.totalorder %s209, %s210
      %p219 = scmp.eq.s32.totalorder %s31, 0
      %p220 = por %p218, %p219
      %p221 = scmp.ne.s32.totalorder %s209, %s210
      %p222 = scmp.eq.s32.totalorder %s32, 1
      %p223 = por %p221, %p222
      %p225 = scmp.ne.s32.totalorder %s210, %s224
      %p226 = scmp.eq.s32.totalorder %s32, 0
      %p227 = por %p225, %p226
      %s229 = sadd.s32 %s228, 1
      %p232 = scmp.eq.s32.totalorder %s26, 1
      %p233 = scmp.ne.s32.totalorder %s228, %s230
      %p234 = scmp.eq.s32.totalorder %s26, 0
      %p235 = por %p233, %p234
      %p236 = scmp.ne.s32.totalorder %s228, %s230
      %p237 = scmp.eq.s32.totalorder %s31, 1
      %p238 = por %p236, %p237
      %p239 = scmp.ne.s32.totalorder %s230, %s231
      %p240 = scmp.eq.s32.totalorder %s31, 0
      %p241 = por %p239, %p240
      %p242 = scmp.ne.s32.totalorder %s230, %s231
      %p243 = scmp.eq.s32.totalorder %s32, 1
      %p244 = por %p242, %p243
      %p246 = scmp.ne.s32.totalorder %s231, %s245
      %p247 = scmp.eq.s32.totalorder %s32, 0
      %p248 = por %p246, %p247
      %s250 = sadd.s32 %s249, 1
      %p253 = scmp.eq.s32.totalorder %s26, 1
      %p254 = scmp.ne.s32.totalorder %s249, %s251
      %p255 = scmp.eq.s32.totalorder %s26, 0
      %p256 = por %p254, %p255
      %p257 = scmp.ne.s32.totalorder %s249, %s251
      %p258 = scmp.eq.s32.totalorder %s31, 1
      %p259 = por %p257, %p258
      %p260 = scmp.ne.s32.totalorder %s251, %s252
      %p261 = scmp.eq.s32.totalorder %s31, 0
      %p262 = por %p260, %p261
      %p263 = scmp.ne.s32.totalorder %s251, %s252
      %p264 = scmp.eq.s32.totalorder %s32, 1
      %p265 = por %p263, %p264
      %p267 = scmp.ne.s32.totalorder %s252, %s266
      %p268 = scmp.eq.s32.totalorder %s32, 0
      %p269 = por %p267, %p268
      %s271 = sadd.s32 %s270, 1
      %p274 = scmp.eq.s32.totalorder %s26, 1
      %p275 = scmp.ne.s32.totalorder %s270, %s272
      %p276 = scmp.eq.s32.totalorder %s26, 0
      %p277 = por %p275, %p276
      %p278 = scmp.ne.s32.totalorder %s270, %s272
      %p279 = scmp.eq.s32.totalorder %s31, 1
      %p280 = por %p278, %p279
      %p281 = scmp.ne.s32.totalorder %s272, %s273
      %p282 = scmp.eq.s32.totalorder %s31, 0
      %p283 = por %p281, %p282
      %p284 = scmp.ne.s32.totalorder %s272, %s273
      %p285 = scmp.eq.s32.totalorder %s32, 1
      %p286 = por %p284, %p285
      %p288 = scmp.ne.s32.totalorder %s273, %s287
      %p289 = scmp.eq.s32.totalorder %s32, 0
      %p290 = por %p288, %p289
      %s291 = ssub.s32 %s26, %s33
      %p292 = scmp.eq.s32.totalorder %s291, 0
      %s294 = sadd.s32 %s293, 1
      %s295 = scalar_select %p292, %s293, %s294
      %p298 = pneg %p292
      %p299 = scmp.eq.s32.totalorder %s26, 1
      %p300 = por %p298, %p299
      %p301 = scmp.ne.s32.totalorder %s293, %s296
      %p302 = scmp.eq.s32.totalorder %s26, 0
      %p303 = por %p301, %p302
      %p304 = scmp.ne.s32.totalorder %s293, %s296
      %p305 = scmp.eq.s32.totalorder %s31, 1
      %p306 = por %p304, %p305
      %p307 = scmp.ne.s32.totalorder %s296, %s297
      %p308 = scmp.eq.s32.totalorder %s31, 0
      %p309 = por %p307, %p308
      %p310 = scmp.ne.s32.totalorder %s296, %s297
      %p311 = scmp.eq.s32.totalorder %s32, 1
      %p312 = por %p310, %p311
      %p314 = scmp.ne.s32.totalorder %s297, %s313
      %p315 = scmp.eq.s32.totalorder %s32, 0
      %p316 = por %p314, %p315
      %p317 = scmp.le.s32.totalorder 1, %s26
      %p318 = scmp.lt.s32.totalorder %s26, 3
      %p319 = pnand %p317, %p318
      %p320 = pneg %p319
      // Predicated region
      $region9: #{tpu_custom_call.1} parent=5 // pred_check
        _
      $region10: #{tpu_custom_call.1} parent=5 // pred_check_branch
        %322 = sbr.rel (%p319) target = $region12
      $region11: #{tpu_custom_call.1} parent=5 // pred_region
        %s323 = ssub.s32 %s26, 1
        // Predicated region
        $region13: #{tpu_custom_call.1} parent=11 // pred_check
          %p324 = pneg %p73
        $region14: #{tpu_custom_call.1} parent=11 // pred_check_branch
          %326 = sbr.rel (%p324) target = $region16
        $region15: #{tpu_custom_call.1} parent=11 // pred_region
          _
        $region16: #{tpu_custom_call.1} parent=11 // pred_fallthru
          _
        // Predicated region
        $region17: #{tpu_custom_call.1} parent=11 // pred_check
          %p327 = pneg %p94
        $region18: #{tpu_custom_call.1} parent=11 // pred_check_branch
          %329 = sbr.rel (%p327) target = $region20
        $region19: #{tpu_custom_call.1} parent=11 // pred_region
          _
        $region20: #{tpu_custom_call.1} parent=11 // pred_fallthru
          _
        // Predicated region
        $region21: #{tpu_custom_call.1} parent=11 // pred_check
          %p330 = pneg %p115
        $region22: #{tpu_custom_call.1} parent=11 // pred_check_branch
          %332 = sbr.rel (%p330) target = $region24
        $region23: #{tpu_custom_call.1} parent=11 // pred_region
          %s334 = ssub.s32 12288, 12288
          %335 = vsyncadd [#allocation6], %s334
          %s336 = sshll.u32 [#allocation5], 4
          %s337 = int_to_ptr.vmem [resolvable:$true] %s336
          %342 = dma.hbm_to_vmem [thread:$0]  %s3, 12288, %s337, [#allocation6], 384, 384, 24
        $region24: #{tpu_custom_call.1} parent=11 // pred_fallthru
          _
        // Predicated region
        $region25: #{tpu_custom_call.1} parent=11 // pred_check
          %p343 = pneg %p136
        $region26: #{tpu_custom_call.1} parent=11 // pred_check_branch
          %345 = sbr.rel (%p343) target = $region28
        $region27: #{tpu_custom_call.1} parent=11 // pred_region
          %s347 = ssub.s32 4096, 4096
          %348 = vsyncadd [#allocation6], %s347
          %s349 = sshll.u32 [#allocation7], 4
          %s350 = int_to_ptr.vmem [resolvable:$true] %s349
          %355 = dma.hbm_to_vmem [thread:$0]  %s4, 4096, %s350, [#allocation6], 128, 128, 8
        $region28: #{tpu_custom_call.1} parent=11 // pred_fallthru
          _
        // Predicated region
        $region29: #{tpu_custom_call.1} parent=11 // pred_check
          %p356 = pneg %p157
        $region30: #{tpu_custom_call.1} parent=11 // pred_check_branch
          %358 = sbr.rel (%p356) target = $region32
        $region31: #{tpu_custom_call.1} parent=11 // pred_region
          _
        $region32: #{tpu_custom_call.1} parent=11 // pred_fallthru
          _
        // Predicated region
        $region33: #{tpu_custom_call.1} parent=11 // pred_check
          %p359 = pneg %p178
        $region34: #{tpu_custom_call.1} parent=11 // pred_check_branch
          %361 = sbr.rel (%p359) target = $region36
        $region35: #{tpu_custom_call.1} parent=11 // pred_region
          _
        $region36: #{tpu_custom_call.1} parent=11 // pred_fallthru
          _
        // Predicated region
        $region37: #{tpu_custom_call.1} parent=11 // pred_check
          %p362 = pneg %p199
        $region38: #{tpu_custom_call.1} parent=11 // pred_check_branch
          %364 = sbr.rel (%p362) target = $region40
        $region39: #{tpu_custom_call.1} parent=11 // pred_region
          _
        $region40: #{tpu_custom_call.1} parent=11 // pred_fallthru
          _
        // Predicated region
        $region41: #{tpu_custom_call.1} parent=11 // pred_check
          %p365 = pneg %p220
        $region42: #{tpu_custom_call.1} parent=11 // pred_check_branch
          %367 = sbr.rel (%p365) target = $region44
        $region43: #{tpu_custom_call.1} parent=11 // pred_region
          %s369 = ssub.s32 16384, 16384
          %370 = vsyncadd [#allocation9], %s369
          %s371 = sshll.u32 [#allocation8], 4
          %s372 = int_to_ptr.vmem [resolvable:$true] %s371
          %377 = dma.hbm_to_vmem [thread:$0]  %s8, 16384, %s372, [#allocation9], 512, 512, 32
        $region44: #{tpu_custom_call.1} parent=11 // pred_fallthru
          _
        // Predicated region
        $region45: #{tpu_custom_call.1} parent=11 // pred_check
          %p378 = pneg %p241
        $region46: #{tpu_custom_call.1} parent=11 // pred_check_branch
          %380 = sbr.rel (%p378) target = $region48
        $region47: #{tpu_custom_call.1} parent=11 // pred_region
          _
        $region48: #{tpu_custom_call.1} parent=11 // pred_fallthru
          _
        // Predicated region
        $region49: #{tpu_custom_call.1} parent=11 // pred_check
          %p381 = pneg %p262
        $region50: #{tpu_custom_call.1} parent=11 // pred_check_branch
          %383 = sbr.rel (%p381) target = $region52
        $region51: #{tpu_custom_call.1} parent=11 // pred_region
          %s385 = ssub.s32 16384, 16384
          %386 = vsyncadd [#allocation9], %s385
          %s387 = sshll.u32 [#allocation10], 4
          %s388 = int_to_ptr.vmem [resolvable:$true] %s387
          %393 = dma.hbm_to_vmem [thread:$0]  %s10, 16384, %s388, [#allocation9], 128, 128, 8
        $region52: #{tpu_custom_call.1} parent=11 // pred_fallthru
          _
        // Predicated region
        $region53: #{tpu_custom_call.1} parent=11 // pred_check
          %p394 = pneg %p283
        $region54: #{tpu_custom_call.1} parent=11 // pred_check_branch
          %396 = sbr.rel (%p394) target = $region56
        $region55: #{tpu_custom_call.1} parent=11 // pred_region
          _
        $region56: #{tpu_custom_call.1} parent=11 // pred_fallthru
          _
      $region12: #{tpu_custom_call.1} parent=5 // pred_fallthru
        _
      %p397 = scmp.lt.s32.totalorder %s26, 2
      // Predicated region
      $region57: #{tpu_custom_call.1} parent=5 // pred_check
        %p398 = pneg %p397
      $region58: #{tpu_custom_call.1} parent=5 // pred_check_branch
        %400 = sbr.rel (%p398) target = $region60
      $region59: #{tpu_custom_call.1} parent=5 // pred_region
        // Predicated region
        $region61: #{tpu_custom_call.1} parent=59 // pred_check
          %p401 = pneg %p46
        $region62: #{tpu_custom_call.1} parent=59 // pred_check_branch
          %403 = sbr.rel (%p401) target = $region64
        $region63: #{tpu_custom_call.1} parent=59 // pred_region
          %s404 = sand.u32 %s36, 1
          %s405 = scalar_lea.sflag [#allocation3], %s404
          %s406 = sand.u32 %s36, 1
          %s407 = smul.addr %s406, 256
          %s408 = scalar_lea.vmem [#allocation2], %s407
          %s409 = smul.u32 2, %s26
          %s411 = ssub.s32 4096, 4096
          %412 = vsyncadd %s405, %s411
          %s413 = smul.addr %s409, 16
          %s414 = smul.addr %s413, 128
          %s415 = scalar_lea.hbm %s0, %s414
          %s416 = sshll.u32 %s408, 4
          %s417 = int_to_ptr.vmem [resolvable:$true] %s416
          %422 = dma.hbm_to_vmem [thread:$0]  %s415, 4096, %s417, %s405, 256, 256, 16
        $region64: #{tpu_custom_call.1} parent=59 // pred_fallthru
          _
      $region60: #{tpu_custom_call.1} parent=5 // pred_fallthru
        _
      %p423 = scmp.le.s32.totalorder 1, %s26
      %p424 = scmp.lt.s32.totalorder %s26, 3
      %p425 = pnand %p423, %p424
      %p426 = pneg %p425
      // Predicated region
      $region65: #{tpu_custom_call.1} parent=5 // pred_check
        _
      $region66: #{tpu_custom_call.1} parent=5 // pred_check_branch
        %428 = sbr.rel (%p425) target = $region68
      $region67: #{tpu_custom_call.1} parent=5 // pred_region
        %s429 = ssub.s32 %s26, 1
        %s430 = sand.u32 %s39, 1
        %s431 = scalar_lea.sflag [#allocation3], %s430
        %s432 = sand.u32 %s39, 1
        %s433 = smul.addr %s432, 256
        %s434 = scalar_lea.vmem [#allocation2], %s433
        // Predicated region
        $region69: #{tpu_custom_call.1} parent=67 // pred_check
          %p435 = pneg %p52
        $region70: #{tpu_custom_call.1} parent=67 // pred_check_branch
          %437 = sbr.rel (%p435) target = $region72
        $region71: #{tpu_custom_call.1} parent=67 // pred_region
          %438 = dma.done %s431, 4096
        $region72: #{tpu_custom_call.1} parent=67 // pred_fallthru
          _
        // Predicated region
        $region73: #{tpu_custom_call.1} parent=67 // pred_check
          %p439 = pneg %p115
        $region74: #{tpu_custom_call.1} parent=67 // pred_check_branch
          %441 = sbr.rel (%p439) target = $region76
        $region75: #{tpu_custom_call.1} parent=67 // pred_region
          %442 = dma.done [#allocation6], 12288
        $region76: #{tpu_custom_call.1} parent=67 // pred_fallthru
          _
        // Predicated region
        $region77: #{tpu_custom_call.1} parent=67 // pred_check
          %p443 = pneg %p136
        $region78: #{tpu_custom_call.1} parent=67 // pred_check_branch
          %445 = sbr.rel (%p443) target = $region80
        $region79: #{tpu_custom_call.1} parent=67 // pred_region
          %446 = dma.done [#allocation6], 4096
        $region80: #{tpu_custom_call.1} parent=67 // pred_fallthru
          _
        // Predicated region
        $region81: #{tpu_custom_call.1} parent=67 // pred_check
          %p447 = pneg %p220
        $region82: #{tpu_custom_call.1} parent=67 // pred_check_branch
          %449 = sbr.rel (%p447) target = $region84
        $region83: #{tpu_custom_call.1} parent=67 // pred_region
          %450 = dma.done [#allocation9], 16384
        $region84: #{tpu_custom_call.1} parent=67 // pred_fallthru
          _
        // Predicated region
        $region85: #{tpu_custom_call.1} parent=67 // pred_check
          %p451 = pneg %p262
        $region86: #{tpu_custom_call.1} parent=67 // pred_check_branch
          %453 = sbr.rel (%p451) target = $region88
        $region87: #{tpu_custom_call.1} parent=67 // pred_region
          %454 = dma.done [#allocation9], 16384
        $region88: #{tpu_custom_call.1} parent=67 // pred_fallthru
          _
        %s455 = sand.u32 %s39, 1
        %s456 = scalar_lea.sflag [#allocation3], %s455
        %s457 = sand.u32 %s39, 1
        %s458 = smul.addr %s457, 256
        %s459 = scalar_lea.vmem [#allocation2], %s458
        %p460 = pneg %p52
        %p461 = pneg %p49
        %p462 = pneg %p73
        %p463 = pneg %p70
        %p464 = pneg %p94
        %p465 = pneg %p91
        %p466 = pneg %p115
        %p467 = pneg %p112
        %p468 = pneg %p136
        %p469 = pneg %p133
        %p470 = pneg %p157
        %p471 = pneg %p154
        %p472 = pneg %p178
        %p473 = pneg %p175
        %p474 = pneg %p199
        %p475 = pneg %p196
        %p476 = pneg %p220
        %p477 = pneg %p217
        %p478 = pneg %p241
        %p479 = pneg %p238
        %p480 = pneg %p262
        %p481 = pneg %p259
        %p482 = pneg %p283
        %p483 = pneg %p280
        %p484 = pneg %p309
        %p485 = pneg %p306
        %s486 = sand.u32 %s296, 1
        %s487 = scalar_lea.sflag [#allocation4], %s486
        %s488 = sand.u32 %s296, 1
        %s489 = smul.addr %s488, 256
        %s490 = scalar_lea.vmem [#allocation11], %s489
        %s491 = smul.u32 2, %s31
        %s492 = smul.u32 2, %s31
        %v494 = vld [vmem:[%s434] sm:$0xff]
        %v495 = vld [vmem:[%s434 + $0x8] sm:$0xff]
        %v496 = vld [vmem:[%s434 + $0x10] sm:$0xff]
        %v497 = vld [vmem:[%s434 + $0x18] sm:$0xff]
        %v498 = vld [vmem:[%s434 + $0x20] sm:$0xff]
        %v499 = vld [vmem:[%s434 + $0x28] sm:$0xff]
        %v500 = vld [vmem:[%s434 + $0x30] sm:$0xff]
        %v501 = vld [vmem:[%s434 + $0x38] sm:$0xff]
        %v502 = vld [vmem:[%s434 + $0x40] sm:$0xff]
        %v503 = vld [vmem:[%s434 + $0x48] sm:$0xff]
        %v504 = vld [vmem:[%s434 + $0x50] sm:$0xff]
        %v505 = vld [vmem:[%s434 + $0x58] sm:$0xff]
        %v506 = vld [vmem:[%s434 + $0x60] sm:$0xff]
        %v507 = vld [vmem:[%s434 + $0x68] sm:$0xff]
        %v508 = vld [vmem:[%s434 + $0x70] sm:$0xff]
        %v509 = vld [vmem:[%s434 + $0x78] sm:$0xff]
        %v510 = vld [vmem:[%s434 + $0x80] sm:$0xff]
        %v511 = vld [vmem:[%s434 + $0x88] sm:$0xff]
        %v512 = vld [vmem:[%s434 + $0x90] sm:$0xff]
        %v513 = vld [vmem:[%s434 + $0x98] sm:$0xff]
        %v514 = vld [vmem:[%s434 + $0xa0] sm:$0xff]
        %v515 = vld [vmem:[%s434 + $0xa8] sm:$0xff]
        %v516 = vld [vmem:[%s434 + $0xb0] sm:$0xff]
        %v517 = vld [vmem:[%s434 + $0xb8] sm:$0xff]
        %v518 = vld [vmem:[%s434 + $0xc0] sm:$0xff]
        %v519 = vld [vmem:[%s434 + $0xc8] sm:$0xff]
        %v520 = vld [vmem:[%s434 + $0xd0] sm:$0xff]
        %v521 = vld [vmem:[%s434 + $0xd8] sm:$0xff]
        %v522 = vld [vmem:[%s434 + $0xe0] sm:$0xff]
        %v523 = vld [vmem:[%s434 + $0xe8] sm:$0xff]
        %v524 = vld [vmem:[%s434 + $0xf0] sm:$0xff]
        %v525 = vld [vmem:[%s434 + $0xf8] sm:$0xff]
        %v526 = vld [vmem:[%s1] sm:$0x3]
        %v527 = vld [vmem:[%s2] sm:$0x3]
        %v528 = vadd.f32 %v494, %v495
        %529 = vadd.xlane.f32.xlu0 %v528
        %v530 = vpop.xlane.xlu0 %529
        %v531 = vadd.f32 %v496, %v497
        %532 = vadd.xlane.f32.xlu0 %v531
        %v533 = vpop.xlane.xlu0 %532
        %v534 = vadd.f32 %v498, %v499
        %535 = vadd.xlane.f32.xlu0 %v534
        %v536 = vpop.xlane.xlu0 %535
        %v537 = vadd.f32 %v500, %v501
        %538 = vadd.xlane.f32.xlu0 %v537
        %v539 = vpop.xlane.xlu0 %538
        %v540 = vadd.f32 %v502, %v503
        %541 = vadd.xlane.f32.xlu0 %v540
        %v542 = vpop.xlane.xlu0 %541
        %v543 = vadd.f32 %v504, %v505
        %544 = vadd.xlane.f32.xlu0 %v543
        %v545 = vpop.xlane.xlu0 %544
        %v546 = vadd.f32 %v506, %v507
        %547 = vadd.xlane.f32.xlu0 %v546
        %v548 = vpop.xlane.xlu0 %547
        %v549 = vadd.f32 %v508, %v509
        %550 = vadd.xlane.f32.xlu0 %v549
        %v551 = vpop.xlane.xlu0 %550
        %v552 = vadd.f32 %v510, %v511
        %553 = vadd.xlane.f32.xlu0 %v552
        %v554 = vpop.xlane.xlu0 %553
        %v555 = vadd.f32 %v512, %v513
        %556 = vadd.xlane.f32.xlu0 %v555
        %v557 = vpop.xlane.xlu0 %556
        %v558 = vadd.f32 %v514, %v515
        %559 = vadd.xlane.f32.xlu0 %v558
        %v560 = vpop.xlane.xlu0 %559
        %v561 = vadd.f32 %v516, %v517
        %562 = vadd.xlane.f32.xlu0 %v561
        %v563 = vpop.xlane.xlu0 %562
        %v564 = vadd.f32 %v518, %v519
        %565 = vadd.xlane.f32.xlu0 %v564
        %v566 = vpop.xlane.xlu0 %565
        %v567 = vadd.f32 %v520, %v521
        %568 = vadd.xlane.f32.xlu0 %v567
        %v569 = vpop.xlane.xlu0 %568
        %v570 = vadd.f32 %v522, %v523
        %571 = vadd.xlane.f32.xlu0 %v570
        %v572 = vpop.xlane.xlu0 %571
        %v573 = vadd.f32 %v524, %v525
        %574 = vadd.xlane.f32.xlu0 %v573
        %v575 = vpop.xlane.xlu0 %574
        %v576 = vrcp.pop 256.0
        %v577 = vmul.f32 %v530, %v576
        %v578 = vmul.f32 %v533, %v576
        %v579 = vmul.f32 %v536, %v576
        %v580 = vmul.f32 %v539, %v576
        %v581 = vmul.f32 %v542, %v576
        %v582 = vmul.f32 %v545, %v576
        %v583 = vmul.f32 %v548, %v576
        %v584 = vmul.f32 %v551, %v576
        %v585 = vmul.f32 %v554, %v576
        %v586 = vmul.f32 %v557, %v576
        %v587 = vmul.f32 %v560, %v576
        %v588 = vmul.f32 %v563, %v576
        %v589 = vmul.f32 %v566, %v576
        %v590 = vmul.f32 %v569, %v576
        %v591 = vmul.f32 %v572, %v576
        %v592 = vmul.f32 %v575, %v576
        %v593 = vsub.f32 %v494, %v577
        %v594 = vsub.f32 %v495, %v577
        %v595 = vsub.f32 %v496, %v578
        %v596 = vsub.f32 %v497, %v578
        %v597 = vsub.f32 %v498, %v579
        %v598 = vsub.f32 %v499, %v579
        %v599 = vsub.f32 %v500, %v580
        %v600 = vsub.f32 %v501, %v580
        %v601 = vsub.f32 %v502, %v581
        %v602 = vsub.f32 %v503, %v581
        %v603 = vsub.f32 %v504, %v582
        %v604 = vsub.f32 %v505, %v582
        %v605 = vsub.f32 %v506, %v583
        %v606 = vsub.f32 %v507, %v583
        %v607 = vsub.f32 %v508, %v584
        %v608 = vsub.f32 %v509, %v584
        %v609 = vsub.f32 %v510, %v585
        %v610 = vsub.f32 %v511, %v585
        %v611 = vsub.f32 %v512, %v586
        %v612 = vsub.f32 %v513, %v586
        %v613 = vsub.f32 %v514, %v587
        %v614 = vsub.f32 %v515, %v587
        %v615 = vsub.f32 %v516, %v588
        %v616 = vsub.f32 %v517, %v588
        %v617 = vsub.f32 %v518, %v589
        %v618 = vsub.f32 %v519, %v589
        %v619 = vsub.f32 %v520, %v590
        %v620 = vsub.f32 %v521, %v590
        %v621 = vsub.f32 %v522, %v591
        %v622 = vsub.f32 %v523, %v591
        %v623 = vsub.f32 %v524, %v592
        %v624 = vsub.f32 %v525, %v592
        %v625 = vmul.f32 %v593, %v593
        %v626 = vmul.f32 %v594, %v594
        %v627 = vmul.f32 %v595, %v595
        %v628 = vmul.f32 %v596, %v596
        %v629 = vmul.f32 %v597, %v597
        %v630 = vmul.f32 %v598, %v598
        %v631 = vmul.f32 %v599, %v599
        %v632 = vmul.f32 %v600, %v600
        %v633 = vmul.f32 %v601, %v601
        %v634 = vmul.f32 %v602, %v602
        %v635 = vmul.f32 %v603, %v603
        %v636 = vmul.f32 %v604, %v604
        %v637 = vmul.f32 %v605, %v605
        %v638 = vmul.f32 %v606, %v606
        %v639 = vmul.f32 %v607, %v607
        %v640 = vmul.f32 %v608, %v608
        %v641 = vmul.f32 %v609, %v609
        %v642 = vmul.f32 %v610, %v610
        %v643 = vmul.f32 %v611, %v611
        %v644 = vmul.f32 %v612, %v612
        %v645 = vmul.f32 %v613, %v613
        %v646 = vmul.f32 %v614, %v614
        %v647 = vmul.f32 %v615, %v615
        %v648 = vmul.f32 %v616, %v616
        %v649 = vmul.f32 %v617, %v617
        %v650 = vmul.f32 %v618, %v618
        %v651 = vmul.f32 %v619, %v619
        %v652 = vmul.f32 %v620, %v620
        %v653 = vmul.f32 %v621, %v621
        %v654 = vmul.f32 %v622, %v622
        %v655 = vmul.f32 %v623, %v623
        %v656 = vmul.f32 %v624, %v624
        %v657 = vadd.f32 %v625, %v626
        %658 = vadd.xlane.f32.xlu0 %v657
        %v659 = vpop.xlane.xlu0 %658
        %v660 = vadd.f32 %v627, %v628
        %661 = vadd.xlane.f32.xlu0 %v660
        %v662 = vpop.xlane.xlu0 %661
        %v663 = vadd.f32 %v629, %v630
        %664 = vadd.xlane.f32.xlu0 %v663
        %v665 = vpop.xlane.xlu0 %664
        %v666 = vadd.f32 %v631, %v632
        %667 = vadd.xlane.f32.xlu0 %v666
        %v668 = vpop.xlane.xlu0 %667
        %v669 = vadd.f32 %v633, %v634
        %670 = vadd.xlane.f32.xlu0 %v669
        %v671 = vpop.xlane.xlu0 %670
        %v672 = vadd.f32 %v635, %v636
        %673 = vadd.xlane.f32.xlu0 %v672
        %v674 = vpop.xlane.xlu0 %673
        %v675 = vadd.f32 %v637, %v638
        %676 = vadd.xlane.f32.xlu0 %v675
        %v677 = vpop.xlane.xlu0 %676
        %v678 = vadd.f32 %v639, %v640
        %679 = vadd.xlane.f32.xlu0 %v678
        %v680 = vpop.xlane.xlu0 %679
        %v681 = vadd.f32 %v641, %v642
        %682 = vadd.xlane.f32.xlu0 %v681
        %v683 = vpop.xlane.xlu0 %682
        %v684 = vadd.f32 %v643, %v644
        %685 = vadd.xlane.f32.xlu0 %v684
        %v686 = vpop.xlane.xlu0 %685
        %v687 = vadd.f32 %v645, %v646
        %688 = vadd.xlane.f32.xlu0 %v687
        %v689 = vpop.xlane.xlu0 %688
        %v690 = vadd.f32 %v647, %v648
        %691 = vadd.xlane.f32.xlu0 %v690
        %v692 = vpop.xlane.xlu0 %691
        %v693 = vadd.f32 %v649, %v650
        %694 = vadd.xlane.f32.xlu0 %v693
        %v695 = vpop.xlane.xlu0 %694
        %v696 = vadd.f32 %v651, %v652
        %697 = vadd.xlane.f32.xlu0 %v696
        %v698 = vpop.xlane.xlu0 %697
        %v699 = vadd.f32 %v653, %v654
        %700 = vadd.xlane.f32.xlu0 %v699
        %v701 = vpop.xlane.xlu0 %700
        %v702 = vadd.f32 %v655, %v656
        %703 = vadd.xlane.f32.xlu0 %v702
        %v704 = vpop.xlane.xlu0 %703
        %v705 = vmul.f32 %v659, %v576
        %v706 = vmul.f32 %v662, %v576
        %v707 = vmul.f32 %v665, %v576
        %v708 = vmul.f32 %v668, %v576
        %v709 = vmul.f32 %v671, %v576
        %v710 = vmul.f32 %v674, %v576
        %v711 = vmul.f32 %v677, %v576
        %v712 = vmul.f32 %v680, %v576
        %v713 = vmul.f32 %v683, %v576
        %v714 = vmul.f32 %v686, %v576
        %v715 = vmul.f32 %v689, %v576
        %v716 = vmul.f32 %v692, %v576
        %v717 = vmul.f32 %v695, %v576
        %v718 = vmul.f32 %v698, %v576
        %v719 = vmul.f32 %v701, %v576
        %v720 = vmul.f32 %v704, %v576
        %v721 = vadd.f32 %v705, 1e-05
        %v722 = vadd.f32 %v706, 1e-05
        %v723 = vadd.f32 %v707, 1e-05
        %v724 = vadd.f32 %v708, 1e-05
        %v725 = vadd.f32 %v709, 1e-05
        %v726 = vadd.f32 %v710, 1e-05
        %v727 = vadd.f32 %v711, 1e-05
        %v728 = vadd.f32 %v712, 1e-05
        %v729 = vadd.f32 %v713, 1e-05
        %v730 = vadd.f32 %v714, 1e-05
        %v731 = vadd.f32 %v715, 1e-05
        %v732 = vadd.f32 %v716, 1e-05
        %v733 = vadd.f32 %v717, 1e-05
        %v734 = vadd.f32 %v718, 1e-05
        %v735 = vadd.f32 %v719, 1e-05
        %v736 = vadd.f32 %v720, 1e-05
        %v737 = vrsqrt.pop %v721
        %v738 = vrsqrt.pop %v722
        %v739 = vrsqrt.pop %v723
        %v740 = vrsqrt.pop %v724
        %v741 = vrsqrt.pop %v725
        %v742 = vrsqrt.pop %v726
        %v743 = vrsqrt.pop %v727
        %v744 = vrsqrt.pop %v728
        %v745 = vrsqrt.pop %v729
        %v746 = vrsqrt.pop %v730
        %v747 = vrsqrt.pop %v731
        %v748 = vrsqrt.pop %v732
        %v749 = vrsqrt.pop %v733
        %v750 = vrsqrt.pop %v734
        %v751 = vrsqrt.pop %v735
        %v752 = vrsqrt.pop %v736
        %v753 = vmul.f32 %v593, %v737
        %v754 = vmul.f32 %v594, %v737
        %v755 = vmul.f32 %v595, %v738
        %v756 = vmul.f32 %v596, %v738
        %v757 = vmul.f32 %v597, %v739
        %v758 = vmul.f32 %v598, %v739
        %v759 = vmul.f32 %v599, %v740
        %v760 = vmul.f32 %v600, %v740
        %v761 = vmul.f32 %v601, %v741
        %v762 = vmul.f32 %v602, %v741
        %v763 = vmul.f32 %v603, %v742
        %v764 = vmul.f32 %v604, %v742
        %v765 = vmul.f32 %v605, %v743
        %v766 = vmul.f32 %v606, %v743
        %v767 = vmul.f32 %v607, %v744
        %v768 = vmul.f32 %v608, %v744
        %v769 = vmul.f32 %v609, %v745
        %v770 = vmul.f32 %v610, %v745
        %v771 = vmul.f32 %v611, %v746
        %v772 = vmul.f32 %v612, %v746
        %v773 = vmul.f32 %v613, %v747
        %v774 = vmul.f32 %v614, %v747
        %v775 = vmul.f32 %v615, %v748
        %v776 = vmul.f32 %v616, %v748
        %v777 = vmul.f32 %v617, %v749
        %v778 = vmul.f32 %v618, %v749
        %v779 = vmul.f32 %v619, %v750
        %v780 = vmul.f32 %v620, %v750
        %v781 = vmul.f32 %v621, %v751
        %v782 = vmul.f32 %v622, %v751
        %v783 = vmul.f32 %v623, %v752
        %v784 = vmul.f32 %v624, %v752
        %v786 = vlaneseq
        %v787 = vshrl.u32 %v786, 7
        %v788 = vsub.s32 0, %v787
        %v789 = vrot.slane %v526, %v788
        %v790 = vlaneseq
        %v791 = vshrl.u32 %v790, 7
        %v792 = vsub.s32 1, %v791
        %v793 = vrot.slane %v526, %v792
        %v796 = vmul.f32 %v753, %v789
        %v797 = vmul.f32 %v754, %v793
        %v798 = vmul.f32 %v755, %v789
        %v799 = vmul.f32 %v756, %v793
        %v800 = vmul.f32 %v757, %v789
        %v801 = vmul.f32 %v758, %v793
        %v802 = vmul.f32 %v759, %v789
        %v803 = vmul.f32 %v760, %v793
        %v804 = vmul.f32 %v761, %v789
        %v805 = vmul.f32 %v762, %v793
        %v806 = vmul.f32 %v763, %v789
        %v807 = vmul.f32 %v764, %v793
        %v808 = vmul.f32 %v765, %v789
        %v809 = vmul.f32 %v766, %v793
        %v810 = vmul.f32 %v767, %v789
        %v811 = vmul.f32 %v768, %v793
        %v812 = vmul.f32 %v769, %v789
        %v813 = vmul.f32 %v770, %v793
        %v814 = vmul.f32 %v771, %v789
        %v815 = vmul.f32 %v772, %v793
        %v816 = vmul.f32 %v773, %v789
        %v817 = vmul.f32 %v774, %v793
        %v818 = vmul.f32 %v775, %v789
        %v819 = vmul.f32 %v776, %v793
        %v820 = vmul.f32 %v777, %v789
        %v821 = vmul.f32 %v778, %v793
        %v822 = vmul.f32 %v779, %v789
        %v823 = vmul.f32 %v780, %v793
        %v824 = vmul.f32 %v781, %v789
        %v825 = vmul.f32 %v782, %v793
        %v826 = vmul.f32 %v783, %v789
        %v827 = vmul.f32 %v784, %v793
        %v829 = vlaneseq
        %v830 = vshrl.u32 %v829, 7
        %v831 = vsub.s32 0, %v830
        %v832 = vrot.slane %v527, %v831
        %v833 = vlaneseq
        %v834 = vshrl.u32 %v833, 7
        %v835 = vsub.s32 1, %v834
        %v836 = vrot.slane %v527, %v835
        %v839 = vadd.f32 %v796, %v832
        %v840 = vadd.f32 %v797, %v836
        %v841 = vadd.f32 %v798, %v832
        %v842 = vadd.f32 %v799, %v836
        %v843 = vadd.f32 %v800, %v832
        %v844 = vadd.f32 %v801, %v836
        %v845 = vadd.f32 %v802, %v832
        %v846 = vadd.f32 %v803, %v836
        %v847 = vadd.f32 %v804, %v832
        %v848 = vadd.f32 %v805, %v836
        %v849 = vadd.f32 %v806, %v832
        %v850 = vadd.f32 %v807, %v836
        %v851 = vadd.f32 %v808, %v832
        %v852 = vadd.f32 %v809, %v836
        %v853 = vadd.f32 %v810, %v832
        %v854 = vadd.f32 %v811, %v836
        %v855 = vadd.f32 %v812, %v832
        %v856 = vadd.f32 %v813, %v836
        %v857 = vadd.f32 %v814, %v832
        %v858 = vadd.f32 %v815, %v836
        %v859 = vadd.f32 %v816, %v832
        %v860 = vadd.f32 %v817, %v836
        %v861 = vadd.f32 %v818, %v832
        %v862 = vadd.f32 %v819, %v836
        %v863 = vadd.f32 %v820, %v832
        %v864 = vadd.f32 %v821, %v836
        %v865 = vadd.f32 %v822, %v832
        %v866 = vadd.f32 %v823, %v836
        %v867 = vadd.f32 %v824, %v832
        %v868 = vadd.f32 %v825, %v836
        %v869 = vadd.f32 %v826, %v832
        %v870 = vadd.f32 %v827, %v836
        %v871 = vpack.c.bf16 %v841, %v839
        %v872 = vpack.c.bf16 %v842, %v840
        %v873 = vpack.c.bf16 %v845, %v843
        %v874 = vpack.c.bf16 %v846, %v844
        %v875 = vpack.c.bf16 %v849, %v847
        %v876 = vpack.c.bf16 %v850, %v848
        %v877 = vpack.c.bf16 %v853, %v851
        %v878 = vpack.c.bf16 %v854, %v852
        %v879 = vpack.c.bf16 %v857, %v855
        %v880 = vpack.c.bf16 %v858, %v856
        %v881 = vpack.c.bf16 %v861, %v859
        %v882 = vpack.c.bf16 %v862, %v860
        %v883 = vpack.c.bf16 %v865, %v863
        %v884 = vpack.c.bf16 %v866, %v864
        %v885 = vpack.c.bf16 %v869, %v867
        %v886 = vpack.c.bf16 %v870, %v868
        %v887 = vld [vmem:[#allocation5] sm:$0xff]
        %v888 = vld [vmem:[#allocation5 + $0x8] sm:$0xff]
        %v889 = vld [vmem:[#allocation5 + $0x10] sm:$0xff]
        %v890 = vld [vmem:[#allocation5 + $0x18] sm:$0xff]
        %v891 = vld [vmem:[#allocation5 + $0x20] sm:$0xff]
        %v892 = vld [vmem:[#allocation5 + $0x28] sm:$0xff]
        %v893 = vld [vmem:[#allocation5 + $0x30] sm:$0xff]
        %v894 = vld [vmem:[#allocation5 + $0x38] sm:$0xff]
        %v895 = vld [vmem:[#allocation5 + $0x40] sm:$0xff]
        %v896 = vld [vmem:[#allocation5 + $0x48] sm:$0xff]
        %v897 = vld [vmem:[#allocation5 + $0x50] sm:$0xff]
        %v898 = vld [vmem:[#allocation5 + $0x58] sm:$0xff]
        %v899 = vld [vmem:[#allocation5 + $0x60] sm:$0xff]
        %v900 = vld [vmem:[#allocation5 + $0x68] sm:$0xff]
        %v901 = vld [vmem:[#allocation5 + $0x70] sm:$0xff]
        %v902 = vld [vmem:[#allocation5 + $0x78] sm:$0xff]
        %v903 = vld [vmem:[#allocation5 + $0x80] sm:$0xff]
        %v904 = vld [vmem:[#allocation5 + $0x88] sm:$0xff]
        %v905 = vld [vmem:[#allocation5 + $0x90] sm:$0xff]
        %v906 = vld [vmem:[#allocation5 + $0x98] sm:$0xff]
        %v907 = vld [vmem:[#allocation5 + $0xa0] sm:$0xff]
        %v908 = vld [vmem:[#allocation5 + $0xa8] sm:$0xff]
        %v909 = vld [vmem:[#allocation5 + $0xb0] sm:$0xff]
        %v910 = vld [vmem:[#allocation5 + $0xb8] sm:$0xff]
        %v911 = vld [vmem:[#allocation5 + $0xc0] sm:$0xff]
        %v912 = vld [vmem:[#allocation5 + $0xc8] sm:$0xff]
        %v913 = vld [vmem:[#allocation5 + $0xd0] sm:$0xff]
        %v914 = vld [vmem:[#allocation5 + $0xd8] sm:$0xff]
        %v915 = vld [vmem:[#allocation5 + $0xe0] sm:$0xff]
        %v916 = vld [vmem:[#allocation5 + $0xe8] sm:$0xff]
        %v917 = vld [vmem:[#allocation5 + $0xf0] sm:$0xff]
        %v918 = vld [vmem:[#allocation5 + $0xf8] sm:$0xff]
        %v919 = vld [vmem:[#allocation5 + $0x100] sm:$0xff]
        %v920 = vld [vmem:[#allocation5 + $0x108] sm:$0xff]
        %v921 = vld [vmem:[#allocation5 + $0x110] sm:$0xff]
        %v922 = vld [vmem:[#allocation5 + $0x118] sm:$0xff]
        %v923 = vld [vmem:[#allocation5 + $0x120] sm:$0xff]
        %v924 = vld [vmem:[#allocation5 + $0x128] sm:$0xff]
        %v925 = vld [vmem:[#allocation5 + $0x130] sm:$0xff]
        %v926 = vld [vmem:[#allocation5 + $0x138] sm:$0xff]
        %v927 = vld [vmem:[#allocation5 + $0x140] sm:$0xff]
        %v928 = vld [vmem:[#allocation5 + $0x148] sm:$0xff]
        %v929 = vld [vmem:[#allocation5 + $0x150] sm:$0xff]
        %v930 = vld [vmem:[#allocation5 + $0x158] sm:$0xff]
        %v931 = vld [vmem:[#allocation5 + $0x160] sm:$0xff]
        %v932 = vld [vmem:[#allocation5 + $0x168] sm:$0xff]
        %v933 = vld [vmem:[#allocation5 + $0x170] sm:$0xff]
        %v934 = vld [vmem:[#allocation5 + $0x178] sm:$0xff]
        %v935 = vld [vmem:[#allocation5 + $0x180] sm:$0xff]
        %v936 = vld [vmem:[#allocation5 + $0x188] sm:$0xff]
        %v937 = vld [vmem:[#allocation5 + $0x190] sm:$0xff]
        %v938 = vld [vmem:[#allocation5 + $0x198] sm:$0xff]
        %v939 = vld [vmem:[#allocation5 + $0x1a0] sm:$0xff]
        %v940 = vld [vmem:[#allocation5 + $0x1a8] sm:$0xff]
        %v941 = vld [vmem:[#allocation5 + $0x1b0] sm:$0xff]
        %v942 = vld [vmem:[#allocation5 + $0x1b8] sm:$0xff]
        %v943 = vld [vmem:[#allocation5 + $0x1c0] sm:$0xff]
        %v944 = vld [vmem:[#allocation5 + $0x1c8] sm:$0xff]
        %v945 = vld [vmem:[#allocation5 + $0x1d0] sm:$0xff]
        %v946 = vld [vmem:[#allocation5 + $0x1d8] sm:$0xff]
        %v947 = vld [vmem:[#allocation5 + $0x1e0] sm:$0xff]
        %v948 = vld [vmem:[#allocation5 + $0x1e8] sm:$0xff]
        %v949 = vld [vmem:[#allocation5 + $0x1f0] sm:$0xff]
        %v950 = vld [vmem:[#allocation5 + $0x1f8] sm:$0xff]
        %v951 = vld [vmem:[#allocation5 + $0x200] sm:$0xff]
        %v952 = vld [vmem:[#allocation5 + $0x208] sm:$0xff]
        %v953 = vld [vmem:[#allocation5 + $0x210] sm:$0xff]
        %v954 = vld [vmem:[#allocation5 + $0x218] sm:$0xff]
        %v955 = vld [vmem:[#allocation5 + $0x220] sm:$0xff]
        %v956 = vld [vmem:[#allocation5 + $0x228] sm:$0xff]
        %v957 = vld [vmem:[#allocation5 + $0x230] sm:$0xff]
        %v958 = vld [vmem:[#allocation5 + $0x238] sm:$0xff]
        %v959 = vld [vmem:[#allocation5 + $0x240] sm:$0xff]
        %v960 = vld [vmem:[#allocation5 + $0x248] sm:$0xff]
        %v961 = vld [vmem:[#allocation5 + $0x250] sm:$0xff]
        %v962 = vld [vmem:[#allocation5 + $0x258] sm:$0xff]
        %v963 = vld [vmem:[#allocation5 + $0x260] sm:$0xff]
        %v964 = vld [vmem:[#allocation5 + $0x268] sm:$0xff]
        %v965 = vld [vmem:[#allocation5 + $0x270] sm:$0xff]
        %v966 = vld [vmem:[#allocation5 + $0x278] sm:$0xff]
        %v967 = vld [vmem:[#allocation5 + $0x280] sm:$0xff]
        %v968 = vld [vmem:[#allocation5 + $0x288] sm:$0xff]
        %v969 = vld [vmem:[#allocation5 + $0x290] sm:$0xff]
        %v970 = vld [vmem:[#allocation5 + $0x298] sm:$0xff]
        %v971 = vld [vmem:[#allocation5 + $0x2a0] sm:$0xff]
        %v972 = vld [vmem:[#allocation5 + $0x2a8] sm:$0xff]
        %v973 = vld [vmem:[#allocation5 + $0x2b0] sm:$0xff]
        %v974 = vld [vmem:[#allocation5 + $0x2b8] sm:$0xff]
        %v975 = vld [vmem:[#allocation5 + $0x2c0] sm:$0xff]
        %v976 = vld [vmem:[#allocation5 + $0x2c8] sm:$0xff]
        %v977 = vld [vmem:[#allocation5 + $0x2d0] sm:$0xff]
        %v978 = vld [vmem:[#allocation5 + $0x2d8] sm:$0xff]
        %v979 = vld [vmem:[#allocation5 + $0x2e0] sm:$0xff]
        %v980 = vld [vmem:[#allocation5 + $0x2e8] sm:$0xff]
        %v981 = vld [vmem:[#allocation5 + $0x2f0] sm:$0xff]
        %v982 = vld [vmem:[#allocation5 + $0x2f8] sm:$0xff]
        %v1079 = vunpack.c.l.b16 %v887
        %v1080 = vunpack.c.h.b16 %v887
        %v1081 = vunpack.c.l.b16 %v888
        %v1082 = vunpack.c.h.b16 %v888
        %v1083 = vunpack.c.l.b16 %v889
        %v1084 = vunpack.c.h.b16 %v889
        %v1085 = vunpack.c.l.b16 %v890
        %v1086 = vunpack.c.h.b16 %v890
        %v1087 = vunpack.c.l.b16 %v891
        %v1088 = vunpack.c.h.b16 %v891
        %v1089 = vunpack.c.l.b16 %v892
        %v1090 = vunpack.c.h.b16 %v892
        %v1091 = vunpack.c.l.b16 %v893
        %v1092 = vunpack.c.h.b16 %v893
        %v1093 = vunpack.c.l.b16 %v894
        %v1094 = vunpack.c.h.b16 %v894
        %v1095 = vunpack.c.l.b16 %v895
        %v1096 = vunpack.c.h.b16 %v895
        %v1097 = vunpack.c.l.b16 %v896
        %v1098 = vunpack.c.h.b16 %v896
        %v1099 = vunpack.c.l.b16 %v897
        %v1100 = vunpack.c.h.b16 %v897
        %v1101 = vunpack.c.l.b16 %v898
        %v1102 = vunpack.c.h.b16 %v898
        %v1103 = vunpack.c.l.b16 %v899
        %v1104 = vunpack.c.h.b16 %v899
        %v1105 = vunpack.c.l.b16 %v900
        %v1106 = vunpack.c.h.b16 %v900
        %v1107 = vunpack.c.l.b16 %v901
        %v1108 = vunpack.c.h.b16 %v901
        %v1109 = vunpack.c.l.b16 %v902
        %v1110 = vunpack.c.h.b16 %v902
        %v1111 = vunpack.c.l.b16 %v903
        %v1112 = vunpack.c.h.b16 %v903
        %v1113 = vunpack.c.l.b16 %v904
        %v1114 = vunpack.c.h.b16 %v904
        %v1115 = vunpack.c.l.b16 %v905
        %v1116 = vunpack.c.h.b16 %v905
        %v1117 = vunpack.c.l.b16 %v906
        %v1118 = vunpack.c.h.b16 %v906
        %v1119 = vunpack.c.l.b16 %v907
        %v1120 = vunpack.c.h.b16 %v907
        %v1121 = vunpack.c.l.b16 %v908
        %v1122 = vunpack.c.h.b16 %v908
        %v1123 = vunpack.c.l.b16 %v909
        %v1124 = vunpack.c.h.b16 %v909
        %v1125 = vunpack.c.l.b16 %v910
        %v1126 = vunpack.c.h.b16 %v910
        %v1127 = vunpack.c.l.b16 %v911
        %v1128 = vunpack.c.h.b16 %v911
        %v1129 = vunpack.c.l.b16 %v912
        %v1130 = vunpack.c.h.b16 %v912
        %v1131 = vunpack.c.l.b16 %v913
        %v1132 = vunpack.c.h.b16 %v913
        %v1133 = vunpack.c.l.b16 %v914
        %v1134 = vunpack.c.h.b16 %v914
        %v1135 = vunpack.c.l.b16 %v915
        %v1136 = vunpack.c.h.b16 %v915
        %v1137 = vunpack.c.l.b16 %v916
        %v1138 = vunpack.c.h.b16 %v916
        %v1139 = vunpack.c.l.b16 %v917
        %v1140 = vunpack.c.h.b16 %v917
        %v1141 = vunpack.c.l.b16 %v918
        %v1142 = vunpack.c.h.b16 %v918
        %v1143 = vunpack.c.l.b16 %v919
        %v1144 = vunpack.c.h.b16 %v919
        %v1145 = vunpack.c.l.b16 %v920
        %v1146 = vunpack.c.h.b16 %v920
        %v1147 = vunpack.c.l.b16 %v921
        %v1148 = vunpack.c.h.b16 %v921
        %v1149 = vunpack.c.l.b16 %v922
        %v1150 = vunpack.c.h.b16 %v922
        %v1151 = vunpack.c.l.b16 %v923
        %v1152 = vunpack.c.h.b16 %v923
        %v1153 = vunpack.c.l.b16 %v924
        %v1154 = vunpack.c.h.b16 %v924
        %v1155 = vunpack.c.l.b16 %v925
        %v1156 = vunpack.c.h.b16 %v925
        %v1157 = vunpack.c.l.b16 %v926
        %v1158 = vunpack.c.h.b16 %v926
        %v1159 = vunpack.c.l.b16 %v927
        %v1160 = vunpack.c.h.b16 %v927
        %v1161 = vunpack.c.l.b16 %v928
        %v1162 = vunpack.c.h.b16 %v928
        %v1163 = vunpack.c.l.b16 %v929
        %v1164 = vunpack.c.h.b16 %v929
        %v1165 = vunpack.c.l.b16 %v930
        %v1166 = vunpack.c.h.b16 %v930
        %v1167 = vunpack.c.l.b16 %v931
        %v1168 = vunpack.c.h.b16 %v931
        %v1169 = vunpack.c.l.b16 %v932
        %v1170 = vunpack.c.h.b16 %v932
        %v1171 = vunpack.c.l.b16 %v933
        %v1172 = vunpack.c.h.b16 %v933
        %v1173 = vunpack.c.l.b16 %v934
        %v1174 = vunpack.c.h.b16 %v934
        %v1175 = vunpack.c.l.b16 %v935
        %v1176 = vunpack.c.h.b16 %v935
        %v1177 = vunpack.c.l.b16 %v936
        %v1178 = vunpack.c.h.b16 %v936
        %v1179 = vunpack.c.l.b16 %v937
        %v1180 = vunpack.c.h.b16 %v937
        %v1181 = vunpack.c.l.b16 %v938
        %v1182 = vunpack.c.h.b16 %v938
        %v1183 = vunpack.c.l.b16 %v939
        %v1184 = vunpack.c.h.b16 %v939
        %v1185 = vunpack.c.l.b16 %v940
        %v1186 = vunpack.c.h.b16 %v940
        %v1187 = vunpack.c.l.b16 %v941
        %v1188 = vunpack.c.h.b16 %v941
        %v1189 = vunpack.c.l.b16 %v942
        %v1190 = vunpack.c.h.b16 %v942
        %v1191 = vunpack.c.l.b16 %v943
        %v1192 = vunpack.c.h.b16 %v943
        %v1193 = vunpack.c.l.b16 %v944
        %v1194 = vunpack.c.h.b16 %v944
        %v1195 = vunpack.c.l.b16 %v945
        %v1196 = vunpack.c.h.b16 %v945
        %v1197 = vunpack.c.l.b16 %v946
        %v1198 = vunpack.c.h.b16 %v946
        %v1199 = vunpack.c.l.b16 %v947
        %v1200 = vunpack.c.h.b16 %v947
        %v1201 = vunpack.c.l.b16 %v948
        %v1202 = vunpack.c.h.b16 %v948
        %v1203 = vunpack.c.l.b16 %v949
        %v1204 = vunpack.c.h.b16 %v949
        %v1205 = vunpack.c.l.b16 %v950
        %v1206 = vunpack.c.h.b16 %v950
        %v1207 = vunpack.c.l.b16 %v951
        %v1208 = vunpack.c.h.b16 %v951
        %v1209 = vunpack.c.l.b16 %v952
        %v1210 = vunpack.c.h.b16 %v952
        %v1211 = vunpack.c.l.b16 %v953
        %v1212 = vunpack.c.h.b16 %v953
        %v1213 = vunpack.c.l.b16 %v954
        %v1214 = vunpack.c.h.b16 %v954
        %v1215 = vunpack.c.l.b16 %v955
        %v1216 = vunpack.c.h.b16 %v955
        %v1217 = vunpack.c.l.b16 %v956
        %v1218 = vunpack.c.h.b16 %v956
        %v1219 = vunpack.c.l.b16 %v957
        %v1220 = vunpack.c.h.b16 %v957
        %v1221 = vunpack.c.l.b16 %v958
        %v1222 = vunpack.c.h.b16 %v958
        %v1223 = vunpack.c.l.b16 %v959
        %v1224 = vunpack.c.h.b16 %v959
        %v1225 = vunpack.c.l.b16 %v960
        %v1226 = vunpack.c.h.b16 %v960
        %v1227 = vunpack.c.l.b16 %v961
        %v1228 = vunpack.c.h.b16 %v961
        %v1229 = vunpack.c.l.b16 %v962
        %v1230 = vunpack.c.h.b16 %v962
        %v1231 = vunpack.c.l.b16 %v963
        %v1232 = vunpack.c.h.b16 %v963
        %v1233 = vunpack.c.l.b16 %v964
        %v1234 = vunpack.c.h.b16 %v964
        %v1235 = vunpack.c.l.b16 %v965
        %v1236 = vunpack.c.h.b16 %v965
        %v1237 = vunpack.c.l.b16 %v966
        %v1238 = vunpack.c.h.b16 %v966
        %v1239 = vunpack.c.l.b16 %v967
        %v1240 = vunpack.c.h.b16 %v967
        %v1241 = vunpack.c.l.b16 %v968
        %v1242 = vunpack.c.h.b16 %v968
        %v1243 = vunpack.c.l.b16 %v969
        %v1244 = vunpack.c.h.b16 %v969
        %v1245 = vunpack.c.l.b16 %v970
        %v1246 = vunpack.c.h.b16 %v970
        %v1247 = vunpack.c.l.b16 %v971
        %v1248 = vunpack.c.h.b16 %v971
        %v1249 = vunpack.c.l.b16 %v972
        %v1250 = vunpack.c.h.b16 %v972
        %v1251 = vunpack.c.l.b16 %v973
        %v1252 = vunpack.c.h.b16 %v973
        %v1253 = vunpack.c.l.b16 %v974
        %v1254 = vunpack.c.h.b16 %v974
        %v1255 = vunpack.c.l.b16 %v975
        %v1256 = vunpack.c.h.b16 %v975
        %v1257 = vunpack.c.l.b16 %v976
        %v1258 = vunpack.c.h.b16 %v976
        %v1259 = vunpack.c.l.b16 %v977
        %v1260 = vunpack.c.h.b16 %v977
        %v1261 = vunpack.c.l.b16 %v978
        %v1262 = vunpack.c.h.b16 %v978
        %v1263 = vunpack.c.l.b16 %v979
        %v1264 = vunpack.c.h.b16 %v979
        %v1265 = vunpack.c.l.b16 %v980
        %v1266 = vunpack.c.h.b16 %v980
        %v1267 = vunpack.c.l.b16 %v981
        %v1268 = vunpack.c.h.b16 %v981
        %v1269 = vunpack.c.l.b16 %v982
        %v1270 = vunpack.c.h.b16 %v982
        %v1271 = vpack.c.b16 %v1085, %v1079
        %v1272 = vpack.c.b16 %v1086, %v1080
        %v1273 = vpack.c.b16 %v1087, %v1081
        %v1274 = vpack.c.b16 %v1088, %v1082
        %v1275 = vpack.c.b16 %v1089, %v1083
        %v1276 = vpack.c.b16 %v1090, %v1084
        %v1277 = vpack.c.b16 %v1097, %v1091
        %v1278 = vpack.c.b16 %v1098, %v1092
        %v1279 = vpack.c.b16 %v1099, %v1093
        %v1280 = vpack.c.b16 %v1100, %v1094
        %v1281 = vpack.c.b16 %v1101, %v1095
        %v1282 = vpack.c.b16 %v1102, %v1096
        %v1283 = vpack.c.b16 %v1109, %v1103
        %v1284 = vpack.c.b16 %v1110, %v1104
        %v1285 = vpack.c.b16 %v1111, %v1105
        %v1286 = vpack.c.b16 %v1112, %v1106
        %v1287 = vpack.c.b16 %v1113, %v1107
        %v1288 = vpack.c.b16 %v1114, %v1108
        %v1289 = vpack.c.b16 %v1121, %v1115
        %v1290 = vpack.c.b16 %v1122, %v1116
        %v1291 = vpack.c.b16 %v1123, %v1117
        %v1292 = vpack.c.b16 %v1124, %v1118
        %v1293 = vpack.c.b16 %v1125, %v1119
        %v1294 = vpack.c.b16 %v1126, %v1120
        %v1295 = vpack.c.b16 %v1133, %v1127
        %v1296 = vpack.c.b16 %v1134, %v1128
        %v1297 = vpack.c.b16 %v1135, %v1129
        %v1298 = vpack.c.b16 %v1136, %v1130
        %v1299 = vpack.c.b16 %v1137, %v1131
        %v1300 = vpack.c.b16 %v1138, %v1132
        %v1301 = vpack.c.b16 %v1145, %v1139
        %v1302 = vpack.c.b16 %v1146, %v1140
        %v1303 = vpack.c.b16 %v1147, %v1141
        %v1304 = vpack.c.b16 %v1148, %v1142
        %v1305 = vpack.c.b16 %v1149, %v1143
        %v1306 = vpack.c.b16 %v1150, %v1144
        %v1307 = vpack.c.b16 %v1157, %v1151
        %v1308 = vpack.c.b16 %v1158, %v1152
        %v1309 = vpack.c.b16 %v1159, %v1153
        %v1310 = vpack.c.b16 %v1160, %v1154
        %v1311 = vpack.c.b16 %v1161, %v1155
        %v1312 = vpack.c.b16 %v1162, %v1156
        %v1313 = vpack.c.b16 %v1169, %v1163
        %v1314 = vpack.c.b16 %v1170, %v1164
        %v1315 = vpack.c.b16 %v1171, %v1165
        %v1316 = vpack.c.b16 %v1172, %v1166
        %v1317 = vpack.c.b16 %v1173, %v1167
        %v1318 = vpack.c.b16 %v1174, %v1168
        %v1319 = vpack.c.b16 %v1181, %v1175
        %v1320 = vpack.c.b16 %v1182, %v1176
        %v1321 = vpack.c.b16 %v1183, %v1177
        %v1322 = vpack.c.b16 %v1184, %v1178
        %v1323 = vpack.c.b16 %v1185, %v1179
        %v1324 = vpack.c.b16 %v1186, %v1180
        %v1325 = vpack.c.b16 %v1193, %v1187
        %v1326 = vpack.c.b16 %v1194, %v1188
        %v1327 = vpack.c.b16 %v1195, %v1189
        %v1328 = vpack.c.b16 %v1196, %v1190
        %v1329 = vpack.c.b16 %v1197, %v1191
        %v1330 = vpack.c.b16 %v1198, %v1192
        %v1331 = vpack.c.b16 %v1205, %v1199
        %v1332 = vpack.c.b16 %v1206, %v1200
        %v1333 = vpack.c.b16 %v1207, %v1201
        %v1334 = vpack.c.b16 %v1208, %v1202
        %v1335 = vpack.c.b16 %v1209, %v1203
        %v1336 = vpack.c.b16 %v1210, %v1204
        %v1337 = vpack.c.b16 %v1217, %v1211
        %v1338 = vpack.c.b16 %v1218, %v1212
        %v1339 = vpack.c.b16 %v1219, %v1213
        %v1340 = vpack.c.b16 %v1220, %v1214
        %v1341 = vpack.c.b16 %v1221, %v1215
        %v1342 = vpack.c.b16 %v1222, %v1216
        %v1343 = vpack.c.b16 %v1229, %v1223
        %v1344 = vpack.c.b16 %v1230, %v1224
        %v1345 = vpack.c.b16 %v1231, %v1225
        %v1346 = vpack.c.b16 %v1232, %v1226
        %v1347 = vpack.c.b16 %v1233, %v1227
        %v1348 = vpack.c.b16 %v1234, %v1228
        %v1349 = vpack.c.b16 %v1241, %v1235
        %v1350 = vpack.c.b16 %v1242, %v1236
        %v1351 = vpack.c.b16 %v1243, %v1237
        %v1352 = vpack.c.b16 %v1244, %v1238
        %v1353 = vpack.c.b16 %v1245, %v1239
        %v1354 = vpack.c.b16 %v1246, %v1240
        %v1355 = vpack.c.b16 %v1253, %v1247
        %v1356 = vpack.c.b16 %v1254, %v1248
        %v1357 = vpack.c.b16 %v1255, %v1249
        %v1358 = vpack.c.b16 %v1256, %v1250
        %v1359 = vpack.c.b16 %v1257, %v1251
        %v1360 = vpack.c.b16 %v1258, %v1252
        %v1361 = vpack.c.b16 %v1265, %v1259
        %v1362 = vpack.c.b16 %v1266, %v1260
        %v1363 = vpack.c.b16 %v1267, %v1261
        %v1364 = vpack.c.b16 %v1268, %v1262
        %v1365 = vpack.c.b16 %v1269, %v1263
        %v1366 = vpack.c.b16 %v1270, %v1264
        %1463 = vmatprep.subr.bf16.mxu0 %v1272
        %1464 = vmatpush1.bf16.msra.mxu0 %v1271
        %1465 = vmatprep.subr.bf16.mxu0 %v1278
        %1466 = vmatpush1.bf16.msra.mxu0 %v1277
        %1467 = vmatprep.subr.bf16.mxu0 %v1284
        %1468 = vmatpush1.bf16.msra.mxu0 %v1283
        %1469 = vmatprep.subr.bf16.mxu0 %v1290
        %1470 = vmatpush1.bf16.msra.mxu0 %v1289
        %1471 = vmatprep.subr.bf16.mxu0 %v1296
        %1472 = vmatpush1.bf16.msra.mxu0 %v1295
        %1473 = vmatprep.subr.bf16.mxu0 %v1302
        %1474 = vmatpush1.bf16.msra.mxu0 %v1301
        %1475 = vmatprep.subr.bf16.mxu0 %v1308
        %1476 = vmatpush1.bf16.msra.mxu0 %v1307
        %1477 = vmatprep.subr.bf16.mxu0 %v1314
        %1478 = vmatpush1.bf16.msra.mxu0 %v1313
        %1479 = vmatprep.subr.bf16.mxu0 %v1320
        %1480 = vmatpush1.bf16.msra.mxu0 %v1319
        %1481 = vmatprep.subr.bf16.mxu0 %v1326
        %1482 = vmatpush1.bf16.msra.mxu0 %v1325
        %1483 = vmatprep.subr.bf16.mxu0 %v1332
        %1484 = vmatpush1.bf16.msra.mxu0 %v1331
        %1485 = vmatprep.subr.bf16.mxu0 %v1338
        %1486 = vmatpush1.bf16.msra.mxu0 %v1337
        %1487 = vmatprep.subr.bf16.mxu0 %v1344
        %1488 = vmatpush1.bf16.msra.mxu0 %v1343
        %1489 = vmatprep.subr.bf16.mxu0 %v1350
        %1490 = vmatpush1.bf16.msra.mxu0 %v1349
        %1491 = vmatprep.subr.bf16.mxu0 %v1356
        %1492 = vmatpush1.bf16.msra.mxu0 %v1355
        %1493 = vmatprep.subr.bf16.mxu0 %v1362
        %1494 = vmatpush1.bf16.msra.mxu0 %v1361
        %1495 = vmatprep.mubr.bf16.mxu0 %v872
        %1496 = vmatmul.mubr.bf16.gmra.mrb[0].mxu0 %v871
        %v1497 = vpop.f32.mrb[0].mxu0
        %v1498 = vadd.f32 0.0, %v1497
        %v1499 = vpop.f32.mrb[0].mxu0
        %v1500 = vadd.f32 0.0, %v1499
        %v1501 = vpop.f32.mrb[0].mxu0
        %v1502 = vadd.f32 0.0, %v1501
        %v1503 = vpop.f32.mrb[0].mxu0
        %v1504 = vadd.f32 0.0, %v1503
        %1505 = vmatprep.mubr.bf16.mxu0 %v874
        %1506 = vmatmul.mubr.bf16.gmra.mrb[0].mxu0 %v873
        %v1507 = vpop.f32.mrb[0].mxu0
        %v1508 = vadd.f32 0.0, %v1507
        %v1509 = vpop.f32.mrb[0].mxu0
        %v1510 = vadd.f32 0.0, %v1509
        %v1511 = vpop.f32.mrb[0].mxu0
        %v1512 = vadd.f32 0.0, %v1511
        %v1513 = vpop.f32.mrb[0].mxu0
        %v1514 = vadd.f32 0.0, %v1513
        %1515 = vmatprep.mubr.bf16.mxu0 %v876
        %1516 = vmatmul.mubr.bf16.gmra.mrb[0].mxu0 %v875
        %v1517 = vpop.f32.mrb[0].mxu0
        %v1518 = vadd.f32 0.0, %v1517
        %v1519 = vpop.f32.mrb[0].mxu0
        %v1520 = vadd.f32 0.0, %v1519
        %v1521 = vpop.f32.mrb[0].mxu0
        %v1522 = vadd.f32 0.0, %v1521
        %v1523 = vpop.f32.mrb[0].mxu0
        %v1524 = vadd.f32 0.0, %v1523
        %1525 = vmatprep.mubr.bf16.mxu0 %v878
        %1526 = vmatmul.mubr.bf16.gmra.mrb[0].mxu0 %v877
        %v1527 = vpop.f32.mrb[0].mxu0
        %v1528 = vadd.f32 0.0, %v1527
        %v1529 = vpop.f32.mrb[0].mxu0
        %v1530 = vadd.f32 0.0, %v1529
        %v1531 = vpop.f32.mrb[0].mxu0
        %v1532 = vadd.f32 0.0, %v1531
        %v1533 = vpop.f32.mrb[0].mxu0
        %v1534 = vadd.f32 0.0, %v1533
        %1535 = vmatprep.mubr.bf16.mxu0 %v880
        %1536 = vmatmul.mubr.bf16.gmra.mrb[0].mxu0 %v879
        %v1537 = vpop.f32.mrb[0].mxu0
        %v1538 = vadd.f32 0.0, %v1537
        %v1539 = vpop.f32.mrb[0].mxu0
        %v1540 = vadd.f32 0.0, %v1539
        %v1541 = vpop.f32.mrb[0].mxu0
        %v1542 = vadd.f32 0.0, %v1541
        %v1543 = vpop.f32.mrb[0].mxu0
        %v1544 = vadd.f32 0.0, %v1543
        %1545 = vmatprep.mubr.bf16.mxu0 %v882
        %1546 = vmatmul.mubr.bf16.gmra.mrb[0].mxu0 %v881
        %v1547 = vpop.f32.mrb[0].mxu0
        %v1548 = vadd.f32 0.0, %v1547
        %v1549 = vpop.f32.mrb[0].mxu0
        %v1550 = vadd.f32 0.0, %v1549
        %v1551 = vpop.f32.mrb[0].mxu0
        %v1552 = vadd.f32 0.0, %v1551
        %v1553 = vpop.f32.mrb[0].mxu0
        %v1554 = vadd.f32 0.0, %v1553
        %1555 = vmatprep.mubr.bf16.mxu0 %v884
        %1556 = vmatmul.mubr.bf16.gmra.mrb[0].mxu0 %v883
        %v1557 = vpop.f32.mrb[0].mxu0
        %v1558 = vadd.f32 0.0, %v1557
        %v1559 = vpop.f32.mrb[0].mxu0
        %v1560 = vadd.f32 0.0, %v1559
        %v1561 = vpop.f32.mrb[0].mxu0
        %v1562 = vadd.f32 0.0, %v1561
        %v1563 = vpop.f32.mrb[0].mxu0
        %v1564 = vadd.f32 0.0, %v1563
        %1565 = vmatprep.mubr.bf16.mxu0 %v886
        %1566 = vmatmul.mubr.bf16.gmra.mrb[0].mxu0 %v885
        %v1567 = vpop.f32.mrb[0].mxu0
        %v1568 = vadd.f32 0.0, %v1567
        %v1569 = vpop.f32.mrb[0].mxu0
        %v1570 = vadd.f32 0.0, %v1569
        %v1571 = vpop.f32.mrb[0].mxu0
        %v1572 = vadd.f32 0.0, %v1571
        %v1573 = vpop.f32.mrb[0].mxu0
        %v1574 = vadd.f32 0.0, %v1573
        %1575 = vdwg.mxu0
        %1576 = vmatprep.subr.bf16.mxu0 %v1274
        %1577 = vmatpush1.bf16.msra.mxu0 %v1273
        %1578 = vmatprep.subr.bf16.mxu0 %v1280
        %1579 = vmatpush1.bf16.msra.mxu0 %v1279
        %1580 = vmatprep.subr.bf16.mxu0 %v1286
        %1581 = vmatpush1.bf16.msra.mxu0 %v1285
        %1582 = vmatprep.subr.bf16.mxu0 %v1292
        %1583 = vmatpush1.bf16.msra.mxu0 %v1291
        %1584 = vmatprep.subr.bf16.mxu0 %v1298
        %1585 = vmatpush1.bf16.msra.mxu0 %v1297
        %1586 = vmatprep.subr.bf16.mxu0 %v1304
        %1587 = vmatpush1.bf16.msra.mxu0 %v1303
        %1588 = vmatprep.subr.bf16.mxu0 %v1310
        %1589 = vmatpush1.bf16.msra.mxu0 %v1309
        %1590 = vmatprep.subr.bf16.mxu0 %v1316
        %1591 = vmatpush1.bf16.msra.mxu0 %v1315
        %1592 = vmatprep.subr.bf16.mxu0 %v1322
        %1593 = vmatpush1.bf16.msra.mxu0 %v1321
        %1594 = vmatprep.subr.bf16.mxu0 %v1328
        %1595 = vmatpush1.bf16.msra.mxu0 %v1327
        %1596 = vmatprep.subr.bf16.mxu0 %v1334
        %1597 = vmatpush1.bf16.msra.mxu0 %v1333
        %1598 = vmatprep.subr.bf16.mxu0 %v1340
        %1599 = vmatpush1.bf16.msra.mxu0 %v1339
        %1600 = vmatprep.subr.bf16.mxu0 %v1346
        %1601 = vmatpush1.bf16.msra.mxu0 %v1345
        %1602 = vmatprep.subr.bf16.mxu0 %v1352
        %1603 = vmatpush1.bf16.msra.mxu0 %v1351
        %1604 = vmatprep.subr.bf16.mxu0 %v1358
        %1605 = vmatpush1.bf16.msra.mxu0 %v1357
        %1606 = vmatprep.subr.bf16.mxu0 %v1364
        %1607 = vmatpush1.bf16.msra.mxu0 %v1363
        %1608 = vmatprep.mubr.bf16.mxu0 %v872
        %1609 = vmatmul.mubr.bf16.gmra.mrb[0].mxu0 %v871
        %v1610 = vpop.f32.mrb[0].mxu0
        %v1611 = vadd.f32 0.0, %v1610
        %v1612 = vpop.f32.mrb[0].mxu0
        %v1613 = vadd.f32 0.0, %v1612
        %v1614 = vpop.f32.mrb[0].mxu0
        %v1615 = vadd.f32 0.0, %v1614
        %v1616 = vpop.f32.mrb[0].mxu0
        %v1617 = vadd.f32 0.0, %v1616
        %1618 = vmatprep.mubr.bf16.mxu0 %v874
        %1619 = vmatmul.mubr.bf16.gmra.mrb[0].mxu0 %v873
        %v1620 = vpop.f32.mrb[0].mxu0
        %v1621 = vadd.f32 0.0, %v1620
        %v1622 = vpop.f32.mrb[0].mxu0
        %v1623 = vadd.f32 0.0, %v1622
        %v1624 = vpop.f32.mrb[0].mxu0
        %v1625 = vadd.f32 0.0, %v1624
        %v1626 = vpop.f32.mrb[0].mxu0
        %v1627 = vadd.f32 0.0, %v1626
        %1628 = vmatprep.mubr.bf16.mxu0 %v876
        %1629 = vmatmul.mubr.bf16.gmra.mrb[0].mxu0 %v875
        %v1630 = vpop.f32.mrb[0].mxu0
        %v1631 = vadd.f32 0.0, %v1630
        %v1632 = vpop.f32.mrb[0].mxu0
        %v1633 = vadd.f32 0.0, %v1632
        %v1634 = vpop.f32.mrb[0].mxu0
        %v1635 = vadd.f32 0.0, %v1634
        %v1636 = vpop.f32.mrb[0].mxu0
        %v1637 = vadd.f32 0.0, %v1636
        %1638 = vmatprep.mubr.bf16.mxu0 %v878
        %1639 = vmatmul.mubr.bf16.gmra.mrb[0].mxu0 %v877
        %v1640 = vpop.f32.mrb[0].mxu0
        %v1641 = vadd.f32 0.0, %v1640
        %v1642 = vpop.f32.mrb[0].mxu0
        %v1643 = vadd.f32 0.0, %v1642
        %v1644 = vpop.f32.mrb[0].mxu0
        %v1645 = vadd.f32 0.0, %v1644
        %v1646 = vpop.f32.mrb[0].mxu0
        %v1647 = vadd.f32 0.0, %v1646
        %1648 = vmatprep.mubr.bf16.mxu0 %v880
        %1649 = vmatmul.mubr.bf16.gmra.mrb[0].mxu0 %v879
        %v1650 = vpop.f32.mrb[0].mxu0
        %v1651 = vadd.f32 0.0, %v1650
        %v1652 = vpop.f32.mrb[0].mxu0
        %v1653 = vadd.f32 0.0, %v1652
        %v1654 = vpop.f32.mrb[0].mxu0
        %v1655 = vadd.f32 0.0, %v1654
        %v1656 = vpop.f32.mrb[0].mxu0
        %v1657 = vadd.f32 0.0, %v1656
        %1658 = vmatprep.mubr.bf16.mxu0 %v882
        %1659 = vmatmul.mubr.bf16.gmra.mrb[0].mxu0 %v881
        %v1660 = vpop.f32.mrb[0].mxu0
        %v1661 = vadd.f32 0.0, %v1660
        %v1662 = vpop.f32.mrb[0].mxu0
        %v1663 = vadd.f32 0.0, %v1662
        %v1664 = vpop.f32.mrb[0].mxu0
        %v1665 = vadd.f32 0.0, %v1664
        %v1666 = vpop.f32.mrb[0].mxu0
        %v1667 = vadd.f32 0.0, %v1666
        %1668 = vmatprep.mubr.bf16.mxu0 %v884
        %1669 = vmatmul.mubr.bf16.gmra.mrb[0].mxu0 %v883
        %v1670 = vpop.f32.mrb[0].mxu0
        %v1671 = vadd.f32 0.0, %v1670
        %v1672 = vpop.f32.mrb[0].mxu0
        %v1673 = vadd.f32 0.0, %v1672
        %v1674 = vpop.f32.mrb[0].mxu0
        %v1675 = vadd.f32 0.0, %v1674
        %v1676 = vpop.f32.mrb[0].mxu0
        %v1677 = vadd.f32 0.0, %v1676
        %1678 = vmatprep.mubr.bf16.mxu0 %v886
        %1679 = vmatmul.mubr.bf16.gmra.mrb[0].mxu0 %v885
        %v1680 = vpop.f32.mrb[0].mxu0
        %v1681 = vadd.f32 0.0, %v1680
        %v1682 = vpop.f32.mrb[0].mxu0
        %v1683 = vadd.f32 0.0, %v1682
        %v1684 = vpop.f32.mrb[0].mxu0
        %v1685 = vadd.f32 0.0, %v1684
        %v1686 = vpop.f32.mrb[0].mxu0
        %v1687 = vadd.f32 0.0, %v1686
        %1688 = vdwg.mxu0
        %1689 = vmatprep.subr.bf16.mxu0 %v1276
        %1690 = vmatpush1.bf16.msra.mxu0 %v1275
        %1691 = vmatprep.subr.bf16.mxu0 %v1282
        %1692 = vmatpush1.bf16.msra.mxu0 %v1281
        %1693 = vmatprep.subr.bf16.mxu0 %v1288
        %1694 = vmatpush1.bf16.msra.mxu0 %v1287
        %1695 = vmatprep.subr.bf16.mxu0 %v1294
        %1696 = vmatpush1.bf16.msra.mxu0 %v1293
        %1697 = vmatprep.subr.bf16.mxu0 %v1300
        %1698 = vmatpush1.bf16.msra.mxu0 %v1299
        %1699 = vmatprep.subr.bf16.mxu0 %v1306
        %1700 = vmatpush1.bf16.msra.mxu0 %v1305
        %1701 = vmatprep.subr.bf16.mxu0 %v1312
        %1702 = vmatpush1.bf16.msra.mxu0 %v1311
        %1703 = vmatprep.subr.bf16.mxu0 %v1318
        %1704 = vmatpush1.bf16.msra.mxu0 %v1317
        %1705 = vmatprep.subr.bf16.mxu0 %v1324
        %1706 = vmatpush1.bf16.msra.mxu0 %v1323
        %1707 = vmatprep.subr.bf16.mxu0 %v1330
        %1708 = vmatpush1.bf16.msra.mxu0 %v1329
        %1709 = vmatprep.subr.bf16.mxu0 %v1336
        %1710 = vmatpush1.bf16.msra.mxu0 %v1335
        %1711 = vmatprep.subr.bf16.mxu0 %v1342
        %1712 = vmatpush1.bf16.msra.mxu0 %v1341
        %1713 = vmatprep.subr.bf16.mxu0 %v1348
        %1714 = vmatpush1.bf16.msra.mxu0 %v1347
        %1715 = vmatprep.subr.bf16.mxu0 %v1354
        %1716 = vmatpush1.bf16.msra.mxu0 %v1353
        %1717 = vmatprep.subr.bf16.mxu0 %v1360
        %1718 = vmatpush1.bf16.msra.mxu0 %v1359
        %1719 = vmatprep.subr.bf16.mxu0 %v1366
        %1720 = vmatpush1.bf16.msra.mxu0 %v1365
        %1721 = vmatprep.mubr.bf16.mxu0 %v872
        %1722 = vmatmul.mubr.bf16.gmra.mrb[0].mxu0 %v871
        %v1723 = vpop.f32.mrb[0].mxu0
        %v1724 = vadd.f32 0.0, %v1723
        %v1725 = vpop.f32.mrb[0].mxu0
        %v1726 = vadd.f32 0.0, %v1725
        %v1727 = vpop.f32.mrb[0].mxu0
        %v1728 = vadd.f32 0.0, %v1727
        %v1729 = vpop.f32.mrb[0].mxu0
        %v1730 = vadd.f32 0.0, %v1729
        %1731 = vmatprep.mubr.bf16.mxu0 %v874
        %1732 = vmatmul.mubr.bf16.gmra.mrb[0].mxu0 %v873
        %v1733 = vpop.f32.mrb[0].mxu0
        %v1734 = vadd.f32 0.0, %v1733
        %v1735 = vpop.f32.mrb[0].mxu0
        %v1736 = vadd.f32 0.0, %v1735
        %v1737 = vpop.f32.mrb[0].mxu0
        %v1738 = vadd.f32 0.0, %v1737
        %v1739 = vpop.f32.mrb[0].mxu0
        %v1740 = vadd.f32 0.0, %v1739
        %1741 = vmatprep.mubr.bf16.mxu0 %v876
        %1742 = vmatmul.mubr.bf16.gmra.mrb[0].mxu0 %v875
        %v1743 = vpop.f32.mrb[0].mxu0
        %v1744 = vadd.f32 0.0, %v1743
        %v1745 = vpop.f32.mrb[0].mxu0
        %v1746 = vadd.f32 0.0, %v1745
        %v1747 = vpop.f32.mrb[0].mxu0
        %v1748 = vadd.f32 0.0, %v1747
        %v1749 = vpop.f32.mrb[0].mxu0
        %v1750 = vadd.f32 0.0, %v1749
        %1751 = vmatprep.mubr.bf16.mxu0 %v878
        %1752 = vmatmul.mubr.bf16.gmra.mrb[0].mxu0 %v877
        %v1753 = vpop.f32.mrb[0].mxu0
        %v1754 = vadd.f32 0.0, %v1753
        %v1755 = vpop.f32.mrb[0].mxu0
        %v1756 = vadd.f32 0.0, %v1755
        %v1757 = vpop.f32.mrb[0].mxu0
        %v1758 = vadd.f32 0.0, %v1757
        %v1759 = vpop.f32.mrb[0].mxu0
        %v1760 = vadd.f32 0.0, %v1759
        %1761 = vmatprep.mubr.bf16.mxu0 %v880
        %1762 = vmatmul.mubr.bf16.gmra.mrb[0].mxu0 %v879
        %v1763 = vpop.f32.mrb[0].mxu0
        %v1764 = vadd.f32 0.0, %v1763
        %v1765 = vpop.f32.mrb[0].mxu0
        %v1766 = vadd.f32 0.0, %v1765
        %v1767 = vpop.f32.mrb[0].mxu0
        %v1768 = vadd.f32 0.0, %v1767
        %v1769 = vpop.f32.mrb[0].mxu0
        %v1770 = vadd.f32 0.0, %v1769
        %1771 = vmatprep.mubr.bf16.mxu0 %v882
        %1772 = vmatmul.mubr.bf16.gmra.mrb[0].mxu0 %v881
        %v1773 = vpop.f32.mrb[0].mxu0
        %v1774 = vadd.f32 0.0, %v1773
        %v1775 = vpop.f32.mrb[0].mxu0
        %v1776 = vadd.f32 0.0, %v1775
        %v1777 = vpop.f32.mrb[0].mxu0
        %v1778 = vadd.f32 0.0, %v1777
        %v1779 = vpop.f32.mrb[0].mxu0
        %v1780 = vadd.f32 0.0, %v1779
        %1781 = vmatprep.mubr.bf16.mxu0 %v884
        %1782 = vmatmul.mubr.bf16.gmra.mrb[0].mxu0 %v883
        %v1783 = vpop.f32.mrb[0].mxu0
        %v1784 = vadd.f32 0.0, %v1783
        %v1785 = vpop.f32.mrb[0].mxu0
        %v1786 = vadd.f32 0.0, %v1785
        %v1787 = vpop.f32.mrb[0].mxu0
        %v1788 = vadd.f32 0.0, %v1787
        %v1789 = vpop.f32.mrb[0].mxu0
        %v1790 = vadd.f32 0.0, %v1789
        %1791 = vmatprep.mubr.bf16.mxu0 %v886
        %1792 = vmatmul.mubr.bf16.gmra.mrb[0].mxu0 %v885
        %v1793 = vpop.f32.mrb[0].mxu0
        %v1794 = vadd.f32 0.0, %v1793
        %v1795 = vpop.f32.mrb[0].mxu0
        %v1796 = vadd.f32 0.0, %v1795
        %v1797 = vpop.f32.mrb[0].mxu0
        %v1798 = vadd.f32 0.0, %v1797
        %v1799 = vpop.f32.mrb[0].mxu0
        %v1800 = vadd.f32 0.0, %v1799
        %1801 = vdwg.mxu0
        %v1802 = vpack.c.bf16 %v1615, %v1611
        %v1803 = vpack.c.bf16 %v1617, %v1613
        %v1804 = vpack.c.bf16 %v1625, %v1621
        %v1805 = vpack.c.bf16 %v1627, %v1623
        %v1806 = vpack.c.bf16 %v1635, %v1631
        %v1807 = vpack.c.bf16 %v1637, %v1633
        %v1808 = vpack.c.bf16 %v1645, %v1641
        %v1809 = vpack.c.bf16 %v1647, %v1643
        %v1810 = vpack.c.bf16 %v1655, %v1651
        %v1811 = vpack.c.bf16 %v1657, %v1653
        %v1812 = vpack.c.bf16 %v1665, %v1661
        %v1813 = vpack.c.bf16 %v1667, %v1663
        %v1814 = vpack.c.bf16 %v1675, %v1671
        %v1815 = vpack.c.bf16 %v1677, %v1673
        %v1816 = vpack.c.bf16 %v1685, %v1681
        %v1817 = vpack.c.bf16 %v1687, %v1683
        %v1818 = vpack.c.bf16 %v1502, %v1498
        %v1819 = vpack.c.bf16 %v1504, %v1500
        %v1820 = vpack.c.bf16 %v1512, %v1508
        %v1821 = vpack.c.bf16 %v1514, %v1510
        %v1822 = vpack.c.bf16 %v1522, %v1518
        %v1823 = vpack.c.bf16 %v1524, %v1520
        %v1824 = vpack.c.bf16 %v1532, %v1528
        %v1825 = vpack.c.bf16 %v1534, %v1530
        %v1826 = vpack.c.bf16 %v1542, %v1538
        %v1827 = vpack.c.bf16 %v1544, %v1540
        %v1828 = vpack.c.bf16 %v1552, %v1548
        %v1829 = vpack.c.bf16 %v1554, %v1550
        %v1830 = vpack.c.bf16 %v1562, %v1558
        %v1831 = vpack.c.bf16 %v1564, %v1560
        %v1832 = vpack.c.bf16 %v1572, %v1568
        %v1833 = vpack.c.bf16 %v1574, %v1570
        %1834 = vmatprep.subr.bf16.mxu0 %v1819
        %1835 = vmatpush1.bf16.xpose.msra.mxu0 %v1818
        %1836 = vmatprep.subr.bf16.mxu0 %v1821
        %1837 = vmatpush1.bf16.xpose.msra.mxu0 %v1820
        %1838 = vmatprep.subr.bf16.mxu0 %v1823
        %1839 = vmatpush1.bf16.xpose.msra.mxu0 %v1822
        %1840 = vmatprep.subr.bf16.mxu0 %v1825
        %1841 = vmatpush1.bf16.xpose.msra.mxu0 %v1824
        %1842 = vmatprep.subr.bf16.mxu0 0
        %1843 = vmatpush1.bf16.xpose.msra.mxu0 0
        %1844 = vmatprep.subr.bf16.mxu0 0
        %1845 = vmatpush1.bf16.xpose.msra.mxu0 0
        %1846 = vmatprep.subr.bf16.mxu0 0
        %1847 = vmatpush1.bf16.xpose.msra.mxu0 0
        %1848 = vmatprep.subr.bf16.mxu0 0
        %1849 = vmatpush1.bf16.xpose.msra.mxu0 0
        %1850 = vmatprep.subr.bf16.mxu0 0
        %1851 = vmatpush1.bf16.xpose.msra.mxu0 0
        %1852 = vmatprep.subr.bf16.mxu0 0
        %1853 = vmatpush1.bf16.xpose.msra.mxu0 0
        %1854 = vmatprep.subr.bf16.mxu0 0
        %1855 = vmatpush1.bf16.xpose.msra.mxu0 0
        %1856 = vmatprep.subr.bf16.mxu0 0
        %1857 = vmatpush1.bf16.xpose.msra.mxu0 0
        %1858 = vmatprep.subr.bf16.mxu0 0
        %1859 = vmatpush1.bf16.xpose.msra.mxu0 0
        %1860 = vmatprep.subr.bf16.mxu0 0
        %1861 = vmatpush1.bf16.xpose.msra.mxu0 0
        %1862 = vmatprep.subr.bf16.mxu0 0
        %1863 = vmatpush1.bf16.xpose.msra.mxu0 0
        %1864 = vmatprep.subr.bf16.mxu0 0
        %1865 = vmatpush1.bf16.xpose.msra.mxu0 0
        %1866 = vmatprep.mubr.bf16.mxu0 %v1803
        %1867 = vmatmul.mubr.bf16.gmra.mrb[0].mxu0 %v1802
        %v1868 = vpop.f32.mrb[0].mxu0
        %v1869 = vadd.f32 0.0, %v1868
        %v1870 = vpop.f32.mrb[0].mxu0
        %v1871 = vpop.f32.mrb[0].mxu0
        %v1872 = vadd.f32 0.0, %v1871
        %v1873 = vpop.f32.mrb[0].mxu0
        %1874 = vmatprep.mubr.bf16.mxu0 %v1805
        %1875 = vmatmul.mubr.bf16.gmra.mrb[0].mxu0 %v1804
        %v1876 = vpop.f32.mrb[0].mxu0
        %v1877 = vadd.f32 0.0, %v1876
        %v1878 = vpop.f32.mrb[0].mxu0
        %v1879 = vpop.f32.mrb[0].mxu0
        %v1880 = vadd.f32 0.0, %v1879
        %v1881 = vpop.f32.mrb[0].mxu0
        %1882 = vmatprep.mubr.bf16.mxu0 %v1807
        %1883 = vmatmul.mubr.bf16.gmra.mrb[0].mxu0 %v1806
        %v1884 = vpop.f32.mrb[0].mxu0
        %v1885 = vadd.f32 0.0, %v1884
        %v1886 = vpop.f32.mrb[0].mxu0
        %v1887 = vpop.f32.mrb[0].mxu0
        %v1888 = vadd.f32 0.0, %v1887
        %v1889 = vpop.f32.mrb[0].mxu0
        %1890 = vmatprep.mubr.bf16.mxu0 %v1809
        %1891 = vmatmul.mubr.bf16.gmra.mrb[0].mxu0 %v1808
        %v1892 = vpop.f32.mrb[0].mxu0
        %v1893 = vadd.f32 0.0, %v1892
        %v1894 = vpop.f32.mrb[0].mxu0
        %v1895 = vpop.f32.mrb[0].mxu0
        %v1896 = vadd.f32 0.0, %v1895
        %v1897 = vpop.f32.mrb[0].mxu0
        %1898 = vdwg.mxu0
        %1899 = vmatprep.subr.bf16.mxu0 %v1827
        %1900 = vmatpush1.bf16.xpose.msra.mxu0 %v1826
        %1901 = vmatprep.subr.bf16.mxu0 %v1829
        %1902 = vmatpush1.bf16.xpose.msra.mxu0 %v1828
        %1903 = vmatprep.subr.bf16.mxu0 %v1831
        %1904 = vmatpush1.bf16.xpose.msra.mxu0 %v1830
        %1905 = vmatprep.subr.bf16.mxu0 %v1833
        %1906 = vmatpush1.bf16.xpose.msra.mxu0 %v1832
        %1907 = vmatprep.subr.bf16.mxu0 0
        %1908 = vmatpush1.bf16.xpose.msra.mxu0 0
        %1909 = vmatprep.subr.bf16.mxu0 0
        %1910 = vmatpush1.bf16.xpose.msra.mxu0 0
        %1911 = vmatprep.subr.bf16.mxu0 0
        %1912 = vmatpush1.bf16.xpose.msra.mxu0 0
        %1913 = vmatprep.subr.bf16.mxu0 0
        %1914 = vmatpush1.bf16.xpose.msra.mxu0 0
        %1915 = vmatprep.subr.bf16.mxu0 0
        %1916 = vmatpush1.bf16.xpose.msra.mxu0 0
        %1917 = vmatprep.subr.bf16.mxu0 0
        %1918 = vmatpush1.bf16.xpose.msra.mxu0 0
        %1919 = vmatprep.subr.bf16.mxu0 0
        %1920 = vmatpush1.bf16.xpose.msra.mxu0 0
        %1921 = vmatprep.subr.bf16.mxu0 0
        %1922 = vmatpush1.bf16.xpose.msra.mxu0 0
        %1923 = vmatprep.subr.bf16.mxu0 0
        %1924 = vmatpush1.bf16.xpose.msra.mxu0 0
        %1925 = vmatprep.subr.bf16.mxu0 0
        %1926 = vmatpush1.bf16.xpose.msra.mxu0 0
        %1927 = vmatprep.subr.bf16.mxu0 0
        %1928 = vmatpush1.bf16.xpose.msra.mxu0 0
        %1929 = vmatprep.subr.bf16.mxu0 0
        %1930 = vmatpush1.bf16.xpose.msra.mxu0 0
        %1931 = vmatprep.mubr.bf16.mxu0 %v1811
        %1932 = vmatmul.mubr.bf16.gmra.mrb[0].mxu0 %v1810
        %v1933 = vpop.f32.mrb[0].mxu0
        %v1934 = vadd.f32 0.0, %v1933
        %v1935 = vpop.f32.mrb[0].mxu0
        %v1936 = vpop.f32.mrb[0].mxu0
        %v1937 = vadd.f32 0.0, %v1936
        %v1938 = vpop.f32.mrb[0].mxu0
        %1939 = vmatprep.mubr.bf16.mxu0 %v1813
        %1940 = vmatmul.mubr.bf16.gmra.mrb[0].mxu0 %v1812
        %v1941 = vpop.f32.mrb[0].mxu0
        %v1942 = vadd.f32 0.0, %v1941
        %v1943 = vpop.f32.mrb[0].mxu0
        %v1944 = vpop.f32.mrb[0].mxu0
        %v1945 = vadd.f32 0.0, %v1944
        %v1946 = vpop.f32.mrb[0].mxu0
        %1947 = vmatprep.mubr.bf16.mxu0 %v1815
        %1948 = vmatmul.mubr.bf16.gmra.mrb[0].mxu0 %v1814
        %v1949 = vpop.f32.mrb[0].mxu0
        %v1950 = vadd.f32 0.0, %v1949
        %v1951 = vpop.f32.mrb[0].mxu0
        %v1952 = vpop.f32.mrb[0].mxu0
        %v1953 = vadd.f32 0.0, %v1952
        %v1954 = vpop.f32.mrb[0].mxu0
        %1955 = vmatprep.mubr.bf16.mxu0 %v1817
        %1956 = vmatmul.mubr.bf16.gmra.mrb[0].mxu0 %v1816
        %v1957 = vpop.f32.mrb[0].mxu0
        %v1958 = vadd.f32 0.0, %v1957
        %v1959 = vpop.f32.mrb[0].mxu0
        %v1960 = vpop.f32.mrb[0].mxu0
        %v1961 = vadd.f32 0.0, %v1960
        %v1962 = vpop.f32.mrb[0].mxu0
        %1963 = vdwg.mxu0
        %v1964 = vmul.f32 %v1869, 0.0625
        %v1965 = vmul.f32 %v1872, 0.0625
        %v1966 = vmul.f32 %v1877, 0.0625
        %v1967 = vmul.f32 %v1880, 0.0625
        %v1968 = vmul.f32 %v1885, 0.0625
        %v1969 = vmul.f32 %v1888, 0.0625
        %v1970 = vmul.f32 %v1893, 0.0625
        %v1971 = vmul.f32 %v1896, 0.0625
        %v1972 = vmul.f32 %v1934, 0.0625
        %v1973 = vmul.f32 %v1937, 0.0625
        %v1974 = vmul.f32 %v1942, 0.0625
        %v1975 = vmul.f32 %v1945, 0.0625
        %v1976 = vmul.f32 %v1950, 0.0625
        %v1977 = vmul.f32 %v1953, 0.0625
        %v1978 = vmul.f32 %v1958, 0.0625
        %v1979 = vmul.f32 %v1961, 0.0625
        %vm1980 = vcmask 523264
        %v1981 = vsel %vm1980, %v1964, -inf
        %1982 = vmax.xlane.f32.xlu0 %v1981
        %v1983 = vpop.xlane.xlu0 %1982
        %v1984 = vsel %vm1980, %v1965, -inf
        %1985 = vmax.xlane.f32.xlu0 %v1984
        %v1986 = vpop.xlane.xlu0 %1985
        %v1987 = vsel %vm1980, %v1966, -inf
        %1988 = vmax.xlane.f32.xlu0 %v1987
        %v1989 = vpop.xlane.xlu0 %1988
        %v1990 = vsel %vm1980, %v1967, -inf
        %1991 = vmax.xlane.f32.xlu0 %v1990
        %v1992 = vpop.xlane.xlu0 %1991
        %v1993 = vsel %vm1980, %v1968, -inf
        %1994 = vmax.xlane.f32.xlu0 %v1993
        %v1995 = vpop.xlane.xlu0 %1994
        %v1996 = vsel %vm1980, %v1969, -inf
        %1997 = vmax.xlane.f32.xlu0 %v1996
        %v1998 = vpop.xlane.xlu0 %1997
        %v1999 = vsel %vm1980, %v1970, -inf
        %2000 = vmax.xlane.f32.xlu0 %v1999
        %v2001 = vpop.xlane.xlu0 %2000
        %v2002 = vsel %vm1980, %v1971, -inf
        %2003 = vmax.xlane.f32.xlu0 %v2002
        %v2004 = vpop.xlane.xlu0 %2003
        %v2005 = vsel %vm1980, %v1972, -inf
        %2006 = vmax.xlane.f32.xlu0 %v2005
        %v2007 = vpop.xlane.xlu0 %2006
        %v2008 = vsel %vm1980, %v1973, -inf
        %2009 = vmax.xlane.f32.xlu0 %v2008
        %v2010 = vpop.xlane.xlu0 %2009
        %v2011 = vsel %vm1980, %v1974, -inf
        %2012 = vmax.xlane.f32.xlu0 %v2011
        %v2013 = vpop.xlane.xlu0 %2012
        %v2014 = vsel %vm1980, %v1975, -inf
        %2015 = vmax.xlane.f32.xlu0 %v2014
        %v2016 = vpop.xlane.xlu0 %2015
        %v2017 = vsel %vm1980, %v1976, -inf
        %2018 = vmax.xlane.f32.xlu0 %v2017
        %v2019 = vpop.xlane.xlu0 %2018
        %v2020 = vsel %vm1980, %v1977, -inf
        %2021 = vmax.xlane.f32.xlu0 %v2020
        %v2022 = vpop.xlane.xlu0 %2021
        %v2023 = vsel %vm1980, %v1978, -inf
        %2024 = vmax.xlane.f32.xlu0 %v2023
        %v2025 = vpop.xlane.xlu0 %2024
        %v2026 = vsel %vm1980, %v1979, -inf
        %2027 = vmax.xlane.f32.xlu0 %v2026
        %v2028 = vpop.xlane.xlu0 %2027
        %v2029 = vsub.f32 %v1964, %v1983
        %v2030 = vsub.f32 %v1965, %v1986
        %v2031 = vsub.f32 %v1966, %v1989
        %v2032 = vsub.f32 %v1967, %v1992
        %v2033 = vsub.f32 %v1968, %v1995
        %v2034 = vsub.f32 %v1969, %v1998
        %v2035 = vsub.f32 %v1970, %v2001
        %v2036 = vsub.f32 %v1971, %v2004
        %v2037 = vsub.f32 %v1972, %v2007
        %v2038 = vsub.f32 %v1973, %v2010
        %v2039 = vsub.f32 %v1974, %v2013
        %v2040 = vsub.f32 %v1975, %v2016
        %v2041 = vsub.f32 %v1976, %v2019
        %v2042 = vsub.f32 %v1977, %v2022
        %v2043 = vsub.f32 %v1978, %v2025
        %v2044 = vsub.f32 %v1979, %v2028
        %v2045 = vmul.f32 %v2029, 1.442695
        %v2046 = vpow.pop %v2045
        %v2047 = vmul.f32 %v2030, 1.442695
        %v2048 = vpow.pop %v2047
        %v2049 = vmul.f32 %v2031, 1.442695
        %v2050 = vpow.pop %v2049
        %v2051 = vmul.f32 %v2032, 1.442695
        %v2052 = vpow.pop %v2051
        %v2053 = vmul.f32 %v2033, 1.442695
        %v2054 = vpow.pop %v2053
        %v2055 = vmul.f32 %v2034, 1.442695
        %v2056 = vpow.pop %v2055
        %v2057 = vmul.f32 %v2035, 1.442695
        %v2058 = vpow.pop %v2057
        %v2059 = vmul.f32 %v2036, 1.442695
        %v2060 = vpow.pop %v2059
        %v2061 = vmul.f32 %v2037, 1.442695
        %v2062 = vpow.pop %v2061
        %v2063 = vmul.f32 %v2038, 1.442695
        %v2064 = vpow.pop %v2063
        %v2065 = vmul.f32 %v2039, 1.442695
        %v2066 = vpow.pop %v2065
        %v2067 = vmul.f32 %v2040, 1.442695
        %v2068 = vpow.pop %v2067
        %v2069 = vmul.f32 %v2041, 1.442695
        %v2070 = vpow.pop %v2069
        %v2071 = vmul.f32 %v2042, 1.442695
        %v2072 = vpow.pop %v2071
        %v2073 = vmul.f32 %v2043, 1.442695
        %v2074 = vpow.pop %v2073
        %v2075 = vmul.f32 %v2044, 1.442695
        %v2076 = vpow.pop %v2075
        %v2077 = vsel %vm1980, %v2046, 0.0
        %2078 = vadd.xlane.f32.xlu0 %v2077
        %v2079 = vpop.xlane.xlu0 %2078
        %v2080 = vsel %vm1980, %v2048, 0.0
        %2081 = vadd.xlane.f32.xlu0 %v2080
        %v2082 = vpop.xlane.xlu0 %2081
        %v2083 = vsel %vm1980, %v2050, 0.0
        %2084 = vadd.xlane.f32.xlu0 %v2083
        %v2085 = vpop.xlane.xlu0 %2084
        %v2086 = vsel %vm1980, %v2052, 0.0
        %2087 = vadd.xlane.f32.xlu0 %v2086
        %v2088 = vpop.xlane.xlu0 %2087
        %v2089 = vsel %vm1980, %v2054, 0.0
        %2090 = vadd.xlane.f32.xlu0 %v2089
        %v2091 = vpop.xlane.xlu0 %2090
        %v2092 = vsel %vm1980, %v2056, 0.0
        %2093 = vadd.xlane.f32.xlu0 %v2092
        %v2094 = vpop.xlane.xlu0 %2093
        %v2095 = vsel %vm1980, %v2058, 0.0
        %2096 = vadd.xlane.f32.xlu0 %v2095
        %v2097 = vpop.xlane.xlu0 %2096
        %v2098 = vsel %vm1980, %v2060, 0.0
        %2099 = vadd.xlane.f32.xlu0 %v2098
        %v2100 = vpop.xlane.xlu0 %2099
        %v2101 = vsel %vm1980, %v2062, 0.0
        %2102 = vadd.xlane.f32.xlu0 %v2101
        %v2103 = vpop.xlane.xlu0 %2102
        %v2104 = vsel %vm1980, %v2064, 0.0
        %2105 = vadd.xlane.f32.xlu0 %v2104
        %v2106 = vpop.xlane.xlu0 %2105
        %v2107 = vsel %vm1980, %v2066, 0.0
        %2108 = vadd.xlane.f32.xlu0 %v2107
        %v2109 = vpop.xlane.xlu0 %2108
        %v2110 = vsel %vm1980, %v2068, 0.0
        %2111 = vadd.xlane.f32.xlu0 %v2110
        %v2112 = vpop.xlane.xlu0 %2111
        %v2113 = vsel %vm1980, %v2070, 0.0
        %2114 = vadd.xlane.f32.xlu0 %v2113
        %v2115 = vpop.xlane.xlu0 %2114
        %v2116 = vsel %vm1980, %v2072, 0.0
        %2117 = vadd.xlane.f32.xlu0 %v2116
        %v2118 = vpop.xlane.xlu0 %2117
        %v2119 = vsel %vm1980, %v2074, 0.0
        %2120 = vadd.xlane.f32.xlu0 %v2119
        %v2121 = vpop.xlane.xlu0 %2120
        %v2122 = vsel %vm1980, %v2076, 0.0
        %2123 = vadd.xlane.f32.xlu0 %v2122
        %v2124 = vpop.xlane.xlu0 %2123
        %v2125 = vrcp.pop %v2079
        %v2126 = vrcp.pop %v2082
        %v2127 = vrcp.pop %v2085
        %v2128 = vrcp.pop %v2088
        %v2129 = vrcp.pop %v2091
        %v2130 = vrcp.pop %v2094
        %v2131 = vrcp.pop %v2097
        %v2132 = vrcp.pop %v2100
        %v2133 = vrcp.pop %v2103
        %v2134 = vrcp.pop %v2106
        %v2135 = vrcp.pop %v2109
        %v2136 = vrcp.pop %v2112
        %v2137 = vrcp.pop %v2115
        %v2138 = vrcp.pop %v2118
        %v2139 = vrcp.pop %v2121
        %v2140 = vrcp.pop %v2124
        %v2141 = vmul.f32 %v2046, %v2125
        %v2142 = vmul.f32 %v2048, %v2126
        %v2143 = vmul.f32 %v2050, %v2127
        %v2144 = vmul.f32 %v2052, %v2128
        %v2145 = vmul.f32 %v2054, %v2129
        %v2146 = vmul.f32 %v2056, %v2130
        %v2147 = vmul.f32 %v2058, %v2131
        %v2148 = vmul.f32 %v2060, %v2132
        %v2149 = vmul.f32 %v2062, %v2133
        %v2150 = vmul.f32 %v2064, %v2134
        %v2151 = vmul.f32 %v2066, %v2135
        %v2152 = vmul.f32 %v2068, %v2136
        %v2153 = vmul.f32 %v2070, %v2137
        %v2154 = vmul.f32 %v2072, %v2138
        %v2155 = vmul.f32 %v2074, %v2139
        %v2156 = vmul.f32 %v2076, %v2140
        %v2157 = vpack.c.bf16 %v2142, %v2141
        %v2158 = vpack.c.bf16 %v2144, %v2143
        %v2159 = vpack.c.bf16 %v2146, %v2145
        %v2160 = vpack.c.bf16 %v2148, %v2147
        %v2161 = vpack.c.bf16 %v2150, %v2149
        %v2162 = vpack.c.bf16 %v2152, %v2151
        %v2163 = vpack.c.bf16 %v2154, %v2153
        %v2164 = vpack.c.bf16 %v2156, %v2155
        %v2165 = vpack.c.bf16 %v1728, %v1724
        %v2166 = vpack.c.bf16 %v1730, %v1726
        %v2167 = vpack.c.bf16 %v1738, %v1734
        %v2168 = vpack.c.bf16 %v1740, %v1736
        %v2169 = vpack.c.bf16 %v1748, %v1744
        %v2170 = vpack.c.bf16 %v1750, %v1746
        %v2171 = vpack.c.bf16 %v1758, %v1754
        %v2172 = vpack.c.bf16 %v1760, %v1756
        %v2173 = vpack.c.bf16 %v1768, %v1764
        %v2174 = vpack.c.bf16 %v1770, %v1766
        %v2175 = vpack.c.bf16 %v1778, %v1774
        %v2176 = vpack.c.bf16 %v1780, %v1776
        %v2177 = vpack.c.bf16 %v1788, %v1784
        %v2178 = vpack.c.bf16 %v1790, %v1786
        %v2179 = vpack.c.bf16 %v1798, %v1794
        %v2180 = vpack.c.bf16 %v1800, %v1796
        %v2182 = vsel %vm1980, %v2157, 0
        %v2185 = vsel %vm1980, %v2158, 0
        %v2188 = vsel %vm1980, %v2159, 0
        %v2191 = vsel %vm1980, %v2160, 0
        %2193 = vmatprep.subr.bf16.mxu0 %v2166
        %2194 = vmatpush1.bf16.msra.mxu0 %v2165
        %2195 = vmatprep.subr.bf16.mxu0 %v2168
        %2196 = vmatpush1.bf16.msra.mxu0 %v2167
        %2197 = vmatprep.subr.bf16.mxu0 %v2170
        %2198 = vmatpush1.bf16.msra.mxu0 %v2169
        %2199 = vmatprep.subr.bf16.mxu0 %v2172
        %2200 = vmatpush1.bf16.msra.mxu0 %v2171
        %2201 = vmatprep.subr.bf16.mxu0 0
        %2202 = vmatpush1.bf16.msra.mxu0 0
        %2203 = vmatprep.subr.bf16.mxu0 0
        %2204 = vmatpush1.bf16.msra.mxu0 0
        %2205 = vmatprep.subr.bf16.mxu0 0
        %2206 = vmatpush1.bf16.msra.mxu0 0
        %2207 = vmatprep.subr.bf16.mxu0 0
        %2208 = vmatpush1.bf16.msra.mxu0 0
        %2209 = vmatprep.subr.bf16.mxu0 0
        %2210 = vmatpush1.bf16.msra.mxu0 0
        %2211 = vmatprep.subr.bf16.mxu0 0
        %2212 = vmatpush1.bf16.msra.mxu0 0
        %2213 = vmatprep.subr.bf16.mxu0 0
        %2214 = vmatpush1.bf16.msra.mxu0 0
        %2215 = vmatprep.subr.bf16.mxu0 0
        %2216 = vmatpush1.bf16.msra.mxu0 0
        %2217 = vmatprep.subr.bf16.mxu0 0
        %2218 = vmatpush1.bf16.msra.mxu0 0
        %2219 = vmatprep.subr.bf16.mxu0 0
        %2220 = vmatpush1.bf16.msra.mxu0 0
        %2221 = vmatprep.subr.bf16.mxu0 0
        %2222 = vmatpush1.bf16.msra.mxu0 0
        %2223 = vmatprep.subr.bf16.mxu0 0
        %2224 = vmatpush1.bf16.msra.mxu0 0
        %2225 = vmatprep.mubr.bf16.mxu0 0
        %2226 = vmatmul.mubr.bf16.gmra.mrb[0].mxu0 %v2182
        %v2227 = vpop.f32.mrb[0].mxu0
        %v2228 = vadd.f32 0.0, %v2227
        %v2229 = vpop.f32.mrb[0].mxu0
        %v2230 = vadd.f32 0.0, %v2229
        %v2231 = vpop.f32.mrb[0].mxu0
        %v2232 = vadd.f32 0.0, %v2231
        %v2233 = vpop.f32.mrb[0].mxu0
        %v2234 = vadd.f32 0.0, %v2233
        %2235 = vmatprep.mubr.bf16.mxu0 0
        %2236 = vmatmul.mubr.bf16.gmra.mrb[0].mxu0 %v2185
        %v2237 = vpop.f32.mrb[0].mxu0
        %v2238 = vadd.f32 0.0, %v2237
        %v2239 = vpop.f32.mrb[0].mxu0
        %v2240 = vadd.f32 0.0, %v2239
        %v2241 = vpop.f32.mrb[0].mxu0
        %v2242 = vadd.f32 0.0, %v2241
        %v2243 = vpop.f32.mrb[0].mxu0
        %v2244 = vadd.f32 0.0, %v2243
        %2245 = vmatprep.mubr.bf16.mxu0 0
        %2246 = vmatmul.mubr.bf16.gmra.mrb[0].mxu0 %v2188
        %v2247 = vpop.f32.mrb[0].mxu0
        %v2248 = vadd.f32 0.0, %v2247
        %v2249 = vpop.f32.mrb[0].mxu0
        %v2250 = vadd.f32 0.0, %v2249
        %v2251 = vpop.f32.mrb[0].mxu0
        %v2252 = vadd.f32 0.0, %v2251
        %v2253 = vpop.f32.mrb[0].mxu0
        %v2254 = vadd.f32 0.0, %v2253
        %2255 = vmatprep.mubr.bf16.mxu0 0
        %2256 = vmatmul.mubr.bf16.gmra.mrb[0].mxu0 %v2191
        %v2257 = vpop.f32.mrb[0].mxu0
        %v2258 = vadd.f32 0.0, %v2257
        %v2259 = vpop.f32.mrb[0].mxu0
        %v2260 = vadd.f32 0.0, %v2259
        %v2261 = vpop.f32.mrb[0].mxu0
        %v2262 = vadd.f32 0.0, %v2261
        %v2263 = vpop.f32.mrb[0].mxu0
        %v2264 = vadd.f32 0.0, %v2263
        %2265 = vdwg.mxu0
        %v2267 = vsel %vm1980, %v2161, 0
        %v2270 = vsel %vm1980, %v2162, 0
        %v2273 = vsel %vm1980, %v2163, 0
        %v2276 = vsel %vm1980, %v2164, 0
        %2278 = vmatprep.subr.bf16.mxu0 %v2174
        %2279 = vmatpush1.bf16.msra.mxu0 %v2173
        %2280 = vmatprep.subr.bf16.mxu0 %v2176
        %2281 = vmatpush1.bf16.msra.mxu0 %v2175
        %2282 = vmatprep.subr.bf16.mxu0 %v2178
        %2283 = vmatpush1.bf16.msra.mxu0 %v2177
        %2284 = vmatprep.subr.bf16.mxu0 %v2180
        %2285 = vmatpush1.bf16.msra.mxu0 %v2179
        %2286 = vmatprep.subr.bf16.mxu0 0
        %2287 = vmatpush1.bf16.msra.mxu0 0
        %2288 = vmatprep.subr.bf16.mxu0 0
        %2289 = vmatpush1.bf16.msra.mxu0 0
        %2290 = vmatprep.subr.bf16.mxu0 0
        %2291 = vmatpush1.bf16.msra.mxu0 0
        %2292 = vmatprep.subr.bf16.mxu0 0
        %2293 = vmatpush1.bf16.msra.mxu0 0
        %2294 = vmatprep.subr.bf16.mxu0 0
        %2295 = vmatpush1.bf16.msra.mxu0 0
        %2296 = vmatprep.subr.bf16.mxu0 0
        %2297 = vmatpush1.bf16.msra.mxu0 0
        %2298 = vmatprep.subr.bf16.mxu0 0
        %2299 = vmatpush1.bf16.msra.mxu0 0
        %2300 = vmatprep.subr.bf16.mxu0 0
        %2301 = vmatpush1.bf16.msra.mxu0 0
        %2302 = vmatprep.subr.bf16.mxu0 0
        %2303 = vmatpush1.bf16.msra.mxu0 0
        %2304 = vmatprep.subr.bf16.mxu0 0
        %2305 = vmatpush1.bf16.msra.mxu0 0
        %2306 = vmatprep.subr.bf16.mxu0 0
        %2307 = vmatpush1.bf16.msra.mxu0 0
        %2308 = vmatprep.subr.bf16.mxu0 0
        %2309 = vmatpush1.bf16.msra.mxu0 0
        %2310 = vmatprep.mubr.bf16.mxu0 0
        %2311 = vmatmul.mubr.bf16.gmra.mrb[0].mxu0 %v2267
        %v2312 = vpop.f32.mrb[0].mxu0
        %v2313 = vadd.f32 0.0, %v2312
        %v2314 = vpop.f32.mrb[0].mxu0
        %v2315 = vadd.f32 0.0, %v2314
        %v2316 = vpop.f32.mrb[0].mxu0
        %v2317 = vadd.f32 0.0, %v2316
        %v2318 = vpop.f32.mrb[0].mxu0
        %v2319 = vadd.f32 0.0, %v2318
        %2320 = vmatprep.mubr.bf16.mxu0 0
        %2321 = vmatmul.mubr.bf16.gmra.mrb[0].mxu0 %v2270
        %v2322 = vpop.f32.mrb[0].mxu0
        %v2323 = vadd.f32 0.0, %v2322
        %v2324 = vpop.f32.mrb[0].mxu0
        %v2325 = vadd.f32 0.0, %v2324
        %v2326 = vpop.f32.mrb[0].mxu0
        %v2327 = vadd.f32 0.0, %v2326
        %v2328 = vpop.f32.mrb[0].mxu0
        %v2329 = vadd.f32 0.0, %v2328
        %2330 = vmatprep.mubr.bf16.mxu0 0
        %2331 = vmatmul.mubr.bf16.gmra.mrb[0].mxu0 %v2273
        %v2332 = vpop.f32.mrb[0].mxu0
        %v2333 = vadd.f32 0.0, %v2332
        %v2334 = vpop.f32.mrb[0].mxu0
        %v2335 = vadd.f32 0.0, %v2334
        %v2336 = vpop.f32.mrb[0].mxu0
        %v2337 = vadd.f32 0.0, %v2336
        %v2338 = vpop.f32.mrb[0].mxu0
        %v2339 = vadd.f32 0.0, %v2338
        %2340 = vmatprep.mubr.bf16.mxu0 0
        %2341 = vmatmul.mubr.bf16.gmra.mrb[0].mxu0 %v2276
        %v2342 = vpop.f32.mrb[0].mxu0
        %v2343 = vadd.f32 0.0, %v2342
        %v2344 = vpop.f32.mrb[0].mxu0
        %v2345 = vadd.f32 0.0, %v2344
        %v2346 = vpop.f32.mrb[0].mxu0
        %v2347 = vadd.f32 0.0, %v2346
        %v2348 = vpop.f32.mrb[0].mxu0
        %v2349 = vadd.f32 0.0, %v2348
        %2350 = vdwg.mxu0
        %v2351 = vpack.c.bf16 %v2232, %v2228
        %v2352 = vpack.c.bf16 %v2234, %v2230
        %v2353 = vpack.c.bf16 %v2242, %v2238
        %v2354 = vpack.c.bf16 %v2244, %v2240
        %v2355 = vpack.c.bf16 %v2252, %v2248
        %v2356 = vpack.c.bf16 %v2254, %v2250
        %v2357 = vpack.c.bf16 %v2262, %v2258
        %v2358 = vpack.c.bf16 %v2264, %v2260
        %v2359 = vpack.c.bf16 %v2317, %v2313
        %v2360 = vpack.c.bf16 %v2319, %v2315
        %v2361 = vpack.c.bf16 %v2327, %v2323
        %v2362 = vpack.c.bf16 %v2329, %v2325
        %v2363 = vpack.c.bf16 %v2337, %v2333
        %v2364 = vpack.c.bf16 %v2339, %v2335
        %v2365 = vpack.c.bf16 %v2347, %v2343
        %v2366 = vpack.c.bf16 %v2349, %v2345
        %v2367 = vld [vmem:[#allocation7] sm:$0xff]
        %v2368 = vld [vmem:[#allocation7 + $0x8] sm:$0xff]
        %v2369 = vld [vmem:[#allocation7 + $0x10] sm:$0xff]
        %v2370 = vld [vmem:[#allocation7 + $0x18] sm:$0xff]
        %v2371 = vld [vmem:[#allocation7 + $0x20] sm:$0xff]
        %v2372 = vld [vmem:[#allocation7 + $0x28] sm:$0xff]
        %v2373 = vld [vmem:[#allocation7 + $0x30] sm:$0xff]
        %v2374 = vld [vmem:[#allocation7 + $0x38] sm:$0xff]
        %v2375 = vld [vmem:[#allocation7 + $0x40] sm:$0xff]
        %v2376 = vld [vmem:[#allocation7 + $0x48] sm:$0xff]
        %v2377 = vld [vmem:[#allocation7 + $0x50] sm:$0xff]
        %v2378 = vld [vmem:[#allocation7 + $0x58] sm:$0xff]
        %v2379 = vld [vmem:[#allocation7 + $0x60] sm:$0xff]
        %v2380 = vld [vmem:[#allocation7 + $0x68] sm:$0xff]
        %v2381 = vld [vmem:[#allocation7 + $0x70] sm:$0xff]
        %v2382 = vld [vmem:[#allocation7 + $0x78] sm:$0xff]
        %v2383 = vld [vmem:[#allocation7 + $0x80] sm:$0xff]
        %v2384 = vld [vmem:[#allocation7 + $0x88] sm:$0xff]
        %v2385 = vld [vmem:[#allocation7 + $0x90] sm:$0xff]
        %v2386 = vld [vmem:[#allocation7 + $0x98] sm:$0xff]
        %v2387 = vld [vmem:[#allocation7 + $0xa0] sm:$0xff]
        %v2388 = vld [vmem:[#allocation7 + $0xa8] sm:$0xff]
        %v2389 = vld [vmem:[#allocation7 + $0xb0] sm:$0xff]
        %v2390 = vld [vmem:[#allocation7 + $0xb8] sm:$0xff]
        %v2391 = vld [vmem:[#allocation7 + $0xc0] sm:$0xff]
        %v2392 = vld [vmem:[#allocation7 + $0xc8] sm:$0xff]
        %v2393 = vld [vmem:[#allocation7 + $0xd0] sm:$0xff]
        %v2394 = vld [vmem:[#allocation7 + $0xd8] sm:$0xff]
        %v2395 = vld [vmem:[#allocation7 + $0xe0] sm:$0xff]
        %v2396 = vld [vmem:[#allocation7 + $0xe8] sm:$0xff]
        %v2397 = vld [vmem:[#allocation7 + $0xf0] sm:$0xff]
        %v2398 = vld [vmem:[#allocation7 + $0xf8] sm:$0xff]
        %v2399 = vld [vmem:[%s5] sm:$0x3]
        %v2401 = vlaneseq
        %v2402 = vshrl.u32 %v2401, 7
        %v2403 = vsub.s32 0, %v2402
        %v2404 = vrot.slane %v2399, %v2403
        %v2405 = vlaneseq
        %v2406 = vshrl.u32 %v2405, 7
        %v2407 = vsub.s32 1, %v2406
        %v2408 = vrot.slane %v2399, %v2407
        %v2443 = vunpack.c.l.b16 %v2367
        %v2444 = vunpack.c.h.b16 %v2367
        %v2445 = vunpack.c.l.b16 %v2368
        %v2446 = vunpack.c.h.b16 %v2368
        %v2447 = vunpack.c.l.b16 %v2369
        %v2448 = vunpack.c.h.b16 %v2369
        %v2449 = vunpack.c.l.b16 %v2370
        %v2450 = vunpack.c.h.b16 %v2370
        %v2451 = vunpack.c.l.b16 %v2371
        %v2452 = vunpack.c.h.b16 %v2371
        %v2453 = vunpack.c.l.b16 %v2372
        %v2454 = vunpack.c.h.b16 %v2372
        %v2455 = vunpack.c.l.b16 %v2373
        %v2456 = vunpack.c.h.b16 %v2373
        %v2457 = vunpack.c.l.b16 %v2374
        %v2458 = vunpack.c.h.b16 %v2374
        %v2459 = vunpack.c.l.b16 %v2375
        %v2460 = vunpack.c.h.b16 %v2375
        %v2461 = vunpack.c.l.b16 %v2376
        %v2462 = vunpack.c.h.b16 %v2376
        %v2463 = vunpack.c.l.b16 %v2377
        %v2464 = vunpack.c.h.b16 %v2377
        %v2465 = vunpack.c.l.b16 %v2378
        %v2466 = vunpack.c.h.b16 %v2378
        %v2467 = vunpack.c.l.b16 %v2379
        %v2468 = vunpack.c.h.b16 %v2379
        %v2469 = vunpack.c.l.b16 %v2380
        %v2470 = vunpack.c.h.b16 %v2380
        %v2471 = vunpack.c.l.b16 %v2381
        %v2472 = vunpack.c.h.b16 %v2381
        %v2473 = vunpack.c.l.b16 %v2382
        %v2474 = vunpack.c.h.b16 %v2382
        %v2475 = vunpack.c.l.b16 %v2383
        %v2476 = vunpack.c.h.b16 %v2383
        %v2477 = vunpack.c.l.b16 %v2384
        %v2478 = vunpack.c.h.b16 %v2384
        %v2479 = vunpack.c.l.b16 %v2385
        %v2480 = vunpack.c.h.b16 %v2385
        %v2481 = vunpack.c.l.b16 %v2386
        %v2482 = vunpack.c.h.b16 %v2386
        %v2483 = vunpack.c.l.b16 %v2387
        %v2484 = vunpack.c.h.b16 %v2387
        %v2485 = vunpack.c.l.b16 %v2388
        %v2486 = vunpack.c.h.b16 %v2388
        %v2487 = vunpack.c.l.b16 %v2389
        %v2488 = vunpack.c.h.b16 %v2389
        %v2489 = vunpack.c.l.b16 %v2390
        %v2490 = vunpack.c.h.b16 %v2390
        %v2491 = vunpack.c.l.b16 %v2391
        %v2492 = vunpack.c.h.b16 %v2391
        %v2493 = vunpack.c.l.b16 %v2392
        %v2494 = vunpack.c.h.b16 %v2392
        %v2495 = vunpack.c.l.b16 %v2393
        %v2496 = vunpack.c.h.b16 %v2393
        %v2497 = vunpack.c.l.b16 %v2394
        %v2498 = vunpack.c.h.b16 %v2394
        %v2499 = vunpack.c.l.b16 %v2395
        %v2500 = vunpack.c.h.b16 %v2395
        %v2501 = vunpack.c.l.b16 %v2396
        %v2502 = vunpack.c.h.b16 %v2396
        %v2503 = vunpack.c.l.b16 %v2397
        %v2504 = vunpack.c.h.b16 %v2397
        %v2505 = vunpack.c.l.b16 %v2398
        %v2506 = vunpack.c.h.b16 %v2398
        %v2507 = vpack.c.b16 %v2445, %v2443
        %v2508 = vpack.c.b16 %v2446, %v2444
        %v2509 = vpack.c.b16 %v2449, %v2447
        %v2510 = vpack.c.b16 %v2450, %v2448
        %v2511 = vpack.c.b16 %v2453, %v2451
        %v2512 = vpack.c.b16 %v2454, %v2452
        %v2513 = vpack.c.b16 %v2457, %v2455
        %v2514 = vpack.c.b16 %v2458, %v2456
        %v2515 = vpack.c.b16 %v2461, %v2459
        %v2516 = vpack.c.b16 %v2462, %v2460
        %v2517 = vpack.c.b16 %v2465, %v2463
        %v2518 = vpack.c.b16 %v2466, %v2464
        %v2519 = vpack.c.b16 %v2469, %v2467
        %v2520 = vpack.c.b16 %v2470, %v2468
        %v2521 = vpack.c.b16 %v2473, %v2471
        %v2522 = vpack.c.b16 %v2474, %v2472
        %v2523 = vpack.c.b16 %v2477, %v2475
        %v2524 = vpack.c.b16 %v2478, %v2476
        %v2525 = vpack.c.b16 %v2481, %v2479
        %v2526 = vpack.c.b16 %v2482, %v2480
        %v2527 = vpack.c.b16 %v2485, %v2483
        %v2528 = vpack.c.b16 %v2486, %v2484
        %v2529 = vpack.c.b16 %v2489, %v2487
        %v2530 = vpack.c.b16 %v2490, %v2488
        %v2531 = vpack.c.b16 %v2493, %v2491
        %v2532 = vpack.c.b16 %v2494, %v2492
        %v2533 = vpack.c.b16 %v2497, %v2495
        %v2534 = vpack.c.b16 %v2498, %v2496
        %v2535 = vpack.c.b16 %v2501, %v2499
        %v2536 = vpack.c.b16 %v2502, %v2500
        %v2537 = vpack.c.b16 %v2505, %v2503
        %v2538 = vpack.c.b16 %v2506, %v2504
        %2571 = vmatprep.subr.bf16.mxu0 %v2508
        %2572 = vmatpush1.bf16.msra.mxu0 %v2507
        %2573 = vmatprep.subr.bf16.mxu0 %v2510
        %2574 = vmatpush1.bf16.msra.mxu0 %v2509
        %2575 = vmatprep.subr.bf16.mxu0 %v2512
        %2576 = vmatpush1.bf16.msra.mxu0 %v2511
        %2577 = vmatprep.subr.bf16.mxu0 %v2514
        %2578 = vmatpush1.bf16.msra.mxu0 %v2513
        %2579 = vmatprep.subr.bf16.mxu0 %v2516
        %2580 = vmatpush1.bf16.msra.mxu0 %v2515
        %2581 = vmatprep.subr.bf16.mxu0 %v2518
        %2582 = vmatpush1.bf16.msra.mxu0 %v2517
        %2583 = vmatprep.subr.bf16.mxu0 %v2520
        %2584 = vmatpush1.bf16.msra.mxu0 %v2519
        %2585 = vmatprep.subr.bf16.mxu0 %v2522
        %2586 = vmatpush1.bf16.msra.mxu0 %v2521
        %2587 = vmatprep.subr.bf16.mxu0 %v2524
        %2588 = vmatpush1.bf16.msra.mxu0 %v2523
        %2589 = vmatprep.subr.bf16.mxu0 %v2526
        %2590 = vmatpush1.bf16.msra.mxu0 %v2525
        %2591 = vmatprep.subr.bf16.mxu0 %v2528
        %2592 = vmatpush1.bf16.msra.mxu0 %v2527
        %2593 = vmatprep.subr.bf16.mxu0 %v2530
        %2594 = vmatpush1.bf16.msra.mxu0 %v2529
        %2595 = vmatprep.subr.bf16.mxu0 %v2532
        %2596 = vmatpush1.bf16.msra.mxu0 %v2531
        %2597 = vmatprep.subr.bf16.mxu0 %v2534
        %2598 = vmatpush1.bf16.msra.mxu0 %v2533
        %2599 = vmatprep.subr.bf16.mxu0 %v2536
        %2600 = vmatpush1.bf16.msra.mxu0 %v2535
        %2601 = vmatprep.subr.bf16.mxu0 %v2538
        %2602 = vmatpush1.bf16.msra.mxu0 %v2537
        %2603 = vmatprep.mubr.bf16.mxu0 %v2352
        %2604 = vmatmul.mubr.bf16.gmra.mrb[0].mxu0 %v2351
        %v2605 = vpop.f32.mrb[0].mxu0
        %v2606 = vadd.f32 %v2404, %v2605
        %v2607 = vpop.f32.mrb[0].mxu0
        %v2608 = vadd.f32 %v2408, %v2607
        %v2609 = vpop.f32.mrb[0].mxu0
        %v2610 = vadd.f32 %v2404, %v2609
        %v2611 = vpop.f32.mrb[0].mxu0
        %v2612 = vadd.f32 %v2408, %v2611
        %2613 = vmatprep.mubr.bf16.mxu0 %v2354
        %2614 = vmatmul.mubr.bf16.gmra.mrb[0].mxu0 %v2353
        %v2615 = vpop.f32.mrb[0].mxu0
        %v2616 = vadd.f32 %v2404, %v2615
        %v2617 = vpop.f32.mrb[0].mxu0
        %v2618 = vadd.f32 %v2408, %v2617
        %v2619 = vpop.f32.mrb[0].mxu0
        %v2620 = vadd.f32 %v2404, %v2619
        %v2621 = vpop.f32.mrb[0].mxu0
        %v2622 = vadd.f32 %v2408, %v2621
        %2623 = vmatprep.mubr.bf16.mxu0 %v2356
        %2624 = vmatmul.mubr.bf16.gmra.mrb[0].mxu0 %v2355
        %v2625 = vpop.f32.mrb[0].mxu0
        %v2626 = vadd.f32 %v2404, %v2625
        %v2627 = vpop.f32.mrb[0].mxu0
        %v2628 = vadd.f32 %v2408, %v2627
        %v2629 = vpop.f32.mrb[0].mxu0
        %v2630 = vadd.f32 %v2404, %v2629
        %v2631 = vpop.f32.mrb[0].mxu0
        %v2632 = vadd.f32 %v2408, %v2631
        %2633 = vmatprep.mubr.bf16.mxu0 %v2358
        %2634 = vmatmul.mubr.bf16.gmra.mrb[0].mxu0 %v2357
        %v2635 = vpop.f32.mrb[0].mxu0
        %v2636 = vadd.f32 %v2404, %v2635
        %v2637 = vpop.f32.mrb[0].mxu0
        %v2638 = vadd.f32 %v2408, %v2637
        %v2639 = vpop.f32.mrb[0].mxu0
        %v2640 = vadd.f32 %v2404, %v2639
        %v2641 = vpop.f32.mrb[0].mxu0
        %v2642 = vadd.f32 %v2408, %v2641
        %2643 = vmatprep.mubr.bf16.mxu0 %v2360
        %2644 = vmatmul.mubr.bf16.gmra.mrb[0].mxu0 %v2359
        %v2645 = vpop.f32.mrb[0].mxu0
        %v2646 = vadd.f32 %v2404, %v2645
        %v2647 = vpop.f32.mrb[0].mxu0
        %v2648 = vadd.f32 %v2408, %v2647
        %v2649 = vpop.f32.mrb[0].mxu0
        %v2650 = vadd.f32 %v2404, %v2649
        %v2651 = vpop.f32.mrb[0].mxu0
        %v2652 = vadd.f32 %v2408, %v2651
        %2653 = vmatprep.mubr.bf16.mxu0 %v2362
        %2654 = vmatmul.mubr.bf16.gmra.mrb[0].mxu0 %v2361
        %v2655 = vpop.f32.mrb[0].mxu0
        %v2656 = vadd.f32 %v2404, %v2655
        %v2657 = vpop.f32.mrb[0].mxu0
        %v2658 = vadd.f32 %v2408, %v2657
        %v2659 = vpop.f32.mrb[0].mxu0
        %v2660 = vadd.f32 %v2404, %v2659
        %v2661 = vpop.f32.mrb[0].mxu0
        %v2662 = vadd.f32 %v2408, %v2661
        %2663 = vmatprep.mubr.bf16.mxu0 %v2364
        %2664 = vmatmul.mubr.bf16.gmra.mrb[0].mxu0 %v2363
        %v2665 = vpop.f32.mrb[0].mxu0
        %v2666 = vadd.f32 %v2404, %v2665
        %v2667 = vpop.f32.mrb[0].mxu0
        %v2668 = vadd.f32 %v2408, %v2667
        %v2669 = vpop.f32.mrb[0].mxu0
        %v2670 = vadd.f32 %v2404, %v2669
        %v2671 = vpop.f32.mrb[0].mxu0
        %v2672 = vadd.f32 %v2408, %v2671
        %2673 = vmatprep.mubr.bf16.mxu0 %v2366
        %2674 = vmatmul.mubr.bf16.gmra.mrb[0].mxu0 %v2365
        %v2675 = vpop.f32.mrb[0].mxu0
        %v2676 = vadd.f32 %v2404, %v2675
        %v2677 = vpop.f32.mrb[0].mxu0
        %v2678 = vadd.f32 %v2408, %v2677
        %v2679 = vpop.f32.mrb[0].mxu0
        %v2680 = vadd.f32 %v2404, %v2679
        %v2681 = vpop.f32.mrb[0].mxu0
        %v2682 = vadd.f32 %v2408, %v2681
        %2683 = vdwg.mxu0
        %v2684 = vadd.f32 %v494, %v2606
        %v2685 = vadd.f32 %v495, %v2608
        %v2686 = vadd.f32 %v496, %v2610
        %v2687 = vadd.f32 %v497, %v2612
        %v2688 = vadd.f32 %v498, %v2616
        %v2689 = vadd.f32 %v499, %v2618
        %v2690 = vadd.f32 %v500, %v2620
        %v2691 = vadd.f32 %v501, %v2622
        %v2692 = vadd.f32 %v502, %v2626
        %v2693 = vadd.f32 %v503, %v2628
        %v2694 = vadd.f32 %v504, %v2630
        %v2695 = vadd.f32 %v505, %v2632
        %v2696 = vadd.f32 %v506, %v2636
        %v2697 = vadd.f32 %v507, %v2638
        %v2698 = vadd.f32 %v508, %v2640
        %v2699 = vadd.f32 %v509, %v2642
        %v2700 = vadd.f32 %v510, %v2646
        %v2701 = vadd.f32 %v511, %v2648
        %v2702 = vadd.f32 %v512, %v2650
        %v2703 = vadd.f32 %v513, %v2652
        %v2704 = vadd.f32 %v514, %v2656
        %v2705 = vadd.f32 %v515, %v2658
        %v2706 = vadd.f32 %v516, %v2660
        %v2707 = vadd.f32 %v517, %v2662
        %v2708 = vadd.f32 %v518, %v2666
        %v2709 = vadd.f32 %v519, %v2668
        %v2710 = vadd.f32 %v520, %v2670
        %v2711 = vadd.f32 %v521, %v2672
        %v2712 = vadd.f32 %v522, %v2676
        %v2713 = vadd.f32 %v523, %v2678
        %v2714 = vadd.f32 %v524, %v2680
        %v2715 = vadd.f32 %v525, %v2682
        %v2716 = vld [vmem:[%s6] sm:$0x3]
        %v2717 = vld [vmem:[%s7] sm:$0x3]
        %v2718 = vadd.f32 %v2684, %v2685
        %2719 = vadd.xlane.f32.xlu0 %v2718
        %v2720 = vpop.xlane.xlu0 %2719
        %v2721 = vadd.f32 %v2686, %v2687
        %2722 = vadd.xlane.f32.xlu0 %v2721
        %v2723 = vpop.xlane.xlu0 %2722
        %v2724 = vadd.f32 %v2688, %v2689
        %2725 = vadd.xlane.f32.xlu0 %v2724
        %v2726 = vpop.xlane.xlu0 %2725
        %v2727 = vadd.f32 %v2690, %v2691
        %2728 = vadd.xlane.f32.xlu0 %v2727
        %v2729 = vpop.xlane.xlu0 %2728
        %v2730 = vadd.f32 %v2692, %v2693
        %2731 = vadd.xlane.f32.xlu0 %v2730
        %v2732 = vpop.xlane.xlu0 %2731
        %v2733 = vadd.f32 %v2694, %v2695
        %2734 = vadd.xlane.f32.xlu0 %v2733
        %v2735 = vpop.xlane.xlu0 %2734
        %v2736 = vadd.f32 %v2696, %v2697
        %2737 = vadd.xlane.f32.xlu0 %v2736
        %v2738 = vpop.xlane.xlu0 %2737
        %v2739 = vadd.f32 %v2698, %v2699
        %2740 = vadd.xlane.f32.xlu0 %v2739
        %v2741 = vpop.xlane.xlu0 %2740
        %v2742 = vadd.f32 %v2700, %v2701
        %2743 = vadd.xlane.f32.xlu0 %v2742
        %v2744 = vpop.xlane.xlu0 %2743
        %v2745 = vadd.f32 %v2702, %v2703
        %2746 = vadd.xlane.f32.xlu0 %v2745
        %v2747 = vpop.xlane.xlu0 %2746
        %v2748 = vadd.f32 %v2704, %v2705
        %2749 = vadd.xlane.f32.xlu0 %v2748
        %v2750 = vpop.xlane.xlu0 %2749
        %v2751 = vadd.f32 %v2706, %v2707
        %2752 = vadd.xlane.f32.xlu0 %v2751
        %v2753 = vpop.xlane.xlu0 %2752
        %v2754 = vadd.f32 %v2708, %v2709
        %2755 = vadd.xlane.f32.xlu0 %v2754
        %v2756 = vpop.xlane.xlu0 %2755
        %v2757 = vadd.f32 %v2710, %v2711
        %2758 = vadd.xlane.f32.xlu0 %v2757
        %v2759 = vpop.xlane.xlu0 %2758
        %v2760 = vadd.f32 %v2712, %v2713
        %2761 = vadd.xlane.f32.xlu0 %v2760
        %v2762 = vpop.xlane.xlu0 %2761
        %v2763 = vadd.f32 %v2714, %v2715
        %2764 = vadd.xlane.f32.xlu0 %v2763
        %v2765 = vpop.xlane.xlu0 %2764
        %v2766 = vmul.f32 %v2720, %v576
        %v2767 = vmul.f32 %v2723, %v576
        %v2768 = vmul.f32 %v2726, %v576
        %v2769 = vmul.f32 %v2729, %v576
        %v2770 = vmul.f32 %v2732, %v576
        %v2771 = vmul.f32 %v2735, %v576
        %v2772 = vmul.f32 %v2738, %v576
        %v2773 = vmul.f32 %v2741, %v576
        %v2774 = vmul.f32 %v2744, %v576
        %v2775 = vmul.f32 %v2747, %v576
        %v2776 = vmul.f32 %v2750, %v576
        %v2777 = vmul.f32 %v2753, %v576
        %v2778 = vmul.f32 %v2756, %v576
        %v2779 = vmul.f32 %v2759, %v576
        %v2780 = vmul.f32 %v2762, %v576
        %v2781 = vmul.f32 %v2765, %v576
        %v2782 = vsub.f32 %v2684, %v2766
        %v2783 = vsub.f32 %v2685, %v2766
        %v2784 = vsub.f32 %v2686, %v2767
        %v2785 = vsub.f32 %v2687, %v2767
        %v2786 = vsub.f32 %v2688, %v2768
        %v2787 = vsub.f32 %v2689, %v2768
        %v2788 = vsub.f32 %v2690, %v2769
        %v2789 = vsub.f32 %v2691, %v2769
        %v2790 = vsub.f32 %v2692, %v2770
        %v2791 = vsub.f32 %v2693, %v2770
        %v2792 = vsub.f32 %v2694, %v2771
        %v2793 = vsub.f32 %v2695, %v2771
        %v2794 = vsub.f32 %v2696, %v2772
        %v2795 = vsub.f32 %v2697, %v2772
        %v2796 = vsub.f32 %v2698, %v2773
        %v2797 = vsub.f32 %v2699, %v2773
        %v2798 = vsub.f32 %v2700, %v2774
        %v2799 = vsub.f32 %v2701, %v2774
        %v2800 = vsub.f32 %v2702, %v2775
        %v2801 = vsub.f32 %v2703, %v2775
        %v2802 = vsub.f32 %v2704, %v2776
        %v2803 = vsub.f32 %v2705, %v2776
        %v2804 = vsub.f32 %v2706, %v2777
        %v2805 = vsub.f32 %v2707, %v2777
        %v2806 = vsub.f32 %v2708, %v2778
        %v2807 = vsub.f32 %v2709, %v2778
        %v2808 = vsub.f32 %v2710, %v2779
        %v2809 = vsub.f32 %v2711, %v2779
        %v2810 = vsub.f32 %v2712, %v2780
        %v2811 = vsub.f32 %v2713, %v2780
        %v2812 = vsub.f32 %v2714, %v2781
        %v2813 = vsub.f32 %v2715, %v2781
        %v2814 = vmul.f32 %v2782, %v2782
        %v2815 = vmul.f32 %v2783, %v2783
        %v2816 = vmul.f32 %v2784, %v2784
        %v2817 = vmul.f32 %v2785, %v2785
        %v2818 = vmul.f32 %v2786, %v2786
        %v2819 = vmul.f32 %v2787, %v2787
        %v2820 = vmul.f32 %v2788, %v2788
        %v2821 = vmul.f32 %v2789, %v2789
        %v2822 = vmul.f32 %v2790, %v2790
        %v2823 = vmul.f32 %v2791, %v2791
        %v2824 = vmul.f32 %v2792, %v2792
        %v2825 = vmul.f32 %v2793, %v2793
        %v2826 = vmul.f32 %v2794, %v2794
        %v2827 = vmul.f32 %v2795, %v2795
        %v2828 = vmul.f32 %v2796, %v2796
        %v2829 = vmul.f32 %v2797, %v2797
        %v2830 = vmul.f32 %v2798, %v2798
        %v2831 = vmul.f32 %v2799, %v2799
        %v2832 = vmul.f32 %v2800, %v2800
        %v2833 = vmul.f32 %v2801, %v2801
        %v2834 = vmul.f32 %v2802, %v2802
        %v2835 = vmul.f32 %v2803, %v2803
        %v2836 = vmul.f32 %v2804, %v2804
        %v2837 = vmul.f32 %v2805, %v2805
        %v2838 = vmul.f32 %v2806, %v2806
        %v2839 = vmul.f32 %v2807, %v2807
        %v2840 = vmul.f32 %v2808, %v2808
        %v2841 = vmul.f32 %v2809, %v2809
        %v2842 = vmul.f32 %v2810, %v2810
        %v2843 = vmul.f32 %v2811, %v2811
        %v2844 = vmul.f32 %v2812, %v2812
        %v2845 = vmul.f32 %v2813, %v2813
        %v2846 = vadd.f32 %v2814, %v2815
        %2847 = vadd.xlane.f32.xlu0 %v2846
        %v2848 = vpop.xlane.xlu0 %2847
        %v2849 = vadd.f32 %v2816, %v2817
        %2850 = vadd.xlane.f32.xlu0 %v2849
        %v2851 = vpop.xlane.xlu0 %2850
        %v2852 = vadd.f32 %v2818, %v2819
        %2853 = vadd.xlane.f32.xlu0 %v2852
        %v2854 = vpop.xlane.xlu0 %2853
        %v2855 = vadd.f32 %v2820, %v2821
        %2856 = vadd.xlane.f32.xlu0 %v2855
        %v2857 = vpop.xlane.xlu0 %2856
        %v2858 = vadd.f32 %v2822, %v2823
        %2859 = vadd.xlane.f32.xlu0 %v2858
        %v2860 = vpop.xlane.xlu0 %2859
        %v2861 = vadd.f32 %v2824, %v2825
        %2862 = vadd.xlane.f32.xlu0 %v2861
        %v2863 = vpop.xlane.xlu0 %2862
        %v2864 = vadd.f32 %v2826, %v2827
        %2865 = vadd.xlane.f32.xlu0 %v2864
        %v2866 = vpop.xlane.xlu0 %2865
        %v2867 = vadd.f32 %v2828, %v2829
        %2868 = vadd.xlane.f32.xlu0 %v2867
        %v2869 = vpop.xlane.xlu0 %2868
        %v2870 = vadd.f32 %v2830, %v2831
        %2871 = vadd.xlane.f32.xlu0 %v2870
        %v2872 = vpop.xlane.xlu0 %2871
        %v2873 = vadd.f32 %v2832, %v2833
        %2874 = vadd.xlane.f32.xlu0 %v2873
        %v2875 = vpop.xlane.xlu0 %2874
        %v2876 = vadd.f32 %v2834, %v2835
        %2877 = vadd.xlane.f32.xlu0 %v2876
        %v2878 = vpop.xlane.xlu0 %2877
        %v2879 = vadd.f32 %v2836, %v2837
        %2880 = vadd.xlane.f32.xlu0 %v2879
        %v2881 = vpop.xlane.xlu0 %2880
        %v2882 = vadd.f32 %v2838, %v2839
        %2883 = vadd.xlane.f32.xlu0 %v2882
        %v2884 = vpop.xlane.xlu0 %2883
        %v2885 = vadd.f32 %v2840, %v2841
        %2886 = vadd.xlane.f32.xlu0 %v2885
        %v2887 = vpop.xlane.xlu0 %2886
        %v2888 = vadd.f32 %v2842, %v2843
        %2889 = vadd.xlane.f32.xlu0 %v2888
        %v2890 = vpop.xlane.xlu0 %2889
        %v2891 = vadd.f32 %v2844, %v2845
        %2892 = vadd.xlane.f32.xlu0 %v2891
        %v2893 = vpop.xlane.xlu0 %2892
        %v2894 = vmul.f32 %v2848, %v576
        %v2895 = vmul.f32 %v2851, %v576
        %v2896 = vmul.f32 %v2854, %v576
        %v2897 = vmul.f32 %v2857, %v576
        %v2898 = vmul.f32 %v2860, %v576
        %v2899 = vmul.f32 %v2863, %v576
        %v2900 = vmul.f32 %v2866, %v576
        %v2901 = vmul.f32 %v2869, %v576
        %v2902 = vmul.f32 %v2872, %v576
        %v2903 = vmul.f32 %v2875, %v576
        %v2904 = vmul.f32 %v2878, %v576
        %v2905 = vmul.f32 %v2881, %v576
        %v2906 = vmul.f32 %v2884, %v576
        %v2907 = vmul.f32 %v2887, %v576
        %v2908 = vmul.f32 %v2890, %v576
        %v2909 = vmul.f32 %v2893, %v576
        %v2910 = vadd.f32 %v2894, 1e-05
        %v2911 = vadd.f32 %v2895, 1e-05
        %v2912 = vadd.f32 %v2896, 1e-05
        %v2913 = vadd.f32 %v2897, 1e-05
        %v2914 = vadd.f32 %v2898, 1e-05
        %v2915 = vadd.f32 %v2899, 1e-05
        %v2916 = vadd.f32 %v2900, 1e-05
        %v2917 = vadd.f32 %v2901, 1e-05
        %v2918 = vadd.f32 %v2902, 1e-05
        %v2919 = vadd.f32 %v2903, 1e-05
        %v2920 = vadd.f32 %v2904, 1e-05
        %v2921 = vadd.f32 %v2905, 1e-05
        %v2922 = vadd.f32 %v2906, 1e-05
        %v2923 = vadd.f32 %v2907, 1e-05
        %v2924 = vadd.f32 %v2908, 1e-05
        %v2925 = vadd.f32 %v2909, 1e-05
        %v2926 = vrsqrt.pop %v2910
        %v2927 = vrsqrt.pop %v2911
        %v2928 = vrsqrt.pop %v2912
        %v2929 = vrsqrt.pop %v2913
        %v2930 = vrsqrt.pop %v2914
        %v2931 = vrsqrt.pop %v2915
        %v2932 = vrsqrt.pop %v2916
        %v2933 = vrsqrt.pop %v2917
        %v2934 = vrsqrt.pop %v2918
        %v2935 = vrsqrt.pop %v2919
        %v2936 = vrsqrt.pop %v2920
        %v2937 = vrsqrt.pop %v2921
        %v2938 = vrsqrt.pop %v2922
        %v2939 = vrsqrt.pop %v2923
        %v2940 = vrsqrt.pop %v2924
        %v2941 = vrsqrt.pop %v2925
        %v2942 = vmul.f32 %v2782, %v2926
        %v2943 = vmul.f32 %v2783, %v2926
        %v2944 = vmul.f32 %v2784, %v2927
        %v2945 = vmul.f32 %v2785, %v2927
        %v2946 = vmul.f32 %v2786, %v2928
        %v2947 = vmul.f32 %v2787, %v2928
        %v2948 = vmul.f32 %v2788, %v2929
        %v2949 = vmul.f32 %v2789, %v2929
        %v2950 = vmul.f32 %v2790, %v2930
        %v2951 = vmul.f32 %v2791, %v2930
        %v2952 = vmul.f32 %v2792, %v2931
        %v2953 = vmul.f32 %v2793, %v2931
        %v2954 = vmul.f32 %v2794, %v2932
        %v2955 = vmul.f32 %v2795, %v2932
        %v2956 = vmul.f32 %v2796, %v2933
        %v2957 = vmul.f32 %v2797, %v2933
        %v2958 = vmul.f32 %v2798, %v2934
        %v2959 = vmul.f32 %v2799, %v2934
        %v2960 = vmul.f32 %v2800, %v2935
        %v2961 = vmul.f32 %v2801, %v2935
        %v2962 = vmul.f32 %v2802, %v2936
        %v2963 = vmul.f32 %v2803, %v2936
        %v2964 = vmul.f32 %v2804, %v2937
        %v2965 = vmul.f32 %v2805, %v2937
        %v2966 = vmul.f32 %v2806, %v2938
        %v2967 = vmul.f32 %v2807, %v2938
        %v2968 = vmul.f32 %v2808, %v2939
        %v2969 = vmul.f32 %v2809, %v2939
        %v2970 = vmul.f32 %v2810, %v2940
        %v2971 = vmul.f32 %v2811, %v2940
        %v2972 = vmul.f32 %v2812, %v2941
        %v2973 = vmul.f32 %v2813, %v2941
        %v2975 = vlaneseq
        %v2976 = vshrl.u32 %v2975, 7
        %v2977 = vsub.s32 0, %v2976
        %v2978 = vrot.slane %v2716, %v2977
        %v2979 = vlaneseq
        %v2980 = vshrl.u32 %v2979, 7
        %v2981 = vsub.s32 1, %v2980
        %v2982 = vrot.slane %v2716, %v2981
        %v2985 = vmul.f32 %v2942, %v2978
        %v2986 = vmul.f32 %v2943, %v2982
        %v2987 = vmul.f32 %v2944, %v2978
        %v2988 = vmul.f32 %v2945, %v2982
        %v2989 = vmul.f32 %v2946, %v2978
        %v2990 = vmul.f32 %v2947, %v2982
        %v2991 = vmul.f32 %v2948, %v2978
        %v2992 = vmul.f32 %v2949, %v2982
        %v2993 = vmul.f32 %v2950, %v2978
        %v2994 = vmul.f32 %v2951, %v2982
        %v2995 = vmul.f32 %v2952, %v2978
        %v2996 = vmul.f32 %v2953, %v2982
        %v2997 = vmul.f32 %v2954, %v2978
        %v2998 = vmul.f32 %v2955, %v2982
        %v2999 = vmul.f32 %v2956, %v2978
        %v3000 = vmul.f32 %v2957, %v2982
        %v3001 = vmul.f32 %v2958, %v2978
        %v3002 = vmul.f32 %v2959, %v2982
        %v3003 = vmul.f32 %v2960, %v2978
        %v3004 = vmul.f32 %v2961, %v2982
        %v3005 = vmul.f32 %v2962, %v2978
        %v3006 = vmul.f32 %v2963, %v2982
        %v3007 = vmul.f32 %v2964, %v2978
        %v3008 = vmul.f32 %v2965, %v2982
        %v3009 = vmul.f32 %v2966, %v2978
        %v3010 = vmul.f32 %v2967, %v2982
        %v3011 = vmul.f32 %v2968, %v2978
        %v3012 = vmul.f32 %v2969, %v2982
        %v3013 = vmul.f32 %v2970, %v2978
        %v3014 = vmul.f32 %v2971, %v2982
        %v3015 = vmul.f32 %v2972, %v2978
        %v3016 = vmul.f32 %v2973, %v2982
        %v3018 = vlaneseq
        %v3019 = vshrl.u32 %v3018, 7
        %v3020 = vsub.s32 0, %v3019
        %v3021 = vrot.slane %v2717, %v3020
        %v3022 = vlaneseq
        %v3023 = vshrl.u32 %v3022, 7
        %v3024 = vsub.s32 1, %v3023
        %v3025 = vrot.slane %v2717, %v3024
        %v3028 = vadd.f32 %v2985, %v3021
        %v3029 = vadd.f32 %v2986, %v3025
        %v3030 = vadd.f32 %v2987, %v3021
        %v3031 = vadd.f32 %v2988, %v3025
        %v3032 = vadd.f32 %v2989, %v3021
        %v3033 = vadd.f32 %v2990, %v3025
        %v3034 = vadd.f32 %v2991, %v3021
        %v3035 = vadd.f32 %v2992, %v3025
        %v3036 = vadd.f32 %v2993, %v3021
        %v3037 = vadd.f32 %v2994, %v3025
        %v3038 = vadd.f32 %v2995, %v3021
        %v3039 = vadd.f32 %v2996, %v3025
        %v3040 = vadd.f32 %v2997, %v3021
        %v3041 = vadd.f32 %v2998, %v3025
        %v3042 = vadd.f32 %v2999, %v3021
        %v3043 = vadd.f32 %v3000, %v3025
        %v3044 = vadd.f32 %v3001, %v3021
        %v3045 = vadd.f32 %v3002, %v3025
        %v3046 = vadd.f32 %v3003, %v3021
        %v3047 = vadd.f32 %v3004, %v3025
        %v3048 = vadd.f32 %v3005, %v3021
        %v3049 = vadd.f32 %v3006, %v3025
        %v3050 = vadd.f32 %v3007, %v3021
        %v3051 = vadd.f32 %v3008, %v3025
        %v3052 = vadd.f32 %v3009, %v3021
        %v3053 = vadd.f32 %v3010, %v3025
        %v3054 = vadd.f32 %v3011, %v3021
        %v3055 = vadd.f32 %v3012, %v3025
        %v3056 = vadd.f32 %v3013, %v3021
        %v3057 = vadd.f32 %v3014, %v3025
        %v3058 = vadd.f32 %v3015, %v3021
        %v3059 = vadd.f32 %v3016, %v3025
        %v3060 = vpack.c.bf16 %v3030, %v3028
        %v3061 = vpack.c.bf16 %v3031, %v3029
        %v3062 = vpack.c.bf16 %v3034, %v3032
        %v3063 = vpack.c.bf16 %v3035, %v3033
        %v3064 = vpack.c.bf16 %v3038, %v3036
        %v3065 = vpack.c.bf16 %v3039, %v3037
        %v3066 = vpack.c.bf16 %v3042, %v3040
        %v3067 = vpack.c.bf16 %v3043, %v3041
        %v3068 = vpack.c.bf16 %v3046, %v3044
        %v3069 = vpack.c.bf16 %v3047, %v3045
        %v3070 = vpack.c.bf16 %v3050, %v3048
        %v3071 = vpack.c.bf16 %v3051, %v3049
        %v3072 = vpack.c.bf16 %v3054, %v3052
        %v3073 = vpack.c.bf16 %v3055, %v3053
        %v3074 = vpack.c.bf16 %v3058, %v3056
        %v3075 = vpack.c.bf16 %v3059, %v3057
        %v3076 = vld [vmem:[#allocation8] sm:$0xff]
        %v3077 = vld [vmem:[#allocation8 + $0x8] sm:$0xff]
        %v3078 = vld [vmem:[#allocation8 + $0x10] sm:$0xff]
        %v3079 = vld [vmem:[#allocation8 + $0x18] sm:$0xff]
        %v3080 = vld [vmem:[#allocation8 + $0x20] sm:$0xff]
        %v3081 = vld [vmem:[#allocation8 + $0x28] sm:$0xff]
        %v3082 = vld [vmem:[#allocation8 + $0x30] sm:$0xff]
        %v3083 = vld [vmem:[#allocation8 + $0x38] sm:$0xff]
        %v3084 = vld [vmem:[#allocation8 + $0x40] sm:$0xff]
        %v3085 = vld [vmem:[#allocation8 + $0x48] sm:$0xff]
        %v3086 = vld [vmem:[#allocation8 + $0x50] sm:$0xff]
        %v3087 = vld [vmem:[#allocation8 + $0x58] sm:$0xff]
        %v3088 = vld [vmem:[#allocation8 + $0x60] sm:$0xff]
        %v3089 = vld [vmem:[#allocation8 + $0x68] sm:$0xff]
        %v3090 = vld [vmem:[#allocation8 + $0x70] sm:$0xff]
        %v3091 = vld [vmem:[#allocation8 + $0x78] sm:$0xff]
        %v3092 = vld [vmem:[#allocation8 + $0x80] sm:$0xff]
        %v3093 = vld [vmem:[#allocation8 + $0x88] sm:$0xff]
        %v3094 = vld [vmem:[#allocation8 + $0x90] sm:$0xff]
        %v3095 = vld [vmem:[#allocation8 + $0x98] sm:$0xff]
        %v3096 = vld [vmem:[#allocation8 + $0xa0] sm:$0xff]
        %v3097 = vld [vmem:[#allocation8 + $0xa8] sm:$0xff]
        %v3098 = vld [vmem:[#allocation8 + $0xb0] sm:$0xff]
        %v3099 = vld [vmem:[#allocation8 + $0xb8] sm:$0xff]
        %v3100 = vld [vmem:[#allocation8 + $0xc0] sm:$0xff]
        %v3101 = vld [vmem:[#allocation8 + $0xc8] sm:$0xff]
        %v3102 = vld [vmem:[#allocation8 + $0xd0] sm:$0xff]
        %v3103 = vld [vmem:[#allocation8 + $0xd8] sm:$0xff]
        %v3104 = vld [vmem:[#allocation8 + $0xe0] sm:$0xff]
        %v3105 = vld [vmem:[#allocation8 + $0xe8] sm:$0xff]
        %v3106 = vld [vmem:[#allocation8 + $0xf0] sm:$0xff]
        %v3107 = vld [vmem:[#allocation8 + $0xf8] sm:$0xff]
        %v3108 = vld [vmem:[#allocation8 + $0x100] sm:$0xff]
        %v3109 = vld [vmem:[#allocation8 + $0x108] sm:$0xff]
        %v3110 = vld [vmem:[#allocation8 + $0x110] sm:$0xff]
        %v3111 = vld [vmem:[#allocation8 + $0x118] sm:$0xff]
        %v3112 = vld [vmem:[#allocation8 + $0x120] sm:$0xff]
        %v3113 = vld [vmem:[#allocation8 + $0x128] sm:$0xff]
        %v3114 = vld [vmem:[#allocation8 + $0x130] sm:$0xff]
        %v3115 = vld [vmem:[#allocation8 + $0x138] sm:$0xff]
        %v3116 = vld [vmem:[#allocation8 + $0x140] sm:$0xff]
        %v3117 = vld [vmem:[#allocation8 + $0x148] sm:$0xff]
        %v3118 = vld [vmem:[#allocation8 + $0x150] sm:$0xff]
        %v3119 = vld [vmem:[#allocation8 + $0x158] sm:$0xff]
        %v3120 = vld [vmem:[#allocation8 + $0x160] sm:$0xff]
        %v3121 = vld [vmem:[#allocation8 + $0x168] sm:$0xff]
        %v3122 = vld [vmem:[#allocation8 + $0x170] sm:$0xff]
        %v3123 = vld [vmem:[#allocation8 + $0x178] sm:$0xff]
        %v3124 = vld [vmem:[#allocation8 + $0x180] sm:$0xff]
        %v3125 = vld [vmem:[#allocation8 + $0x188] sm:$0xff]
        %v3126 = vld [vmem:[#allocation8 + $0x190] sm:$0xff]
        %v3127 = vld [vmem:[#allocation8 + $0x198] sm:$0xff]
        %v3128 = vld [vmem:[#allocation8 + $0x1a0] sm:$0xff]
        %v3129 = vld [vmem:[#allocation8 + $0x1a8] sm:$0xff]
        %v3130 = vld [vmem:[#allocation8 + $0x1b0] sm:$0xff]
        %v3131 = vld [vmem:[#allocation8 + $0x1b8] sm:$0xff]
        %v3132 = vld [vmem:[#allocation8 + $0x1c0] sm:$0xff]
        %v3133 = vld [vmem:[#allocation8 + $0x1c8] sm:$0xff]
        %v3134 = vld [vmem:[#allocation8 + $0x1d0] sm:$0xff]
        %v3135 = vld [vmem:[#allocation8 + $0x1d8] sm:$0xff]
        %v3136 = vld [vmem:[#allocation8 + $0x1e0] sm:$0xff]
        %v3137 = vld [vmem:[#allocation8 + $0x1e8] sm:$0xff]
        %v3138 = vld [vmem:[#allocation8 + $0x1f0] sm:$0xff]
        %v3139 = vld [vmem:[#allocation8 + $0x1f8] sm:$0xff]
        %v3140 = vld [vmem:[#allocation8 + $0x200] sm:$0xff]
        %v3141 = vld [vmem:[#allocation8 + $0x208] sm:$0xff]
        %v3142 = vld [vmem:[#allocation8 + $0x210] sm:$0xff]
        %v3143 = vld [vmem:[#allocation8 + $0x218] sm:$0xff]
        %v3144 = vld [vmem:[#allocation8 + $0x220] sm:$0xff]
        %v3145 = vld [vmem:[#allocation8 + $0x228] sm:$0xff]
        %v3146 = vld [vmem:[#allocation8 + $0x230] sm:$0xff]
        %v3147 = vld [vmem:[#allocation8 + $0x238] sm:$0xff]
        %v3148 = vld [vmem:[#allocation8 + $0x240] sm:$0xff]
        %v3149 = vld [vmem:[#allocation8 + $0x248] sm:$0xff]
        %v3150 = vld [vmem:[#allocation8 + $0x250] sm:$0xff]
        %v3151 = vld [vmem:[#allocation8 + $0x258] sm:$0xff]
        %v3152 = vld [vmem:[#allocation8 + $0x260] sm:$0xff]
        %v3153 = vld [vmem:[#allocation8 + $0x268] sm:$0xff]
        %v3154 = vld [vmem:[#allocation8 + $0x270] sm:$0xff]
        %v3155 = vld [vmem:[#allocation8 + $0x278] sm:$0xff]
        %v3156 = vld [vmem:[#allocation8 + $0x280] sm:$0xff]
        %v3157 = vld [vmem:[#allocation8 + $0x288] sm:$0xff]
        %v3158 = vld [vmem:[#allocation8 + $0x290] sm:$0xff]
        %v3159 = vld [vmem:[#allocation8 + $0x298] sm:$0xff]
        %v3160 = vld [vmem:[#allocation8 + $0x2a0] sm:$0xff]
        %v3161 = vld [vmem:[#allocation8 + $0x2a8] sm:$0xff]
        %v3162 = vld [vmem:[#allocation8 + $0x2b0] sm:$0xff]
        %v3163 = vld [vmem:[#allocation8 + $0x2b8] sm:$0xff]
        %v3164 = vld [vmem:[#allocation8 + $0x2c0] sm:$0xff]
        %v3165 = vld [vmem:[#allocation8 + $0x2c8] sm:$0xff]
        %v3166 = vld [vmem:[#allocation8 + $0x2d0] sm:$0xff]
        %v3167 = vld [vmem:[#allocation8 + $0x2d8] sm:$0xff]
        %v3168 = vld [vmem:[#allocation8 + $0x2e0] sm:$0xff]
        %v3169 = vld [vmem:[#allocation8 + $0x2e8] sm:$0xff]
        %v3170 = vld [vmem:[#allocation8 + $0x2f0] sm:$0xff]
        %v3171 = vld [vmem:[#allocation8 + $0x2f8] sm:$0xff]
        %v3172 = vld [vmem:[#allocation8 + $0x300] sm:$0xff]
        %v3173 = vld [vmem:[#allocation8 + $0x308] sm:$0xff]
        %v3174 = vld [vmem:[#allocation8 + $0x310] sm:$0xff]
        %v3175 = vld [vmem:[#allocation8 + $0x318] sm:$0xff]
        %v3176 = vld [vmem:[#allocation8 + $0x320] sm:$0xff]
        %v3177 = vld [vmem:[#allocation8 + $0x328] sm:$0xff]
        %v3178 = vld [vmem:[#allocation8 + $0x330] sm:$0xff]
        %v3179 = vld [vmem:[#allocation8 + $0x338] sm:$0xff]
        %v3180 = vld [vmem:[#allocation8 + $0x340] sm:$0xff]
        %v3181 = vld [vmem:[#allocation8 + $0x348] sm:$0xff]
        %v3182 = vld [vmem:[#allocation8 + $0x350] sm:$0xff]
        %v3183 = vld [vmem:[#allocation8 + $0x358] sm:$0xff]
        %v3184 = vld [vmem:[#allocation8 + $0x360] sm:$0xff]
        %v3185 = vld [vmem:[#allocation8 + $0x368] sm:$0xff]
        %v3186 = vld [vmem:[#allocation8 + $0x370] sm:$0xff]
        %v3187 = vld [vmem:[#allocation8 + $0x378] sm:$0xff]
        %v3188 = vld [vmem:[#allocation8 + $0x380] sm:$0xff]
        %v3189 = vld [vmem:[#allocation8 + $0x388] sm:$0xff]
        %v3190 = vld [vmem:[#allocation8 + $0x390] sm:$0xff]
        %v3191 = vld [vmem:[#allocation8 + $0x398] sm:$0xff]
        %v3192 = vld [vmem:[#allocation8 + $0x3a0] sm:$0xff]
        %v3193 = vld [vmem:[#allocation8 + $0x3a8] sm:$0xff]
        %v3194 = vld [vmem:[#allocation8 + $0x3b0] sm:$0xff]
        %v3195 = vld [vmem:[#allocation8 + $0x3b8] sm:$0xff]
        %v3196 = vld [vmem:[#allocation8 + $0x3c0] sm:$0xff]
        %v3197 = vld [vmem:[#allocation8 + $0x3c8] sm:$0xff]
        %v3198 = vld [vmem:[#allocation8 + $0x3d0] sm:$0xff]
        %v3199 = vld [vmem:[#allocation8 + $0x3d8] sm:$0xff]
        %v3200 = vld [vmem:[#allocation8 + $0x3e0] sm:$0xff]
        %v3201 = vld [vmem:[#allocation8 + $0x3e8] sm:$0xff]
        %v3202 = vld [vmem:[#allocation8 + $0x3f0] sm:$0xff]
        %v3203 = vld [vmem:[#allocation8 + $0x3f8] sm:$0xff]
        %v3204 = vld [vmem:[%s9] sm:$0xff]
        %v3206 = vlaneseq
        %v3207 = vshrl.u32 %v3206, 7
        %v3208 = vsub.s32 0, %v3207
        %v3209 = vrot.slane %v3204, %v3208
        %v3210 = vlaneseq
        %v3211 = vshrl.u32 %v3210, 7
        %v3212 = vsub.s32 1, %v3211
        %v3213 = vrot.slane %v3204, %v3212
        %v3214 = vlaneseq
        %v3215 = vshrl.u32 %v3214, 7
        %v3216 = vsub.s32 2, %v3215
        %v3217 = vrot.slane %v3204, %v3216
        %v3218 = vlaneseq
        %v3219 = vshrl.u32 %v3218, 7
        %v3220 = vsub.s32 3, %v3219
        %v3221 = vrot.slane %v3204, %v3220
        %v3222 = vlaneseq
        %v3223 = vshrl.u32 %v3222, 7
        %v3224 = vsub.s32 4, %v3223
        %v3225 = vrot.slane %v3204, %v3224
        %v3226 = vlaneseq
        %v3227 = vshrl.u32 %v3226, 7
        %v3228 = vsub.s32 5, %v3227
        %v3229 = vrot.slane %v3204, %v3228
        %v3230 = vlaneseq
        %v3231 = vshrl.u32 %v3230, 7
        %v3232 = vsub.s32 6, %v3231
        %v3233 = vrot.slane %v3204, %v3232
        %v3234 = vlaneseq
        %v3235 = vshrl.u32 %v3234, 7
        %v3236 = vsub.s32 7, %v3235
        %v3237 = vrot.slane %v3204, %v3236
        %v3374 = vunpack.c.l.b16 %v3076
        %v3375 = vunpack.c.h.b16 %v3076
        %v3376 = vunpack.c.l.b16 %v3077
        %v3377 = vunpack.c.h.b16 %v3077
        %v3378 = vunpack.c.l.b16 %v3078
        %v3379 = vunpack.c.h.b16 %v3078
        %v3380 = vunpack.c.l.b16 %v3079
        %v3381 = vunpack.c.h.b16 %v3079
        %v3382 = vunpack.c.l.b16 %v3080
        %v3383 = vunpack.c.h.b16 %v3080
        %v3384 = vunpack.c.l.b16 %v3081
        %v3385 = vunpack.c.h.b16 %v3081
        %v3386 = vunpack.c.l.b16 %v3082
        %v3387 = vunpack.c.h.b16 %v3082
        %v3388 = vunpack.c.l.b16 %v3083
        %v3389 = vunpack.c.h.b16 %v3083
        %v3390 = vunpack.c.l.b16 %v3084
        %v3391 = vunpack.c.h.b16 %v3084
        %v3392 = vunpack.c.l.b16 %v3085
        %v3393 = vunpack.c.h.b16 %v3085
        %v3394 = vunpack.c.l.b16 %v3086
        %v3395 = vunpack.c.h.b16 %v3086
        %v3396 = vunpack.c.l.b16 %v3087
        %v3397 = vunpack.c.h.b16 %v3087
        %v3398 = vunpack.c.l.b16 %v3088
        %v3399 = vunpack.c.h.b16 %v3088
        %v3400 = vunpack.c.l.b16 %v3089
        %v3401 = vunpack.c.h.b16 %v3089
        %v3402 = vunpack.c.l.b16 %v3090
        %v3403 = vunpack.c.h.b16 %v3090
        %v3404 = vunpack.c.l.b16 %v3091
        %v3405 = vunpack.c.h.b16 %v3091
        %v3406 = vunpack.c.l.b16 %v3092
        %v3407 = vunpack.c.h.b16 %v3092
        %v3408 = vunpack.c.l.b16 %v3093
        %v3409 = vunpack.c.h.b16 %v3093
        %v3410 = vunpack.c.l.b16 %v3094
        %v3411 = vunpack.c.h.b16 %v3094
        %v3412 = vunpack.c.l.b16 %v3095
        %v3413 = vunpack.c.h.b16 %v3095
        %v3414 = vunpack.c.l.b16 %v3096
        %v3415 = vunpack.c.h.b16 %v3096
        %v3416 = vunpack.c.l.b16 %v3097
        %v3417 = vunpack.c.h.b16 %v3097
        %v3418 = vunpack.c.l.b16 %v3098
        %v3419 = vunpack.c.h.b16 %v3098
        %v3420 = vunpack.c.l.b16 %v3099
        %v3421 = vunpack.c.h.b16 %v3099
        %v3422 = vunpack.c.l.b16 %v3100
        %v3423 = vunpack.c.h.b16 %v3100
        %v3424 = vunpack.c.l.b16 %v3101
        %v3425 = vunpack.c.h.b16 %v3101
        %v3426 = vunpack.c.l.b16 %v3102
        %v3427 = vunpack.c.h.b16 %v3102
        %v3428 = vunpack.c.l.b16 %v3103
        %v3429 = vunpack.c.h.b16 %v3103
        %v3430 = vunpack.c.l.b16 %v3104
        %v3431 = vunpack.c.h.b16 %v3104
        %v3432 = vunpack.c.l.b16 %v3105
        %v3433 = vunpack.c.h.b16 %v3105
        %v3434 = vunpack.c.l.b16 %v3106
        %v3435 = vunpack.c.h.b16 %v3106
        %v3436 = vunpack.c.l.b16 %v3107
        %v3437 = vunpack.c.h.b16 %v3107
        %v3438 = vunpack.c.l.b16 %v3108
        %v3439 = vunpack.c.h.b16 %v3108
        %v3440 = vunpack.c.l.b16 %v3109
        %v3441 = vunpack.c.h.b16 %v3109
        %v3442 = vunpack.c.l.b16 %v3110
        %v3443 = vunpack.c.h.b16 %v3110
        %v3444 = vunpack.c.l.b16 %v3111
        %v3445 = vunpack.c.h.b16 %v3111
        %v3446 = vunpack.c.l.b16 %v3112
        %v3447 = vunpack.c.h.b16 %v3112
        %v3448 = vunpack.c.l.b16 %v3113
        %v3449 = vunpack.c.h.b16 %v3113
        %v3450 = vunpack.c.l.b16 %v3114
        %v3451 = vunpack.c.h.b16 %v3114
        %v3452 = vunpack.c.l.b16 %v3115
        %v3453 = vunpack.c.h.b16 %v3115
        %v3454 = vunpack.c.l.b16 %v3116
        %v3455 = vunpack.c.h.b16 %v3116
        %v3456 = vunpack.c.l.b16 %v3117
        %v3457 = vunpack.c.h.b16 %v3117
        %v3458 = vunpack.c.l.b16 %v3118
        %v3459 = vunpack.c.h.b16 %v3118
        %v3460 = vunpack.c.l.b16 %v3119
        %v3461 = vunpack.c.h.b16 %v3119
        %v3462 = vunpack.c.l.b16 %v3120
        %v3463 = vunpack.c.h.b16 %v3120
        %v3464 = vunpack.c.l.b16 %v3121
        %v3465 = vunpack.c.h.b16 %v3121
        %v3466 = vunpack.c.l.b16 %v3122
        %v3467 = vunpack.c.h.b16 %v3122
        %v3468 = vunpack.c.l.b16 %v3123
        %v3469 = vunpack.c.h.b16 %v3123
        %v3470 = vunpack.c.l.b16 %v3124
        %v3471 = vunpack.c.h.b16 %v3124
        %v3472 = vunpack.c.l.b16 %v3125
        %v3473 = vunpack.c.h.b16 %v3125
        %v3474 = vunpack.c.l.b16 %v3126
        %v3475 = vunpack.c.h.b16 %v3126
        %v3476 = vunpack.c.l.b16 %v3127
        %v3477 = vunpack.c.h.b16 %v3127
        %v3478 = vunpack.c.l.b16 %v3128
        %v3479 = vunpack.c.h.b16 %v3128
        %v3480 = vunpack.c.l.b16 %v3129
        %v3481 = vunpack.c.h.b16 %v3129
        %v3482 = vunpack.c.l.b16 %v3130
        %v3483 = vunpack.c.h.b16 %v3130
        %v3484 = vunpack.c.l.b16 %v3131
        %v3485 = vunpack.c.h.b16 %v3131
        %v3486 = vunpack.c.l.b16 %v3132
        %v3487 = vunpack.c.h.b16 %v3132
        %v3488 = vunpack.c.l.b16 %v3133
        %v3489 = vunpack.c.h.b16 %v3133
        %v3490 = vunpack.c.l.b16 %v3134
        %v3491 = vunpack.c.h.b16 %v3134
        %v3492 = vunpack.c.l.b16 %v3135
        %v3493 = vunpack.c.h.b16 %v3135
        %v3494 = vunpack.c.l.b16 %v3136
        %v3495 = vunpack.c.h.b16 %v3136
        %v3496 = vunpack.c.l.b16 %v3137
        %v3497 = vunpack.c.h.b16 %v3137
        %v3498 = vunpack.c.l.b16 %v3138
        %v3499 = vunpack.c.h.b16 %v3138
        %v3500 = vunpack.c.l.b16 %v3139
        %v3501 = vunpack.c.h.b16 %v3139
        %v3502 = vunpack.c.l.b16 %v3140
        %v3503 = vunpack.c.h.b16 %v3140
        %v3504 = vunpack.c.l.b16 %v3141
        %v3505 = vunpack.c.h.b16 %v3141
        %v3506 = vunpack.c.l.b16 %v3142
        %v3507 = vunpack.c.h.b16 %v3142
        %v3508 = vunpack.c.l.b16 %v3143
        %v3509 = vunpack.c.h.b16 %v3143
        %v3510 = vunpack.c.l.b16 %v3144
        %v3511 = vunpack.c.h.b16 %v3144
        %v3512 = vunpack.c.l.b16 %v3145
        %v3513 = vunpack.c.h.b16 %v3145
        %v3514 = vunpack.c.l.b16 %v3146
        %v3515 = vunpack.c.h.b16 %v3146
        %v3516 = vunpack.c.l.b16 %v3147
        %v3517 = vunpack.c.h.b16 %v3147
        %v3518 = vunpack.c.l.b16 %v3148
        %v3519 = vunpack.c.h.b16 %v3148
        %v3520 = vunpack.c.l.b16 %v3149
        %v3521 = vunpack.c.h.b16 %v3149
        %v3522 = vunpack.c.l.b16 %v3150
        %v3523 = vunpack.c.h.b16 %v3150
        %v3524 = vunpack.c.l.b16 %v3151
        %v3525 = vunpack.c.h.b16 %v3151
        %v3526 = vunpack.c.l.b16 %v3152
        %v3527 = vunpack.c.h.b16 %v3152
        %v3528 = vunpack.c.l.b16 %v3153
        %v3529 = vunpack.c.h.b16 %v3153
        %v3530 = vunpack.c.l.b16 %v3154
        %v3531 = vunpack.c.h.b16 %v3154
        %v3532 = vunpack.c.l.b16 %v3155
        %v3533 = vunpack.c.h.b16 %v3155
        %v3534 = vunpack.c.l.b16 %v3156
        %v3535 = vunpack.c.h.b16 %v3156
        %v3536 = vunpack.c.l.b16 %v3157
        %v3537 = vunpack.c.h.b16 %v3157
        %v3538 = vunpack.c.l.b16 %v3158
        %v3539 = vunpack.c.h.b16 %v3158
        %v3540 = vunpack.c.l.b16 %v3159
        %v3541 = vunpack.c.h.b16 %v3159
        %v3542 = vunpack.c.l.b16 %v3160
        %v3543 = vunpack.c.h.b16 %v3160
        %v3544 = vunpack.c.l.b16 %v3161
        %v3545 = vunpack.c.h.b16 %v3161
        %v3546 = vunpack.c.l.b16 %v3162
        %v3547 = vunpack.c.h.b16 %v3162
        %v3548 = vunpack.c.l.b16 %v3163
        %v3549 = vunpack.c.h.b16 %v3163
        %v3550 = vunpack.c.l.b16 %v3164
        %v3551 = vunpack.c.h.b16 %v3164
        %v3552 = vunpack.c.l.b16 %v3165
        %v3553 = vunpack.c.h.b16 %v3165
        %v3554 = vunpack.c.l.b16 %v3166
        %v3555 = vunpack.c.h.b16 %v3166
        %v3556 = vunpack.c.l.b16 %v3167
        %v3557 = vunpack.c.h.b16 %v3167
        %v3558 = vunpack.c.l.b16 %v3168
        %v3559 = vunpack.c.h.b16 %v3168
        %v3560 = vunpack.c.l.b16 %v3169
        %v3561 = vunpack.c.h.b16 %v3169
        %v3562 = vunpack.c.l.b16 %v3170
        %v3563 = vunpack.c.h.b16 %v3170
        %v3564 = vunpack.c.l.b16 %v3171
        %v3565 = vunpack.c.h.b16 %v3171
        %v3566 = vunpack.c.l.b16 %v3172
        %v3567 = vunpack.c.h.b16 %v3172
        %v3568 = vunpack.c.l.b16 %v3173
        %v3569 = vunpack.c.h.b16 %v3173
        %v3570 = vunpack.c.l.b16 %v3174
        %v3571 = vunpack.c.h.b16 %v3174
        %v3572 = vunpack.c.l.b16 %v3175
        %v3573 = vunpack.c.h.b16 %v3175
        %v3574 = vunpack.c.l.b16 %v3176
        %v3575 = vunpack.c.h.b16 %v3176
        %v3576 = vunpack.c.l.b16 %v3177
        %v3577 = vunpack.c.h.b16 %v3177
        %v3578 = vunpack.c.l.b16 %v3178
        %v3579 = vunpack.c.h.b16 %v3178
        %v3580 = vunpack.c.l.b16 %v3179
        %v3581 = vunpack.c.h.b16 %v3179
        %v3582 = vunpack.c.l.b16 %v3180
        %v3583 = vunpack.c.h.b16 %v3180
        %v3584 = vunpack.c.l.b16 %v3181
        %v3585 = vunpack.c.h.b16 %v3181
        %v3586 = vunpack.c.l.b16 %v3182
        %v3587 = vunpack.c.h.b16 %v3182
        %v3588 = vunpack.c.l.b16 %v3183
        %v3589 = vunpack.c.h.b16 %v3183
        %v3590 = vunpack.c.l.b16 %v3184
        %v3591 = vunpack.c.h.b16 %v3184
        %v3592 = vunpack.c.l.b16 %v3185
        %v3593 = vunpack.c.h.b16 %v3185
        %v3594 = vunpack.c.l.b16 %v3186
        %v3595 = vunpack.c.h.b16 %v3186
        %v3596 = vunpack.c.l.b16 %v3187
        %v3597 = vunpack.c.h.b16 %v3187
        %v3598 = vunpack.c.l.b16 %v3188
        %v3599 = vunpack.c.h.b16 %v3188
        %v3600 = vunpack.c.l.b16 %v3189
        %v3601 = vunpack.c.h.b16 %v3189
        %v3602 = vunpack.c.l.b16 %v3190
        %v3603 = vunpack.c.h.b16 %v3190
        %v3604 = vunpack.c.l.b16 %v3191
        %v3605 = vunpack.c.h.b16 %v3191
        %v3606 = vunpack.c.l.b16 %v3192
        %v3607 = vunpack.c.h.b16 %v3192
        %v3608 = vunpack.c.l.b16 %v3193
        %v3609 = vunpack.c.h.b16 %v3193
        %v3610 = vunpack.c.l.b16 %v3194
        %v3611 = vunpack.c.h.b16 %v3194
        %v3612 = vunpack.c.l.b16 %v3195
        %v3613 = vunpack.c.h.b16 %v3195
        %v3614 = vunpack.c.l.b16 %v3196
        %v3615 = vunpack.c.h.b16 %v3196
        %v3616 = vunpack.c.l.b16 %v3197
        %v3617 = vunpack.c.h.b16 %v3197
        %v3618 = vunpack.c.l.b16 %v3198
        %v3619 = vunpack.c.h.b16 %v3198
        %v3620 = vunpack.c.l.b16 %v3199
        %v3621 = vunpack.c.h.b16 %v3199
        %v3622 = vunpack.c.l.b16 %v3200
        %v3623 = vunpack.c.h.b16 %v3200
        %v3624 = vunpack.c.l.b16 %v3201
        %v3625 = vunpack.c.h.b16 %v3201
        %v3626 = vunpack.c.l.b16 %v3202
        %v3627 = vunpack.c.h.b16 %v3202
        %v3628 = vunpack.c.l.b16 %v3203
        %v3629 = vunpack.c.h.b16 %v3203
        %v3630 = vpack.c.b16 %v3382, %v3374
        %v3631 = vpack.c.b16 %v3383, %v3375
        %v3632 = vpack.c.b16 %v3384, %v3376
        %v3633 = vpack.c.b16 %v3385, %v3377
        %v3634 = vpack.c.b16 %v3386, %v3378
        %v3635 = vpack.c.b16 %v3387, %v3379
        %v3636 = vpack.c.b16 %v3388, %v3380
        %v3637 = vpack.c.b16 %v3389, %v3381
        %v3638 = vpack.c.b16 %v3398, %v3390
        %v3639 = vpack.c.b16 %v3399, %v3391
        %v3640 = vpack.c.b16 %v3400, %v3392
        %v3641 = vpack.c.b16 %v3401, %v3393
        %v3642 = vpack.c.b16 %v3402, %v3394
        %v3643 = vpack.c.b16 %v3403, %v3395
        %v3644 = vpack.c.b16 %v3404, %v3396
        %v3645 = vpack.c.b16 %v3405, %v3397
        %v3646 = vpack.c.b16 %v3414, %v3406
        %v3647 = vpack.c.b16 %v3415, %v3407
        %v3648 = vpack.c.b16 %v3416, %v3408
        %v3649 = vpack.c.b16 %v3417, %v3409
        %v3650 = vpack.c.b16 %v3418, %v3410
        %v3651 = vpack.c.b16 %v3419, %v3411
        %v3652 = vpack.c.b16 %v3420, %v3412
        %v3653 = vpack.c.b16 %v3421, %v3413
        %v3654 = vpack.c.b16 %v3430, %v3422
        %v3655 = vpack.c.b16 %v3431, %v3423
        %v3656 = vpack.c.b16 %v3432, %v3424
        %v3657 = vpack.c.b16 %v3433, %v3425
        %v3658 = vpack.c.b16 %v3434, %v3426
        %v3659 = vpack.c.b16 %v3435, %v3427
        %v3660 = vpack.c.b16 %v3436, %v3428
        %v3661 = vpack.c.b16 %v3437, %v3429
        %v3662 = vpack.c.b16 %v3446, %v3438
        %v3663 = vpack.c.b16 %v3447, %v3439
        %v3664 = vpack.c.b16 %v3448, %v3440
        %v3665 = vpack.c.b16 %v3449, %v3441
        %v3666 = vpack.c.b16 %v3450, %v3442
        %v3667 = vpack.c.b16 %v3451, %v3443
        %v3668 = vpack.c.b16 %v3452, %v3444
        %v3669 = vpack.c.b16 %v3453, %v3445
        %v3670 = vpack.c.b16 %v3462, %v3454
        %v3671 = vpack.c.b16 %v3463, %v3455
        %v3672 = vpack.c.b16 %v3464, %v3456
        %v3673 = vpack.c.b16 %v3465, %v3457
        %v3674 = vpack.c.b16 %v3466, %v3458
        %v3675 = vpack.c.b16 %v3467, %v3459
        %v3676 = vpack.c.b16 %v3468, %v3460
        %v3677 = vpack.c.b16 %v3469, %v3461
        %v3678 = vpack.c.b16 %v3478, %v3470
        %v3679 = vpack.c.b16 %v3479, %v3471
        %v3680 = vpack.c.b16 %v3480, %v3472
        %v3681 = vpack.c.b16 %v3481, %v3473
        %v3682 = vpack.c.b16 %v3482, %v3474
        %v3683 = vpack.c.b16 %v3483, %v3475
        %v3684 = vpack.c.b16 %v3484, %v3476
        %v3685 = vpack.c.b16 %v3485, %v3477
        %v3686 = vpack.c.b16 %v3494, %v3486
        %v3687 = vpack.c.b16 %v3495, %v3487
        %v3688 = vpack.c.b16 %v3496, %v3488
        %v3689 = vpack.c.b16 %v3497, %v3489
        %v3690 = vpack.c.b16 %v3498, %v3490
        %v3691 = vpack.c.b16 %v3499, %v3491
        %v3692 = vpack.c.b16 %v3500, %v3492
        %v3693 = vpack.c.b16 %v3501, %v3493
        %v3694 = vpack.c.b16 %v3510, %v3502
        %v3695 = vpack.c.b16 %v3511, %v3503
        %v3696 = vpack.c.b16 %v3512, %v3504
        %v3697 = vpack.c.b16 %v3513, %v3505
        %v3698 = vpack.c.b16 %v3514, %v3506
        %v3699 = vpack.c.b16 %v3515, %v3507
        %v3700 = vpack.c.b16 %v3516, %v3508
        %v3701 = vpack.c.b16 %v3517, %v3509
        %v3702 = vpack.c.b16 %v3526, %v3518
        %v3703 = vpack.c.b16 %v3527, %v3519
        %v3704 = vpack.c.b16 %v3528, %v3520
        %v3705 = vpack.c.b16 %v3529, %v3521
        %v3706 = vpack.c.b16 %v3530, %v3522
        %v3707 = vpack.c.b16 %v3531, %v3523
        %v3708 = vpack.c.b16 %v3532, %v3524
        %v3709 = vpack.c.b16 %v3533, %v3525
        %v3710 = vpack.c.b16 %v3542, %v3534
        %v3711 = vpack.c.b16 %v3543, %v3535
        %v3712 = vpack.c.b16 %v3544, %v3536
        %v3713 = vpack.c.b16 %v3545, %v3537
        %v3714 = vpack.c.b16 %v3546, %v3538
        %v3715 = vpack.c.b16 %v3547, %v3539
        %v3716 = vpack.c.b16 %v3548, %v3540
        %v3717 = vpack.c.b16 %v3549, %v3541
        %v3718 = vpack.c.b16 %v3558, %v3550
        %v3719 = vpack.c.b16 %v3559, %v3551
        %v3720 = vpack.c.b16 %v3560, %v3552
        %v3721 = vpack.c.b16 %v3561, %v3553
        %v3722 = vpack.c.b16 %v3562, %v3554
        %v3723 = vpack.c.b16 %v3563, %v3555
        %v3724 = vpack.c.b16 %v3564, %v3556
        %v3725 = vpack.c.b16 %v3565, %v3557
        %v3726 = vpack.c.b16 %v3574, %v3566
        %v3727 = vpack.c.b16 %v3575, %v3567
        %v3728 = vpack.c.b16 %v3576, %v3568
        %v3729 = vpack.c.b16 %v3577, %v3569
        %v3730 = vpack.c.b16 %v3578, %v3570
        %v3731 = vpack.c.b16 %v3579, %v3571
        %v3732 = vpack.c.b16 %v3580, %v3572
        %v3733 = vpack.c.b16 %v3581, %v3573
        %v3734 = vpack.c.b16 %v3590, %v3582
        %v3735 = vpack.c.b16 %v3591, %v3583
        %v3736 = vpack.c.b16 %v3592, %v3584
        %v3737 = vpack.c.b16 %v3593, %v3585
        %v3738 = vpack.c.b16 %v3594, %v3586
        %v3739 = vpack.c.b16 %v3595, %v3587
        %v3740 = vpack.c.b16 %v3596, %v3588
        %v3741 = vpack.c.b16 %v3597, %v3589
        %v3742 = vpack.c.b16 %v3606, %v3598
        %v3743 = vpack.c.b16 %v3607, %v3599
        %v3744 = vpack.c.b16 %v3608, %v3600
        %v3745 = vpack.c.b16 %v3609, %v3601
        %v3746 = vpack.c.b16 %v3610, %v3602
        %v3747 = vpack.c.b16 %v3611, %v3603
        %v3748 = vpack.c.b16 %v3612, %v3604
        %v3749 = vpack.c.b16 %v3613, %v3605
        %v3750 = vpack.c.b16 %v3622, %v3614
        %v3751 = vpack.c.b16 %v3623, %v3615
        %v3752 = vpack.c.b16 %v3624, %v3616
        %v3753 = vpack.c.b16 %v3625, %v3617
        %v3754 = vpack.c.b16 %v3626, %v3618
        %v3755 = vpack.c.b16 %v3627, %v3619
        %v3756 = vpack.c.b16 %v3628, %v3620
        %v3757 = vpack.c.b16 %v3629, %v3621
        %3886 = vmatprep.subr.bf16.mxu0 %v3631
        %3887 = vmatpush1.bf16.msra.mxu0 %v3630
        %3888 = vmatprep.subr.bf16.mxu0 %v3639
        %3889 = vmatpush1.bf16.msra.mxu0 %v3638
        %3890 = vmatprep.subr.bf16.mxu0 %v3647
        %3891 = vmatpush1.bf16.msra.mxu0 %v3646
        %3892 = vmatprep.subr.bf16.mxu0 %v3655
        %3893 = vmatpush1.bf16.msra.mxu0 %v3654
        %3894 = vmatprep.subr.bf16.mxu0 %v3663
        %3895 = vmatpush1.bf16.msra.mxu0 %v3662
        %3896 = vmatprep.subr.bf16.mxu0 %v3671
        %3897 = vmatpush1.bf16.msra.mxu0 %v3670
        %3898 = vmatprep.subr.bf16.mxu0 %v3679
        %3899 = vmatpush1.bf16.msra.mxu0 %v3678
        %3900 = vmatprep.subr.bf16.mxu0 %v3687
        %3901 = vmatpush1.bf16.msra.mxu0 %v3686
        %3902 = vmatprep.subr.bf16.mxu0 %v3695
        %3903 = vmatpush1.bf16.msra.mxu0 %v3694
        %3904 = vmatprep.subr.bf16.mxu0 %v3703
        %3905 = vmatpush1.bf16.msra.mxu0 %v3702
        %3906 = vmatprep.subr.bf16.mxu0 %v3711
        %3907 = vmatpush1.bf16.msra.mxu0 %v3710
        %3908 = vmatprep.subr.bf16.mxu0 %v3719
        %3909 = vmatpush1.bf16.msra.mxu0 %v3718
        %3910 = vmatprep.subr.bf16.mxu0 %v3727
        %3911 = vmatpush1.bf16.msra.mxu0 %v3726
        %3912 = vmatprep.subr.bf16.mxu0 %v3735
        %3913 = vmatpush1.bf16.msra.mxu0 %v3734
        %3914 = vmatprep.subr.bf16.mxu0 %v3743
        %3915 = vmatpush1.bf16.msra.mxu0 %v3742
        %3916 = vmatprep.subr.bf16.mxu0 %v3751
        %3917 = vmatpush1.bf16.msra.mxu0 %v3750
        %3918 = vmatprep.mubr.bf16.mxu0 %v3061
        %3919 = vmatmul.mubr.bf16.gmra.mrb[0].mxu0 %v3060
        %v3920 = vpop.f32.mrb[0].mxu0
        %v3921 = vadd.f32 %v3209, %v3920
        %v3922 = vpop.f32.mrb[0].mxu0
        %v3923 = vadd.f32 %v3213, %v3922
        %v3924 = vpop.f32.mrb[0].mxu0
        %v3925 = vadd.f32 %v3209, %v3924
        %v3926 = vpop.f32.mrb[0].mxu0
        %v3927 = vadd.f32 %v3213, %v3926
        %3928 = vmatprep.mubr.bf16.mxu0 %v3063
        %3929 = vmatmul.mubr.bf16.gmra.mrb[0].mxu0 %v3062
        %v3930 = vpop.f32.mrb[0].mxu0
        %v3931 = vadd.f32 %v3209, %v3930
        %v3932 = vpop.f32.mrb[0].mxu0
        %v3933 = vadd.f32 %v3213, %v3932
        %v3934 = vpop.f32.mrb[0].mxu0
        %v3935 = vadd.f32 %v3209, %v3934
        %v3936 = vpop.f32.mrb[0].mxu0
        %v3937 = vadd.f32 %v3213, %v3936
        %3938 = vmatprep.mubr.bf16.mxu0 %v3065
        %3939 = vmatmul.mubr.bf16.gmra.mrb[0].mxu0 %v3064
        %v3940 = vpop.f32.mrb[0].mxu0
        %v3941 = vadd.f32 %v3209, %v3940
        %v3942 = vpop.f32.mrb[0].mxu0
        %v3943 = vadd.f32 %v3213, %v3942
        %v3944 = vpop.f32.mrb[0].mxu0
        %v3945 = vadd.f32 %v3209, %v3944
        %v3946 = vpop.f32.mrb[0].mxu0
        %v3947 = vadd.f32 %v3213, %v3946
        %3948 = vmatprep.mubr.bf16.mxu0 %v3067
        %3949 = vmatmul.mubr.bf16.gmra.mrb[0].mxu0 %v3066
        %v3950 = vpop.f32.mrb[0].mxu0
        %v3951 = vadd.f32 %v3209, %v3950
        %v3952 = vpop.f32.mrb[0].mxu0
        %v3953 = vadd.f32 %v3213, %v3952
        %v3954 = vpop.f32.mrb[0].mxu0
        %v3955 = vadd.f32 %v3209, %v3954
        %v3956 = vpop.f32.mrb[0].mxu0
        %v3957 = vadd.f32 %v3213, %v3956
        %3958 = vmatprep.mubr.bf16.mxu0 %v3069
        %3959 = vmatmul.mubr.bf16.gmra.mrb[0].mxu0 %v3068
        %v3960 = vpop.f32.mrb[0].mxu0
        %v3961 = vadd.f32 %v3209, %v3960
        %v3962 = vpop.f32.mrb[0].mxu0
        %v3963 = vadd.f32 %v3213, %v3962
        %v3964 = vpop.f32.mrb[0].mxu0
        %v3965 = vadd.f32 %v3209, %v3964
        %v3966 = vpop.f32.mrb[0].mxu0
        %v3967 = vadd.f32 %v3213, %v3966
        %3968 = vmatprep.mubr.bf16.mxu0 %v3071
        %3969 = vmatmul.mubr.bf16.gmra.mrb[0].mxu0 %v3070
        %v3970 = vpop.f32.mrb[0].mxu0
        %v3971 = vadd.f32 %v3209, %v3970
        %v3972 = vpop.f32.mrb[0].mxu0
        %v3973 = vadd.f32 %v3213, %v3972
        %v3974 = vpop.f32.mrb[0].mxu0
        %v3975 = vadd.f32 %v3209, %v3974
        %v3976 = vpop.f32.mrb[0].mxu0
        %v3977 = vadd.f32 %v3213, %v3976
        %3978 = vmatprep.mubr.bf16.mxu0 %v3073
        %3979 = vmatmul.mubr.bf16.gmra.mrb[0].mxu0 %v3072
        %v3980 = vpop.f32.mrb[0].mxu0
        %v3981 = vadd.f32 %v3209, %v3980
        %v3982 = vpop.f32.mrb[0].mxu0
        %v3983 = vadd.f32 %v3213, %v3982
        %v3984 = vpop.f32.mrb[0].mxu0
        %v3985 = vadd.f32 %v3209, %v3984
        %v3986 = vpop.f32.mrb[0].mxu0
        %v3987 = vadd.f32 %v3213, %v3986
        %3988 = vmatprep.mubr.bf16.mxu0 %v3075
        %3989 = vmatmul.mubr.bf16.gmra.mrb[0].mxu0 %v3074
        %v3990 = vpop.f32.mrb[0].mxu0
        %v3991 = vadd.f32 %v3209, %v3990
        %v3992 = vpop.f32.mrb[0].mxu0
        %v3993 = vadd.f32 %v3213, %v3992
        %v3994 = vpop.f32.mrb[0].mxu0
        %v3995 = vadd.f32 %v3209, %v3994
        %v3996 = vpop.f32.mrb[0].mxu0
        %v3997 = vadd.f32 %v3213, %v3996
        %3998 = vdwg.mxu0
        %3999 = vmatprep.subr.bf16.mxu0 %v3633
        %4000 = vmatpush1.bf16.msra.mxu0 %v3632
        %4001 = vmatprep.subr.bf16.mxu0 %v3641
        %4002 = vmatpush1.bf16.msra.mxu0 %v3640
        %4003 = vmatprep.subr.bf16.mxu0 %v3649
        %4004 = vmatpush1.bf16.msra.mxu0 %v3648
        %4005 = vmatprep.subr.bf16.mxu0 %v3657
        %4006 = vmatpush1.bf16.msra.mxu0 %v3656
        %4007 = vmatprep.subr.bf16.mxu0 %v3665
        %4008 = vmatpush1.bf16.msra.mxu0 %v3664
        %4009 = vmatprep.subr.bf16.mxu0 %v3673
        %4010 = vmatpush1.bf16.msra.mxu0 %v3672
        %4011 = vmatprep.subr.bf16.mxu0 %v3681
        %4012 = vmatpush1.bf16.msra.mxu0 %v3680
        %4013 = vmatprep.subr.bf16.mxu0 %v3689
        %4014 = vmatpush1.bf16.msra.mxu0 %v3688
        %4015 = vmatprep.subr.bf16.mxu0 %v3697
        %4016 = vmatpush1.bf16.msra.mxu0 %v3696
        %4017 = vmatprep.subr.bf16.mxu0 %v3705
        %4018 = vmatpush1.bf16.msra.mxu0 %v3704
        %4019 = vmatprep.subr.bf16.mxu0 %v3713
        %4020 = vmatpush1.bf16.msra.mxu0 %v3712
        %4021 = vmatprep.subr.bf16.mxu0 %v3721
        %4022 = vmatpush1.bf16.msra.mxu0 %v3720
        %4023 = vmatprep.subr.bf16.mxu0 %v3729
        %4024 = vmatpush1.bf16.msra.mxu0 %v3728
        %4025 = vmatprep.subr.bf16.mxu0 %v3737
        %4026 = vmatpush1.bf16.msra.mxu0 %v3736
        %4027 = vmatprep.subr.bf16.mxu0 %v3745
        %4028 = vmatpush1.bf16.msra.mxu0 %v3744
        %4029 = vmatprep.subr.bf16.mxu0 %v3753
        %4030 = vmatpush1.bf16.msra.mxu0 %v3752
        %4031 = vmatprep.mubr.bf16.mxu0 %v3061
        %4032 = vmatmul.mubr.bf16.gmra.mrb[0].mxu0 %v3060
        %v4033 = vpop.f32.mrb[0].mxu0
        %v4034 = vadd.f32 %v3217, %v4033
        %v4035 = vpop.f32.mrb[0].mxu0
        %v4036 = vadd.f32 %v3221, %v4035
        %v4037 = vpop.f32.mrb[0].mxu0
        %v4038 = vadd.f32 %v3217, %v4037
        %v4039 = vpop.f32.mrb[0].mxu0
        %v4040 = vadd.f32 %v3221, %v4039
        %4041 = vmatprep.mubr.bf16.mxu0 %v3063
        %4042 = vmatmul.mubr.bf16.gmra.mrb[0].mxu0 %v3062
        %v4043 = vpop.f32.mrb[0].mxu0
        %v4044 = vadd.f32 %v3217, %v4043
        %v4045 = vpop.f32.mrb[0].mxu0
        %v4046 = vadd.f32 %v3221, %v4045
        %v4047 = vpop.f32.mrb[0].mxu0
        %v4048 = vadd.f32 %v3217, %v4047
        %v4049 = vpop.f32.mrb[0].mxu0
        %v4050 = vadd.f32 %v3221, %v4049
        %4051 = vmatprep.mubr.bf16.mxu0 %v3065
        %4052 = vmatmul.mubr.bf16.gmra.mrb[0].mxu0 %v3064
        %v4053 = vpop.f32.mrb[0].mxu0
        %v4054 = vadd.f32 %v3217, %v4053
        %v4055 = vpop.f32.mrb[0].mxu0
        %v4056 = vadd.f32 %v3221, %v4055
        %v4057 = vpop.f32.mrb[0].mxu0
        %v4058 = vadd.f32 %v3217, %v4057
        %v4059 = vpop.f32.mrb[0].mxu0
        %v4060 = vadd.f32 %v3221, %v4059
        %4061 = vmatprep.mubr.bf16.mxu0 %v3067
        %4062 = vmatmul.mubr.bf16.gmra.mrb[0].mxu0 %v3066
        %v4063 = vpop.f32.mrb[0].mxu0
        %v4064 = vadd.f32 %v3217, %v4063
        %v4065 = vpop.f32.mrb[0].mxu0
        %v4066 = vadd.f32 %v3221, %v4065
        %v4067 = vpop.f32.mrb[0].mxu0
        %v4068 = vadd.f32 %v3217, %v4067
        %v4069 = vpop.f32.mrb[0].mxu0
        %v4070 = vadd.f32 %v3221, %v4069
        %4071 = vmatprep.mubr.bf16.mxu0 %v3069
        %4072 = vmatmul.mubr.bf16.gmra.mrb[0].mxu0 %v3068
        %v4073 = vpop.f32.mrb[0].mxu0
        %v4074 = vadd.f32 %v3217, %v4073
        %v4075 = vpop.f32.mrb[0].mxu0
        %v4076 = vadd.f32 %v3221, %v4075
        %v4077 = vpop.f32.mrb[0].mxu0
        %v4078 = vadd.f32 %v3217, %v4077
        %v4079 = vpop.f32.mrb[0].mxu0
        %v4080 = vadd.f32 %v3221, %v4079
        %4081 = vmatprep.mubr.bf16.mxu0 %v3071
        %4082 = vmatmul.mubr.bf16.gmra.mrb[0].mxu0 %v3070
        %v4083 = vpop.f32.mrb[0].mxu0
        %v4084 = vadd.f32 %v3217, %v4083
        %v4085 = vpop.f32.mrb[0].mxu0
        %v4086 = vadd.f32 %v3221, %v4085
        %v4087 = vpop.f32.mrb[0].mxu0
        %v4088 = vadd.f32 %v3217, %v4087
        %v4089 = vpop.f32.mrb[0].mxu0
        %v4090 = vadd.f32 %v3221, %v4089
        %4091 = vmatprep.mubr.bf16.mxu0 %v3073
        %4092 = vmatmul.mubr.bf16.gmra.mrb[0].mxu0 %v3072
        %v4093 = vpop.f32.mrb[0].mxu0
        %v4094 = vadd.f32 %v3217, %v4093
        %v4095 = vpop.f32.mrb[0].mxu0
        %v4096 = vadd.f32 %v3221, %v4095
        %v4097 = vpop.f32.mrb[0].mxu0
        %v4098 = vadd.f32 %v3217, %v4097
        %v4099 = vpop.f32.mrb[0].mxu0
        %v4100 = vadd.f32 %v3221, %v4099
        %4101 = vmatprep.mubr.bf16.mxu0 %v3075
        %4102 = vmatmul.mubr.bf16.gmra.mrb[0].mxu0 %v3074
        %v4103 = vpop.f32.mrb[0].mxu0
        %v4104 = vadd.f32 %v3217, %v4103
        %v4105 = vpop.f32.mrb[0].mxu0
        %v4106 = vadd.f32 %v3221, %v4105
        %v4107 = vpop.f32.mrb[0].mxu0
        %v4108 = vadd.f32 %v3217, %v4107
        %v4109 = vpop.f32.mrb[0].mxu0
        %v4110 = vadd.f32 %v3221, %v4109
        %4111 = vdwg.mxu0
        %4112 = vmatprep.subr.bf16.mxu0 %v3635
        %4113 = vmatpush1.bf16.msra.mxu0 %v3634
        %4114 = vmatprep.subr.bf16.mxu0 %v3643
        %4115 = vmatpush1.bf16.msra.mxu0 %v3642
        %4116 = vmatprep.subr.bf16.mxu0 %v3651
        %4117 = vmatpush1.bf16.msra.mxu0 %v3650
        %4118 = vmatprep.subr.bf16.mxu0 %v3659
        %4119 = vmatpush1.bf16.msra.mxu0 %v3658
        %4120 = vmatprep.subr.bf16.mxu0 %v3667
        %4121 = vmatpush1.bf16.msra.mxu0 %v3666
        %4122 = vmatprep.subr.bf16.mxu0 %v3675
        %4123 = vmatpush1.bf16.msra.mxu0 %v3674
        %4124 = vmatprep.subr.bf16.mxu0 %v3683
        %4125 = vmatpush1.bf16.msra.mxu0 %v3682
        %4126 = vmatprep.subr.bf16.mxu0 %v3691
        %4127 = vmatpush1.bf16.msra.mxu0 %v3690
        %4128 = vmatprep.subr.bf16.mxu0 %v3699
        %4129 = vmatpush1.bf16.msra.mxu0 %v3698
        %4130 = vmatprep.subr.bf16.mxu0 %v3707
        %4131 = vmatpush1.bf16.msra.mxu0 %v3706
        %4132 = vmatprep.subr.bf16.mxu0 %v3715
        %4133 = vmatpush1.bf16.msra.mxu0 %v3714
        %4134 = vmatprep.subr.bf16.mxu0 %v3723
        %4135 = vmatpush1.bf16.msra.mxu0 %v3722
        %4136 = vmatprep.subr.bf16.mxu0 %v3731
        %4137 = vmatpush1.bf16.msra.mxu0 %v3730
        %4138 = vmatprep.subr.bf16.mxu0 %v3739
        %4139 = vmatpush1.bf16.msra.mxu0 %v3738
        %4140 = vmatprep.subr.bf16.mxu0 %v3747
        %4141 = vmatpush1.bf16.msra.mxu0 %v3746
        %4142 = vmatprep.subr.bf16.mxu0 %v3755
        %4143 = vmatpush1.bf16.msra.mxu0 %v3754
        %4144 = vmatprep.mubr.bf16.mxu0 %v3061
        %4145 = vmatmul.mubr.bf16.gmra.mrb[0].mxu0 %v3060
        %v4146 = vpop.f32.mrb[0].mxu0
        %v4147 = vadd.f32 %v3225, %v4146
        %v4148 = vpop.f32.mrb[0].mxu0
        %v4149 = vadd.f32 %v3229, %v4148
        %v4150 = vpop.f32.mrb[0].mxu0
        %v4151 = vadd.f32 %v3225, %v4150
        %v4152 = vpop.f32.mrb[0].mxu0
        %v4153 = vadd.f32 %v3229, %v4152
        %4154 = vmatprep.mubr.bf16.mxu0 %v3063
        %4155 = vmatmul.mubr.bf16.gmra.mrb[0].mxu0 %v3062
        %v4156 = vpop.f32.mrb[0].mxu0
        %v4157 = vadd.f32 %v3225, %v4156
        %v4158 = vpop.f32.mrb[0].mxu0
        %v4159 = vadd.f32 %v3229, %v4158
        %v4160 = vpop.f32.mrb[0].mxu0
        %v4161 = vadd.f32 %v3225, %v4160
        %v4162 = vpop.f32.mrb[0].mxu0
        %v4163 = vadd.f32 %v3229, %v4162
        %4164 = vmatprep.mubr.bf16.mxu0 %v3065
        %4165 = vmatmul.mubr.bf16.gmra.mrb[0].mxu0 %v3064
        %v4166 = vpop.f32.mrb[0].mxu0
        %v4167 = vadd.f32 %v3225, %v4166
        %v4168 = vpop.f32.mrb[0].mxu0
        %v4169 = vadd.f32 %v3229, %v4168
        %v4170 = vpop.f32.mrb[0].mxu0
        %v4171 = vadd.f32 %v3225, %v4170
        %v4172 = vpop.f32.mrb[0].mxu0
        %v4173 = vadd.f32 %v3229, %v4172
        %4174 = vmatprep.mubr.bf16.mxu0 %v3067
        %4175 = vmatmul.mubr.bf16.gmra.mrb[0].mxu0 %v3066
        %v4176 = vpop.f32.mrb[0].mxu0
        %v4177 = vadd.f32 %v3225, %v4176
        %v4178 = vpop.f32.mrb[0].mxu0
        %v4179 = vadd.f32 %v3229, %v4178
        %v4180 = vpop.f32.mrb[0].mxu0
        %v4181 = vadd.f32 %v3225, %v4180
        %v4182 = vpop.f32.mrb[0].mxu0
        %v4183 = vadd.f32 %v3229, %v4182
        %4184 = vmatprep.mubr.bf16.mxu0 %v3069
        %4185 = vmatmul.mubr.bf16.gmra.mrb[0].mxu0 %v3068
        %v4186 = vpop.f32.mrb[0].mxu0
        %v4187 = vadd.f32 %v3225, %v4186
        %v4188 = vpop.f32.mrb[0].mxu0
        %v4189 = vadd.f32 %v3229, %v4188
        %v4190 = vpop.f32.mrb[0].mxu0
        %v4191 = vadd.f32 %v3225, %v4190
        %v4192 = vpop.f32.mrb[0].mxu0
        %v4193 = vadd.f32 %v3229, %v4192
        %4194 = vmatprep.mubr.bf16.mxu0 %v3071
        %4195 = vmatmul.mubr.bf16.gmra.mrb[0].mxu0 %v3070
        %v4196 = vpop.f32.mrb[0].mxu0
        %v4197 = vadd.f32 %v3225, %v4196
        %v4198 = vpop.f32.mrb[0].mxu0
        %v4199 = vadd.f32 %v3229, %v4198
        %v4200 = vpop.f32.mrb[0].mxu0
        %v4201 = vadd.f32 %v3225, %v4200
        %v4202 = vpop.f32.mrb[0].mxu0
        %v4203 = vadd.f32 %v3229, %v4202
        %4204 = vmatprep.mubr.bf16.mxu0 %v3073
        %4205 = vmatmul.mubr.bf16.gmra.mrb[0].mxu0 %v3072
        %v4206 = vpop.f32.mrb[0].mxu0
        %v4207 = vadd.f32 %v3225, %v4206
        %v4208 = vpop.f32.mrb[0].mxu0
        %v4209 = vadd.f32 %v3229, %v4208
        %v4210 = vpop.f32.mrb[0].mxu0
        %v4211 = vadd.f32 %v3225, %v4210
        %v4212 = vpop.f32.mrb[0].mxu0
        %v4213 = vadd.f32 %v3229, %v4212
        %4214 = vmatprep.mubr.bf16.mxu0 %v3075
        %4215 = vmatmul.mubr.bf16.gmra.mrb[0].mxu0 %v3074
        %v4216 = vpop.f32.mrb[0].mxu0
        %v4217 = vadd.f32 %v3225, %v4216
        %v4218 = vpop.f32.mrb[0].mxu0
        %v4219 = vadd.f32 %v3229, %v4218
        %v4220 = vpop.f32.mrb[0].mxu0
        %v4221 = vadd.f32 %v3225, %v4220
        %v4222 = vpop.f32.mrb[0].mxu0
        %v4223 = vadd.f32 %v3229, %v4222
        %4224 = vdwg.mxu0
        %4225 = vmatprep.subr.bf16.mxu0 %v3637
        %4226 = vmatpush1.bf16.msra.mxu0 %v3636
        %4227 = vmatprep.subr.bf16.mxu0 %v3645
        %4228 = vmatpush1.bf16.msra.mxu0 %v3644
        %4229 = vmatprep.subr.bf16.mxu0 %v3653
        %4230 = vmatpush1.bf16.msra.mxu0 %v3652
        %4231 = vmatprep.subr.bf16.mxu0 %v3661
        %4232 = vmatpush1.bf16.msra.mxu0 %v3660
        %4233 = vmatprep.subr.bf16.mxu0 %v3669
        %4234 = vmatpush1.bf16.msra.mxu0 %v3668
        %4235 = vmatprep.subr.bf16.mxu0 %v3677
        %4236 = vmatpush1.bf16.msra.mxu0 %v3676
        %4237 = vmatprep.subr.bf16.mxu0 %v3685
        %4238 = vmatpush1.bf16.msra.mxu0 %v3684
        %4239 = vmatprep.subr.bf16.mxu0 %v3693
        %4240 = vmatpush1.bf16.msra.mxu0 %v3692
        %4241 = vmatprep.subr.bf16.mxu0 %v3701
        %4242 = vmatpush1.bf16.msra.mxu0 %v3700
        %4243 = vmatprep.subr.bf16.mxu0 %v3709
        %4244 = vmatpush1.bf16.msra.mxu0 %v3708
        %4245 = vmatprep.subr.bf16.mxu0 %v3717
        %4246 = vmatpush1.bf16.msra.mxu0 %v3716
        %4247 = vmatprep.subr.bf16.mxu0 %v3725
        %4248 = vmatpush1.bf16.msra.mxu0 %v3724
        %4249 = vmatprep.subr.bf16.mxu0 %v3733
        %4250 = vmatpush1.bf16.msra.mxu0 %v3732
        %4251 = vmatprep.subr.bf16.mxu0 %v3741
        %4252 = vmatpush1.bf16.msra.mxu0 %v3740
        %4253 = vmatprep.subr.bf16.mxu0 %v3749
        %4254 = vmatpush1.bf16.msra.mxu0 %v3748
        %4255 = vmatprep.subr.bf16.mxu0 %v3757
        %4256 = vmatpush1.bf16.msra.mxu0 %v3756
        %4257 = vmatprep.mubr.bf16.mxu0 %v3061
        %4258 = vmatmul.mubr.bf16.gmra.mrb[0].mxu0 %v3060
        %v4259 = vpop.f32.mrb[0].mxu0
        %v4260 = vadd.f32 %v3233, %v4259
        %v4261 = vpop.f32.mrb[0].mxu0
        %v4262 = vadd.f32 %v3237, %v4261
        %v4263 = vpop.f32.mrb[0].mxu0
        %v4264 = vadd.f32 %v3233, %v4263
        %v4265 = vpop.f32.mrb[0].mxu0
        %v4266 = vadd.f32 %v3237, %v4265
        %4267 = vmatprep.mubr.bf16.mxu0 %v3063
        %4268 = vmatmul.mubr.bf16.gmra.mrb[0].mxu0 %v3062
        %v4269 = vpop.f32.mrb[0].mxu0
        %v4270 = vadd.f32 %v3233, %v4269
        %v4271 = vpop.f32.mrb[0].mxu0
        %v4272 = vadd.f32 %v3237, %v4271
        %v4273 = vpop.f32.mrb[0].mxu0
        %v4274 = vadd.f32 %v3233, %v4273
        %v4275 = vpop.f32.mrb[0].mxu0
        %v4276 = vadd.f32 %v3237, %v4275
        %4277 = vmatprep.mubr.bf16.mxu0 %v3065
        %4278 = vmatmul.mubr.bf16.gmra.mrb[0].mxu0 %v3064
        %v4279 = vpop.f32.mrb[0].mxu0
        %v4280 = vadd.f32 %v3233, %v4279
        %v4281 = vpop.f32.mrb[0].mxu0
        %v4282 = vadd.f32 %v3237, %v4281
        %v4283 = vpop.f32.mrb[0].mxu0
        %v4284 = vadd.f32 %v3233, %v4283
        %v4285 = vpop.f32.mrb[0].mxu0
        %v4286 = vadd.f32 %v3237, %v4285
        %4287 = vmatprep.mubr.bf16.mxu0 %v3067
        %4288 = vmatmul.mubr.bf16.gmra.mrb[0].mxu0 %v3066
        %v4289 = vpop.f32.mrb[0].mxu0
        %v4290 = vadd.f32 %v3233, %v4289
        %v4291 = vpop.f32.mrb[0].mxu0
        %v4292 = vadd.f32 %v3237, %v4291
        %v4293 = vpop.f32.mrb[0].mxu0
        %v4294 = vadd.f32 %v3233, %v4293
        %v4295 = vpop.f32.mrb[0].mxu0
        %v4296 = vadd.f32 %v3237, %v4295
        %4297 = vmatprep.mubr.bf16.mxu0 %v3069
        %4298 = vmatmul.mubr.bf16.gmra.mrb[0].mxu0 %v3068
        %v4299 = vpop.f32.mrb[0].mxu0
        %v4300 = vadd.f32 %v3233, %v4299
        %v4301 = vpop.f32.mrb[0].mxu0
        %v4302 = vadd.f32 %v3237, %v4301
        %v4303 = vpop.f32.mrb[0].mxu0
        %v4304 = vadd.f32 %v3233, %v4303
        %v4305 = vpop.f32.mrb[0].mxu0
        %v4306 = vadd.f32 %v3237, %v4305
        %4307 = vmatprep.mubr.bf16.mxu0 %v3071
        %4308 = vmatmul.mubr.bf16.gmra.mrb[0].mxu0 %v3070
        %v4309 = vpop.f32.mrb[0].mxu0
        %v4310 = vadd.f32 %v3233, %v4309
        %v4311 = vpop.f32.mrb[0].mxu0
        %v4312 = vadd.f32 %v3237, %v4311
        %v4313 = vpop.f32.mrb[0].mxu0
        %v4314 = vadd.f32 %v3233, %v4313
        %v4315 = vpop.f32.mrb[0].mxu0
        %v4316 = vadd.f32 %v3237, %v4315
        %4317 = vmatprep.mubr.bf16.mxu0 %v3073
        %4318 = vmatmul.mubr.bf16.gmra.mrb[0].mxu0 %v3072
        %v4319 = vpop.f32.mrb[0].mxu0
        %v4320 = vadd.f32 %v3233, %v4319
        %v4321 = vpop.f32.mrb[0].mxu0
        %v4322 = vadd.f32 %v3237, %v4321
        %v4323 = vpop.f32.mrb[0].mxu0
        %v4324 = vadd.f32 %v3233, %v4323
        %v4325 = vpop.f32.mrb[0].mxu0
        %v4326 = vadd.f32 %v3237, %v4325
        %4327 = vmatprep.mubr.bf16.mxu0 %v3075
        %4328 = vmatmul.mubr.bf16.gmra.mrb[0].mxu0 %v3074
        %v4329 = vpop.f32.mrb[0].mxu0
        %v4330 = vadd.f32 %v3233, %v4329
        %v4331 = vpop.f32.mrb[0].mxu0
        %v4332 = vadd.f32 %v3237, %v4331
        %v4333 = vpop.f32.mrb[0].mxu0
        %v4334 = vadd.f32 %v3233, %v4333
        %v4335 = vpop.f32.mrb[0].mxu0
        %v4336 = vadd.f32 %v3237, %v4335
        %4337 = vdwg.mxu0
        %v4338 = vmax.f32 %v3921, 0.0
        %v4339 = vmax.f32 %v3923, 0.0
        %v4340 = vmax.f32 %v4034, 0.0
        %v4341 = vmax.f32 %v4036, 0.0
        %v4342 = vmax.f32 %v4147, 0.0
        %v4343 = vmax.f32 %v4149, 0.0
        %v4344 = vmax.f32 %v4260, 0.0
        %v4345 = vmax.f32 %v4262, 0.0
        %v4346 = vmax.f32 %v3925, 0.0
        %v4347 = vmax.f32 %v3927, 0.0
        %v4348 = vmax.f32 %v4038, 0.0
        %v4349 = vmax.f32 %v4040, 0.0
        %v4350 = vmax.f32 %v4151, 0.0
        %v4351 = vmax.f32 %v4153, 0.0
        %v4352 = vmax.f32 %v4264, 0.0
        %v4353 = vmax.f32 %v4266, 0.0
        %v4354 = vmax.f32 %v3931, 0.0
        %v4355 = vmax.f32 %v3933, 0.0
        %v4356 = vmax.f32 %v4044, 0.0
        %v4357 = vmax.f32 %v4046, 0.0
        %v4358 = vmax.f32 %v4157, 0.0
        %v4359 = vmax.f32 %v4159, 0.0
        %v4360 = vmax.f32 %v4270, 0.0
        %v4361 = vmax.f32 %v4272, 0.0
        %v4362 = vmax.f32 %v3935, 0.0
        %v4363 = vmax.f32 %v3937, 0.0
        %v4364 = vmax.f32 %v4048, 0.0
        %v4365 = vmax.f32 %v4050, 0.0
        %v4366 = vmax.f32 %v4161, 0.0
        %v4367 = vmax.f32 %v4163, 0.0
        %v4368 = vmax.f32 %v4274, 0.0
        %v4369 = vmax.f32 %v4276, 0.0
        %v4370 = vmax.f32 %v3941, 0.0
        %v4371 = vmax.f32 %v3943, 0.0
        %v4372 = vmax.f32 %v4054, 0.0
        %v4373 = vmax.f32 %v4056, 0.0
        %v4374 = vmax.f32 %v4167, 0.0
        %v4375 = vmax.f32 %v4169, 0.0
        %v4376 = vmax.f32 %v4280, 0.0
        %v4377 = vmax.f32 %v4282, 0.0
        %v4378 = vmax.f32 %v3945, 0.0
        %v4379 = vmax.f32 %v3947, 0.0
        %v4380 = vmax.f32 %v4058, 0.0
        %v4381 = vmax.f32 %v4060, 0.0
        %v4382 = vmax.f32 %v4171, 0.0
        %v4383 = vmax.f32 %v4173, 0.0
        %v4384 = vmax.f32 %v4284, 0.0
        %v4385 = vmax.f32 %v4286, 0.0
        %v4386 = vmax.f32 %v3951, 0.0
        %v4387 = vmax.f32 %v3953, 0.0
        %v4388 = vmax.f32 %v4064, 0.0
        %v4389 = vmax.f32 %v4066, 0.0
        %v4390 = vmax.f32 %v4177, 0.0
        %v4391 = vmax.f32 %v4179, 0.0
        %v4392 = vmax.f32 %v4290, 0.0
        %v4393 = vmax.f32 %v4292, 0.0
        %v4394 = vmax.f32 %v3955, 0.0
        %v4395 = vmax.f32 %v3957, 0.0
        %v4396 = vmax.f32 %v4068, 0.0
        %v4397 = vmax.f32 %v4070, 0.0
        %v4398 = vmax.f32 %v4181, 0.0
        %v4399 = vmax.f32 %v4183, 0.0
        %v4400 = vmax.f32 %v4294, 0.0
        %v4401 = vmax.f32 %v4296, 0.0
        %v4402 = vmax.f32 %v3961, 0.0
        %v4403 = vmax.f32 %v3963, 0.0
        %v4404 = vmax.f32 %v4074, 0.0
        %v4405 = vmax.f32 %v4076, 0.0
        %v4406 = vmax.f32 %v4187, 0.0
        %v4407 = vmax.f32 %v4189, 0.0
        %v4408 = vmax.f32 %v4300, 0.0
        %v4409 = vmax.f32 %v4302, 0.0
        %v4410 = vmax.f32 %v3965, 0.0
        %v4411 = vmax.f32 %v3967, 0.0
        %v4412 = vmax.f32 %v4078, 0.0
        %v4413 = vmax.f32 %v4080, 0.0
        %v4414 = vmax.f32 %v4191, 0.0
        %v4415 = vmax.f32 %v4193, 0.0
        %v4416 = vmax.f32 %v4304, 0.0
        %v4417 = vmax.f32 %v4306, 0.0
        %v4418 = vmax.f32 %v3971, 0.0
        %v4419 = vmax.f32 %v3973, 0.0
        %v4420 = vmax.f32 %v4084, 0.0
        %v4421 = vmax.f32 %v4086, 0.0
        %v4422 = vmax.f32 %v4197, 0.0
        %v4423 = vmax.f32 %v4199, 0.0
        %v4424 = vmax.f32 %v4310, 0.0
        %v4425 = vmax.f32 %v4312, 0.0
        %v4426 = vmax.f32 %v3975, 0.0
        %v4427 = vmax.f32 %v3977, 0.0
        %v4428 = vmax.f32 %v4088, 0.0
        %v4429 = vmax.f32 %v4090, 0.0
        %v4430 = vmax.f32 %v4201, 0.0
        %v4431 = vmax.f32 %v4203, 0.0
        %v4432 = vmax.f32 %v4314, 0.0
        %v4433 = vmax.f32 %v4316, 0.0
        %v4434 = vmax.f32 %v3981, 0.0
        %v4435 = vmax.f32 %v3983, 0.0
        %v4436 = vmax.f32 %v4094, 0.0
        %v4437 = vmax.f32 %v4096, 0.0
        %v4438 = vmax.f32 %v4207, 0.0
        %v4439 = vmax.f32 %v4209, 0.0
        %v4440 = vmax.f32 %v4320, 0.0
        %v4441 = vmax.f32 %v4322, 0.0
        %v4442 = vmax.f32 %v3985, 0.0
        %v4443 = vmax.f32 %v3987, 0.0
        %v4444 = vmax.f32 %v4098, 0.0
        %v4445 = vmax.f32 %v4100, 0.0
        %v4446 = vmax.f32 %v4211, 0.0
        %v4447 = vmax.f32 %v4213, 0.0
        %v4448 = vmax.f32 %v4324, 0.0
        %v4449 = vmax.f32 %v4326, 0.0
        %v4450 = vmax.f32 %v3991, 0.0
        %v4451 = vmax.f32 %v3993, 0.0
        %v4452 = vmax.f32 %v4104, 0.0
        %v4453 = vmax.f32 %v4106, 0.0
        %v4454 = vmax.f32 %v4217, 0.0
        %v4455 = vmax.f32 %v4219, 0.0
        %v4456 = vmax.f32 %v4330, 0.0
        %v4457 = vmax.f32 %v4332, 0.0
        %v4458 = vmax.f32 %v3995, 0.0
        %v4459 = vmax.f32 %v3997, 0.0
        %v4460 = vmax.f32 %v4108, 0.0
        %v4461 = vmax.f32 %v4110, 0.0
        %v4462 = vmax.f32 %v4221, 0.0
        %v4463 = vmax.f32 %v4223, 0.0
        %v4464 = vmax.f32 %v4334, 0.0
        %v4465 = vmax.f32 %v4336, 0.0
        %v4466 = vpack.c.bf16 %v4346, %v4338
        %v4467 = vpack.c.bf16 %v4347, %v4339
        %v4468 = vpack.c.bf16 %v4348, %v4340
        %v4469 = vpack.c.bf16 %v4349, %v4341
        %v4470 = vpack.c.bf16 %v4350, %v4342
        %v4471 = vpack.c.bf16 %v4351, %v4343
        %v4472 = vpack.c.bf16 %v4352, %v4344
        %v4473 = vpack.c.bf16 %v4353, %v4345
        %v4474 = vpack.c.bf16 %v4362, %v4354
        %v4475 = vpack.c.bf16 %v4363, %v4355
        %v4476 = vpack.c.bf16 %v4364, %v4356
        %v4477 = vpack.c.bf16 %v4365, %v4357
        %v4478 = vpack.c.bf16 %v4366, %v4358
        %v4479 = vpack.c.bf16 %v4367, %v4359
        %v4480 = vpack.c.bf16 %v4368, %v4360
        %v4481 = vpack.c.bf16 %v4369, %v4361
        %v4482 = vpack.c.bf16 %v4378, %v4370
        %v4483 = vpack.c.bf16 %v4379, %v4371
        %v4484 = vpack.c.bf16 %v4380, %v4372
        %v4485 = vpack.c.bf16 %v4381, %v4373
        %v4486 = vpack.c.bf16 %v4382, %v4374
        %v4487 = vpack.c.bf16 %v4383, %v4375
        %v4488 = vpack.c.bf16 %v4384, %v4376
        %v4489 = vpack.c.bf16 %v4385, %v4377
        %v4490 = vpack.c.bf16 %v4394, %v4386
        %v4491 = vpack.c.bf16 %v4395, %v4387
        %v4492 = vpack.c.bf16 %v4396, %v4388
        %v4493 = vpack.c.bf16 %v4397, %v4389
        %v4494 = vpack.c.bf16 %v4398, %v4390
        %v4495 = vpack.c.bf16 %v4399, %v4391
        %v4496 = vpack.c.bf16 %v4400, %v4392
        %v4497 = vpack.c.bf16 %v4401, %v4393
        %v4498 = vpack.c.bf16 %v4410, %v4402
        %v4499 = vpack.c.bf16 %v4411, %v4403
        %v4500 = vpack.c.bf16 %v4412, %v4404
        %v4501 = vpack.c.bf16 %v4413, %v4405
        %v4502 = vpack.c.bf16 %v4414, %v4406
        %v4503 = vpack.c.bf16 %v4415, %v4407
        %v4504 = vpack.c.bf16 %v4416, %v4408
        %v4505 = vpack.c.bf16 %v4417, %v4409
        %v4506 = vpack.c.bf16 %v4426, %v4418
        %v4507 = vpack.c.bf16 %v4427, %v4419
        %v4508 = vpack.c.bf16 %v4428, %v4420
        %v4509 = vpack.c.bf16 %v4429, %v4421
        %v4510 = vpack.c.bf16 %v4430, %v4422
        %v4511 = vpack.c.bf16 %v4431, %v4423
        %v4512 = vpack.c.bf16 %v4432, %v4424
        %v4513 = vpack.c.bf16 %v4433, %v4425
        %v4514 = vpack.c.bf16 %v4442, %v4434
        %v4515 = vpack.c.bf16 %v4443, %v4435
        %v4516 = vpack.c.bf16 %v4444, %v4436
        %v4517 = vpack.c.bf16 %v4445, %v4437
        %v4518 = vpack.c.bf16 %v4446, %v4438
        %v4519 = vpack.c.bf16 %v4447, %v4439
        %v4520 = vpack.c.bf16 %v4448, %v4440
        %v4521 = vpack.c.bf16 %v4449, %v4441
        %v4522 = vpack.c.bf16 %v4458, %v4450
        %v4523 = vpack.c.bf16 %v4459, %v4451
        %v4524 = vpack.c.bf16 %v4460, %v4452
        %v4525 = vpack.c.bf16 %v4461, %v4453
        %v4526 = vpack.c.bf16 %v4462, %v4454
        %v4527 = vpack.c.bf16 %v4463, %v4455
        %v4528 = vpack.c.bf16 %v4464, %v4456
        %v4529 = vpack.c.bf16 %v4465, %v4457
        %v4530 = vld [vmem:[#allocation10] sm:$0xff]
        %v4531 = vld [vmem:[#allocation10 + $0x8] sm:$0xff]
        %v4532 = vld [vmem:[#allocation10 + $0x10] sm:$0xff]
        %v4533 = vld [vmem:[#allocation10 + $0x18] sm:$0xff]
        %v4534 = vld [vmem:[#allocation10 + $0x20] sm:$0xff]
        %v4535 = vld [vmem:[#allocation10 + $0x28] sm:$0xff]
        %v4536 = vld [vmem:[#allocation10 + $0x30] sm:$0xff]
        %v4537 = vld [vmem:[#allocation10 + $0x38] sm:$0xff]
        %v4538 = vld [vmem:[#allocation10 + $0x40] sm:$0xff]
        %v4539 = vld [vmem:[#allocation10 + $0x48] sm:$0xff]
        %v4540 = vld [vmem:[#allocation10 + $0x50] sm:$0xff]
        %v4541 = vld [vmem:[#allocation10 + $0x58] sm:$0xff]
        %v4542 = vld [vmem:[#allocation10 + $0x60] sm:$0xff]
        %v4543 = vld [vmem:[#allocation10 + $0x68] sm:$0xff]
        %v4544 = vld [vmem:[#allocation10 + $0x70] sm:$0xff]
        %v4545 = vld [vmem:[#allocation10 + $0x78] sm:$0xff]
        %v4546 = vld [vmem:[#allocation10 + $0x80] sm:$0xff]
        %v4547 = vld [vmem:[#allocation10 + $0x88] sm:$0xff]
        %v4548 = vld [vmem:[#allocation10 + $0x90] sm:$0xff]
        %v4549 = vld [vmem:[#allocation10 + $0x98] sm:$0xff]
        %v4550 = vld [vmem:[#allocation10 + $0xa0] sm:$0xff]
        %v4551 = vld [vmem:[#allocation10 + $0xa8] sm:$0xff]
        %v4552 = vld [vmem:[#allocation10 + $0xb0] sm:$0xff]
        %v4553 = vld [vmem:[#allocation10 + $0xb8] sm:$0xff]
        %v4554 = vld [vmem:[#allocation10 + $0xc0] sm:$0xff]
        %v4555 = vld [vmem:[#allocation10 + $0xc8] sm:$0xff]
        %v4556 = vld [vmem:[#allocation10 + $0xd0] sm:$0xff]
        %v4557 = vld [vmem:[#allocation10 + $0xd8] sm:$0xff]
        %v4558 = vld [vmem:[#allocation10 + $0xe0] sm:$0xff]
        %v4559 = vld [vmem:[#allocation10 + $0xe8] sm:$0xff]
        %v4560 = vld [vmem:[#allocation10 + $0xf0] sm:$0xff]
        %v4561 = vld [vmem:[#allocation10 + $0xf8] sm:$0xff]
        %v4562 = vld [vmem:[#allocation10 + $0x100] sm:$0xff]
        %v4563 = vld [vmem:[#allocation10 + $0x108] sm:$0xff]
        %v4564 = vld [vmem:[#allocation10 + $0x110] sm:$0xff]
        %v4565 = vld [vmem:[#allocation10 + $0x118] sm:$0xff]
        %v4566 = vld [vmem:[#allocation10 + $0x120] sm:$0xff]
        %v4567 = vld [vmem:[#allocation10 + $0x128] sm:$0xff]
        %v4568 = vld [vmem:[#allocation10 + $0x130] sm:$0xff]
        %v4569 = vld [vmem:[#allocation10 + $0x138] sm:$0xff]
        %v4570 = vld [vmem:[#allocation10 + $0x140] sm:$0xff]
        %v4571 = vld [vmem:[#allocation10 + $0x148] sm:$0xff]
        %v4572 = vld [vmem:[#allocation10 + $0x150] sm:$0xff]
        %v4573 = vld [vmem:[#allocation10 + $0x158] sm:$0xff]
        %v4574 = vld [vmem:[#allocation10 + $0x160] sm:$0xff]
        %v4575 = vld [vmem:[#allocation10 + $0x168] sm:$0xff]
        %v4576 = vld [vmem:[#allocation10 + $0x170] sm:$0xff]
        %v4577 = vld [vmem:[#allocation10 + $0x178] sm:$0xff]
        %v4578 = vld [vmem:[#allocation10 + $0x180] sm:$0xff]
        %v4579 = vld [vmem:[#allocation10 + $0x188] sm:$0xff]
        %v4580 = vld [vmem:[#allocation10 + $0x190] sm:$0xff]
        %v4581 = vld [vmem:[#allocation10 + $0x198] sm:$0xff]
        %v4582 = vld [vmem:[#allocation10 + $0x1a0] sm:$0xff]
        %v4583 = vld [vmem:[#allocation10 + $0x1a8] sm:$0xff]
        %v4584 = vld [vmem:[#allocation10 + $0x1b0] sm:$0xff]
        %v4585 = vld [vmem:[#allocation10 + $0x1b8] sm:$0xff]
        %v4586 = vld [vmem:[#allocation10 + $0x1c0] sm:$0xff]
        %v4587 = vld [vmem:[#allocation10 + $0x1c8] sm:$0xff]
        %v4588 = vld [vmem:[#allocation10 + $0x1d0] sm:$0xff]
        %v4589 = vld [vmem:[#allocation10 + $0x1d8] sm:$0xff]
        %v4590 = vld [vmem:[#allocation10 + $0x1e0] sm:$0xff]
        %v4591 = vld [vmem:[#allocation10 + $0x1e8] sm:$0xff]
        %v4592 = vld [vmem:[#allocation10 + $0x1f0] sm:$0xff]
        %v4593 = vld [vmem:[#allocation10 + $0x1f8] sm:$0xff]
        %v4594 = vld [vmem:[#allocation10 + $0x200] sm:$0xff]
        %v4595 = vld [vmem:[#allocation10 + $0x208] sm:$0xff]
        %v4596 = vld [vmem:[#allocation10 + $0x210] sm:$0xff]
        %v4597 = vld [vmem:[#allocation10 + $0x218] sm:$0xff]
        %v4598 = vld [vmem:[#allocation10 + $0x220] sm:$0xff]
        %v4599 = vld [vmem:[#allocation10 + $0x228] sm:$0xff]
        %v4600 = vld [vmem:[#allocation10 + $0x230] sm:$0xff]
        %v4601 = vld [vmem:[#allocation10 + $0x238] sm:$0xff]
        %v4602 = vld [vmem:[#allocation10 + $0x240] sm:$0xff]
        %v4603 = vld [vmem:[#allocation10 + $0x248] sm:$0xff]
        %v4604 = vld [vmem:[#allocation10 + $0x250] sm:$0xff]
        %v4605 = vld [vmem:[#allocation10 + $0x258] sm:$0xff]
        %v4606 = vld [vmem:[#allocation10 + $0x260] sm:$0xff]
        %v4607 = vld [vmem:[#allocation10 + $0x268] sm:$0xff]
        %v4608 = vld [vmem:[#allocation10 + $0x270] sm:$0xff]
        %v4609 = vld [vmem:[#allocation10 + $0x278] sm:$0xff]
        %v4610 = vld [vmem:[#allocation10 + $0x280] sm:$0xff]
        %v4611 = vld [vmem:[#allocation10 + $0x288] sm:$0xff]
        %v4612 = vld [vmem:[#allocation10 + $0x290] sm:$0xff]
        %v4613 = vld [vmem:[#allocation10 + $0x298] sm:$0xff]
        %v4614 = vld [vmem:[#allocation10 + $0x2a0] sm:$0xff]
        %v4615 = vld [vmem:[#allocation10 + $0x2a8] sm:$0xff]
        %v4616 = vld [vmem:[#allocation10 + $0x2b0] sm:$0xff]
        %v4617 = vld [vmem:[#allocation10 + $0x2b8] sm:$0xff]
        %v4618 = vld [vmem:[#allocation10 + $0x2c0] sm:$0xff]
        %v4619 = vld [vmem:[#allocation10 + $0x2c8] sm:$0xff]
        %v4620 = vld [vmem:[#allocation10 + $0x2d0] sm:$0xff]
        %v4621 = vld [vmem:[#allocation10 + $0x2d8] sm:$0xff]
        %v4622 = vld [vmem:[#allocation10 + $0x2e0] sm:$0xff]
        %v4623 = vld [vmem:[#allocation10 + $0x2e8] sm:$0xff]
        %v4624 = vld [vmem:[#allocation10 + $0x2f0] sm:$0xff]
        %v4625 = vld [vmem:[#allocation10 + $0x2f8] sm:$0xff]
        %v4626 = vld [vmem:[#allocation10 + $0x300] sm:$0xff]
        %v4627 = vld [vmem:[#allocation10 + $0x308] sm:$0xff]
        %v4628 = vld [vmem:[#allocation10 + $0x310] sm:$0xff]
        %v4629 = vld [vmem:[#allocation10 + $0x318] sm:$0xff]
        %v4630 = vld [vmem:[#allocation10 + $0x320] sm:$0xff]
        %v4631 = vld [vmem:[#allocation10 + $0x328] sm:$0xff]
        %v4632 = vld [vmem:[#allocation10 + $0x330] sm:$0xff]
        %v4633 = vld [vmem:[#allocation10 + $0x338] sm:$0xff]
        %v4634 = vld [vmem:[#allocation10 + $0x340] sm:$0xff]
        %v4635 = vld [vmem:[#allocation10 + $0x348] sm:$0xff]
        %v4636 = vld [vmem:[#allocation10 + $0x350] sm:$0xff]
        %v4637 = vld [vmem:[#allocation10 + $0x358] sm:$0xff]
        %v4638 = vld [vmem:[#allocation10 + $0x360] sm:$0xff]
        %v4639 = vld [vmem:[#allocation10 + $0x368] sm:$0xff]
        %v4640 = vld [vmem:[#allocation10 + $0x370] sm:$0xff]
        %v4641 = vld [vmem:[#allocation10 + $0x378] sm:$0xff]
        %v4642 = vld [vmem:[#allocation10 + $0x380] sm:$0xff]
        %v4643 = vld [vmem:[#allocation10 + $0x388] sm:$0xff]
        %v4644 = vld [vmem:[#allocation10 + $0x390] sm:$0xff]
        %v4645 = vld [vmem:[#allocation10 + $0x398] sm:$0xff]
        %v4646 = vld [vmem:[#allocation10 + $0x3a0] sm:$0xff]
        %v4647 = vld [vmem:[#allocation10 + $0x3a8] sm:$0xff]
        %v4648 = vld [vmem:[#allocation10 + $0x3b0] sm:$0xff]
        %v4649 = vld [vmem:[#allocation10 + $0x3b8] sm:$0xff]
        %v4650 = vld [vmem:[#allocation10 + $0x3c0] sm:$0xff]
        %v4651 = vld [vmem:[#allocation10 + $0x3c8] sm:$0xff]
        %v4652 = vld [vmem:[#allocation10 + $0x3d0] sm:$0xff]
        %v4653 = vld [vmem:[#allocation10 + $0x3d8] sm:$0xff]
        %v4654 = vld [vmem:[#allocation10 + $0x3e0] sm:$0xff]
        %v4655 = vld [vmem:[#allocation10 + $0x3e8] sm:$0xff]
        %v4656 = vld [vmem:[#allocation10 + $0x3f0] sm:$0xff]
        %v4657 = vld [vmem:[#allocation10 + $0x3f8] sm:$0xff]
        %v4658 = vld [vmem:[%s11] sm:$0x3]
        %v4660 = vlaneseq
        %v4661 = vshrl.u32 %v4660, 7
        %v4662 = vsub.s32 0, %v4661
        %v4663 = vrot.slane %v4658, %v4662
        %v4664 = vlaneseq
        %v4665 = vshrl.u32 %v4664, 7
        %v4666 = vsub.s32 1, %v4665
        %v4667 = vrot.slane %v4658, %v4666
        %v4798 = vunpack.c.l.b16 %v4530
        %v4799 = vunpack.c.h.b16 %v4530
        %v4800 = vunpack.c.l.b16 %v4531
        %v4801 = vunpack.c.h.b16 %v4531
        %v4802 = vunpack.c.l.b16 %v4532
        %v4803 = vunpack.c.h.b16 %v4532
        %v4804 = vunpack.c.l.b16 %v4533
        %v4805 = vunpack.c.h.b16 %v4533
        %v4806 = vunpack.c.l.b16 %v4534
        %v4807 = vunpack.c.h.b16 %v4534
        %v4808 = vunpack.c.l.b16 %v4535
        %v4809 = vunpack.c.h.b16 %v4535
        %v4810 = vunpack.c.l.b16 %v4536
        %v4811 = vunpack.c.h.b16 %v4536
        %v4812 = vunpack.c.l.b16 %v4537
        %v4813 = vunpack.c.h.b16 %v4537
        %v4814 = vunpack.c.l.b16 %v4538
        %v4815 = vunpack.c.h.b16 %v4538
        %v4816 = vunpack.c.l.b16 %v4539
        %v4817 = vunpack.c.h.b16 %v4539
        %v4818 = vunpack.c.l.b16 %v4540
        %v4819 = vunpack.c.h.b16 %v4540
        %v4820 = vunpack.c.l.b16 %v4541
        %v4821 = vunpack.c.h.b16 %v4541
        %v4822 = vunpack.c.l.b16 %v4542
        %v4823 = vunpack.c.h.b16 %v4542
        %v4824 = vunpack.c.l.b16 %v4543
        %v4825 = vunpack.c.h.b16 %v4543
        %v4826 = vunpack.c.l.b16 %v4544
        %v4827 = vunpack.c.h.b16 %v4544
        %v4828 = vunpack.c.l.b16 %v4545
        %v4829 = vunpack.c.h.b16 %v4545
        %v4830 = vunpack.c.l.b16 %v4546
        %v4831 = vunpack.c.h.b16 %v4546
        %v4832 = vunpack.c.l.b16 %v4547
        %v4833 = vunpack.c.h.b16 %v4547
        %v4834 = vunpack.c.l.b16 %v4548
        %v4835 = vunpack.c.h.b16 %v4548
        %v4836 = vunpack.c.l.b16 %v4549
        %v4837 = vunpack.c.h.b16 %v4549
        %v4838 = vunpack.c.l.b16 %v4550
        %v4839 = vunpack.c.h.b16 %v4550
        %v4840 = vunpack.c.l.b16 %v4551
        %v4841 = vunpack.c.h.b16 %v4551
        %v4842 = vunpack.c.l.b16 %v4552
        %v4843 = vunpack.c.h.b16 %v4552
        %v4844 = vunpack.c.l.b16 %v4553
        %v4845 = vunpack.c.h.b16 %v4553
        %v4846 = vunpack.c.l.b16 %v4554
        %v4847 = vunpack.c.h.b16 %v4554
        %v4848 = vunpack.c.l.b16 %v4555
        %v4849 = vunpack.c.h.b16 %v4555
        %v4850 = vunpack.c.l.b16 %v4556
        %v4851 = vunpack.c.h.b16 %v4556
        %v4852 = vunpack.c.l.b16 %v4557
        %v4853 = vunpack.c.h.b16 %v4557
        %v4854 = vunpack.c.l.b16 %v4558
        %v4855 = vunpack.c.h.b16 %v4558
        %v4856 = vunpack.c.l.b16 %v4559
        %v4857 = vunpack.c.h.b16 %v4559
        %v4858 = vunpack.c.l.b16 %v4560
        %v4859 = vunpack.c.h.b16 %v4560
        %v4860 = vunpack.c.l.b16 %v4561
        %v4861 = vunpack.c.h.b16 %v4561
        %v4862 = vunpack.c.l.b16 %v4562
        %v4863 = vunpack.c.h.b16 %v4562
        %v4864 = vunpack.c.l.b16 %v4563
        %v4865 = vunpack.c.h.b16 %v4563
        %v4866 = vunpack.c.l.b16 %v4564
        %v4867 = vunpack.c.h.b16 %v4564
        %v4868 = vunpack.c.l.b16 %v4565
        %v4869 = vunpack.c.h.b16 %v4565
        %v4870 = vunpack.c.l.b16 %v4566
        %v4871 = vunpack.c.h.b16 %v4566
        %v4872 = vunpack.c.l.b16 %v4567
        %v4873 = vunpack.c.h.b16 %v4567
        %v4874 = vunpack.c.l.b16 %v4568
        %v4875 = vunpack.c.h.b16 %v4568
        %v4876 = vunpack.c.l.b16 %v4569
        %v4877 = vunpack.c.h.b16 %v4569
        %v4878 = vunpack.c.l.b16 %v4570
        %v4879 = vunpack.c.h.b16 %v4570
        %v4880 = vunpack.c.l.b16 %v4571
        %v4881 = vunpack.c.h.b16 %v4571
        %v4882 = vunpack.c.l.b16 %v4572
        %v4883 = vunpack.c.h.b16 %v4572
        %v4884 = vunpack.c.l.b16 %v4573
        %v4885 = vunpack.c.h.b16 %v4573
        %v4886 = vunpack.c.l.b16 %v4574
        %v4887 = vunpack.c.h.b16 %v4574
        %v4888 = vunpack.c.l.b16 %v4575
        %v4889 = vunpack.c.h.b16 %v4575
        %v4890 = vunpack.c.l.b16 %v4576
        %v4891 = vunpack.c.h.b16 %v4576
        %v4892 = vunpack.c.l.b16 %v4577
        %v4893 = vunpack.c.h.b16 %v4577
        %v4894 = vunpack.c.l.b16 %v4578
        %v4895 = vunpack.c.h.b16 %v4578
        %v4896 = vunpack.c.l.b16 %v4579
        %v4897 = vunpack.c.h.b16 %v4579
        %v4898 = vunpack.c.l.b16 %v4580
        %v4899 = vunpack.c.h.b16 %v4580
        %v4900 = vunpack.c.l.b16 %v4581
        %v4901 = vunpack.c.h.b16 %v4581
        %v4902 = vunpack.c.l.b16 %v4582
        %v4903 = vunpack.c.h.b16 %v4582
        %v4904 = vunpack.c.l.b16 %v4583
        %v4905 = vunpack.c.h.b16 %v4583
        %v4906 = vunpack.c.l.b16 %v4584
        %v4907 = vunpack.c.h.b16 %v4584
        %v4908 = vunpack.c.l.b16 %v4585
        %v4909 = vunpack.c.h.b16 %v4585
        %v4910 = vunpack.c.l.b16 %v4586
        %v4911 = vunpack.c.h.b16 %v4586
        %v4912 = vunpack.c.l.b16 %v4587
        %v4913 = vunpack.c.h.b16 %v4587
        %v4914 = vunpack.c.l.b16 %v4588
        %v4915 = vunpack.c.h.b16 %v4588
        %v4916 = vunpack.c.l.b16 %v4589
        %v4917 = vunpack.c.h.b16 %v4589
        %v4918 = vunpack.c.l.b16 %v4590
        %v4919 = vunpack.c.h.b16 %v4590
        %v4920 = vunpack.c.l.b16 %v4591
        %v4921 = vunpack.c.h.b16 %v4591
        %v4922 = vunpack.c.l.b16 %v4592
        %v4923 = vunpack.c.h.b16 %v4592
        %v4924 = vunpack.c.l.b16 %v4593
        %v4925 = vunpack.c.h.b16 %v4593
        %v4926 = vunpack.c.l.b16 %v4594
        %v4927 = vunpack.c.h.b16 %v4594
        %v4928 = vunpack.c.l.b16 %v4595
        %v4929 = vunpack.c.h.b16 %v4595
        %v4930 = vunpack.c.l.b16 %v4596
        %v4931 = vunpack.c.h.b16 %v4596
        %v4932 = vunpack.c.l.b16 %v4597
        %v4933 = vunpack.c.h.b16 %v4597
        %v4934 = vunpack.c.l.b16 %v4598
        %v4935 = vunpack.c.h.b16 %v4598
        %v4936 = vunpack.c.l.b16 %v4599
        %v4937 = vunpack.c.h.b16 %v4599
        %v4938 = vunpack.c.l.b16 %v4600
        %v4939 = vunpack.c.h.b16 %v4600
        %v4940 = vunpack.c.l.b16 %v4601
        %v4941 = vunpack.c.h.b16 %v4601
        %v4942 = vunpack.c.l.b16 %v4602
        %v4943 = vunpack.c.h.b16 %v4602
        %v4944 = vunpack.c.l.b16 %v4603
        %v4945 = vunpack.c.h.b16 %v4603
        %v4946 = vunpack.c.l.b16 %v4604
        %v4947 = vunpack.c.h.b16 %v4604
        %v4948 = vunpack.c.l.b16 %v4605
        %v4949 = vunpack.c.h.b16 %v4605
        %v4950 = vunpack.c.l.b16 %v4606
        %v4951 = vunpack.c.h.b16 %v4606
        %v4952 = vunpack.c.l.b16 %v4607
        %v4953 = vunpack.c.h.b16 %v4607
        %v4954 = vunpack.c.l.b16 %v4608
        %v4955 = vunpack.c.h.b16 %v4608
        %v4956 = vunpack.c.l.b16 %v4609
        %v4957 = vunpack.c.h.b16 %v4609
        %v4958 = vunpack.c.l.b16 %v4610
        %v4959 = vunpack.c.h.b16 %v4610
        %v4960 = vunpack.c.l.b16 %v4611
        %v4961 = vunpack.c.h.b16 %v4611
        %v4962 = vunpack.c.l.b16 %v4612
        %v4963 = vunpack.c.h.b16 %v4612
        %v4964 = vunpack.c.l.b16 %v4613
        %v4965 = vunpack.c.h.b16 %v4613
        %v4966 = vunpack.c.l.b16 %v4614
        %v4967 = vunpack.c.h.b16 %v4614
        %v4968 = vunpack.c.l.b16 %v4615
        %v4969 = vunpack.c.h.b16 %v4615
        %v4970 = vunpack.c.l.b16 %v4616
        %v4971 = vunpack.c.h.b16 %v4616
        %v4972 = vunpack.c.l.b16 %v4617
        %v4973 = vunpack.c.h.b16 %v4617
        %v4974 = vunpack.c.l.b16 %v4618
        %v4975 = vunpack.c.h.b16 %v4618
        %v4976 = vunpack.c.l.b16 %v4619
        %v4977 = vunpack.c.h.b16 %v4619
        %v4978 = vunpack.c.l.b16 %v4620
        %v4979 = vunpack.c.h.b16 %v4620
        %v4980 = vunpack.c.l.b16 %v4621
        %v4981 = vunpack.c.h.b16 %v4621
        %v4982 = vunpack.c.l.b16 %v4622
        %v4983 = vunpack.c.h.b16 %v4622
        %v4984 = vunpack.c.l.b16 %v4623
        %v4985 = vunpack.c.h.b16 %v4623
        %v4986 = vunpack.c.l.b16 %v4624
        %v4987 = vunpack.c.h.b16 %v4624
        %v4988 = vunpack.c.l.b16 %v4625
        %v4989 = vunpack.c.h.b16 %v4625
        %v4990 = vunpack.c.l.b16 %v4626
        %v4991 = vunpack.c.h.b16 %v4626
        %v4992 = vunpack.c.l.b16 %v4627
        %v4993 = vunpack.c.h.b16 %v4627
        %v4994 = vunpack.c.l.b16 %v4628
        %v4995 = vunpack.c.h.b16 %v4628
        %v4996 = vunpack.c.l.b16 %v4629
        %v4997 = vunpack.c.h.b16 %v4629
        %v4998 = vunpack.c.l.b16 %v4630
        %v4999 = vunpack.c.h.b16 %v4630
        %v5000 = vunpack.c.l.b16 %v4631
        %v5001 = vunpack.c.h.b16 %v4631
        %v5002 = vunpack.c.l.b16 %v4632
        %v5003 = vunpack.c.h.b16 %v4632
        %v5004 = vunpack.c.l.b16 %v4633
        %v5005 = vunpack.c.h.b16 %v4633
        %v5006 = vunpack.c.l.b16 %v4634
        %v5007 = vunpack.c.h.b16 %v4634
        %v5008 = vunpack.c.l.b16 %v4635
        %v5009 = vunpack.c.h.b16 %v4635
        %v5010 = vunpack.c.l.b16 %v4636
        %v5011 = vunpack.c.h.b16 %v4636
        %v5012 = vunpack.c.l.b16 %v4637
        %v5013 = vunpack.c.h.b16 %v4637
        %v5014 = vunpack.c.l.b16 %v4638
        %v5015 = vunpack.c.h.b16 %v4638
        %v5016 = vunpack.c.l.b16 %v4639
        %v5017 = vunpack.c.h.b16 %v4639
        %v5018 = vunpack.c.l.b16 %v4640
        %v5019 = vunpack.c.h.b16 %v4640
        %v5020 = vunpack.c.l.b16 %v4641
        %v5021 = vunpack.c.h.b16 %v4641
        %v5022 = vunpack.c.l.b16 %v4642
        %v5023 = vunpack.c.h.b16 %v4642
        %v5024 = vunpack.c.l.b16 %v4643
        %v5025 = vunpack.c.h.b16 %v4643
        %v5026 = vunpack.c.l.b16 %v4644
        %v5027 = vunpack.c.h.b16 %v4644
        %v5028 = vunpack.c.l.b16 %v4645
        %v5029 = vunpack.c.h.b16 %v4645
        %v5030 = vunpack.c.l.b16 %v4646
        %v5031 = vunpack.c.h.b16 %v4646
        %v5032 = vunpack.c.l.b16 %v4647
        %v5033 = vunpack.c.h.b16 %v4647
        %v5034 = vunpack.c.l.b16 %v4648
        %v5035 = vunpack.c.h.b16 %v4648
        %v5036 = vunpack.c.l.b16 %v4649
        %v5037 = vunpack.c.h.b16 %v4649
        %v5038 = vunpack.c.l.b16 %v4650
        %v5039 = vunpack.c.h.b16 %v4650
        %v5040 = vunpack.c.l.b16 %v4651
        %v5041 = vunpack.c.h.b16 %v4651
        %v5042 = vunpack.c.l.b16 %v4652
        %v5043 = vunpack.c.h.b16 %v4652
        %v5044 = vunpack.c.l.b16 %v4653
        %v5045 = vunpack.c.h.b16 %v4653
        %v5046 = vunpack.c.l.b16 %v4654
        %v5047 = vunpack.c.h.b16 %v4654
        %v5048 = vunpack.c.l.b16 %v4655
        %v5049 = vunpack.c.h.b16 %v4655
        %v5050 = vunpack.c.l.b16 %v4656
        %v5051 = vunpack.c.h.b16 %v4656
        %v5052 = vunpack.c.l.b16 %v4657
        %v5053 = vunpack.c.h.b16 %v4657
        %v5054 = vpack.c.b16 %v4800, %v4798
        %v5055 = vpack.c.b16 %v4801, %v4799
        %v5056 = vpack.c.b16 %v4804, %v4802
        %v5057 = vpack.c.b16 %v4805, %v4803
        %v5058 = vpack.c.b16 %v4808, %v4806
        %v5059 = vpack.c.b16 %v4809, %v4807
        %v5060 = vpack.c.b16 %v4812, %v4810
        %v5061 = vpack.c.b16 %v4813, %v4811
        %v5062 = vpack.c.b16 %v4816, %v4814
        %v5063 = vpack.c.b16 %v4817, %v4815
        %v5064 = vpack.c.b16 %v4820, %v4818
        %v5065 = vpack.c.b16 %v4821, %v4819
        %v5066 = vpack.c.b16 %v4824, %v4822
        %v5067 = vpack.c.b16 %v4825, %v4823
        %v5068 = vpack.c.b16 %v4828, %v4826
        %v5069 = vpack.c.b16 %v4829, %v4827
        %v5070 = vpack.c.b16 %v4832, %v4830
        %v5071 = vpack.c.b16 %v4833, %v4831
        %v5072 = vpack.c.b16 %v4836, %v4834
        %v5073 = vpack.c.b16 %v4837, %v4835
        %v5074 = vpack.c.b16 %v4840, %v4838
        %v5075 = vpack.c.b16 %v4841, %v4839
        %v5076 = vpack.c.b16 %v4844, %v4842
        %v5077 = vpack.c.b16 %v4845, %v4843
        %v5078 = vpack.c.b16 %v4848, %v4846
        %v5079 = vpack.c.b16 %v4849, %v4847
        %v5080 = vpack.c.b16 %v4852, %v4850
        %v5081 = vpack.c.b16 %v4853, %v4851
        %v5082 = vpack.c.b16 %v4856, %v4854
        %v5083 = vpack.c.b16 %v4857, %v4855
        %v5084 = vpack.c.b16 %v4860, %v4858
        %v5085 = vpack.c.b16 %v4861, %v4859
        %v5086 = vpack.c.b16 %v4864, %v4862
        %v5087 = vpack.c.b16 %v4865, %v4863
        %v5088 = vpack.c.b16 %v4868, %v4866
        %v5089 = vpack.c.b16 %v4869, %v4867
        %v5090 = vpack.c.b16 %v4872, %v4870
        %v5091 = vpack.c.b16 %v4873, %v4871
        %v5092 = vpack.c.b16 %v4876, %v4874
        %v5093 = vpack.c.b16 %v4877, %v4875
        %v5094 = vpack.c.b16 %v4880, %v4878
        %v5095 = vpack.c.b16 %v4881, %v4879
        %v5096 = vpack.c.b16 %v4884, %v4882
        %v5097 = vpack.c.b16 %v4885, %v4883
        %v5098 = vpack.c.b16 %v4888, %v4886
        %v5099 = vpack.c.b16 %v4889, %v4887
        %v5100 = vpack.c.b16 %v4892, %v4890
        %v5101 = vpack.c.b16 %v4893, %v4891
        %v5102 = vpack.c.b16 %v4896, %v4894
        %v5103 = vpack.c.b16 %v4897, %v4895
        %v5104 = vpack.c.b16 %v4900, %v4898
        %v5105 = vpack.c.b16 %v4901, %v4899
        %v5106 = vpack.c.b16 %v4904, %v4902
        %v5107 = vpack.c.b16 %v4905, %v4903
        %v5108 = vpack.c.b16 %v4908, %v4906
        %v5109 = vpack.c.b16 %v4909, %v4907
        %v5110 = vpack.c.b16 %v4912, %v4910
        %v5111 = vpack.c.b16 %v4913, %v4911
        %v5112 = vpack.c.b16 %v4916, %v4914
        %v5113 = vpack.c.b16 %v4917, %v4915
        %v5114 = vpack.c.b16 %v4920, %v4918
        %v5115 = vpack.c.b16 %v4921, %v4919
        %v5116 = vpack.c.b16 %v4924, %v4922
        %v5117 = vpack.c.b16 %v4925, %v4923
        %v5118 = vpack.c.b16 %v4928, %v4926
        %v5119 = vpack.c.b16 %v4929, %v4927
        %v5120 = vpack.c.b16 %v4932, %v4930
        %v5121 = vpack.c.b16 %v4933, %v4931
        %v5122 = vpack.c.b16 %v4936, %v4934
        %v5123 = vpack.c.b16 %v4937, %v4935
        %v5124 = vpack.c.b16 %v4940, %v4938
        %v5125 = vpack.c.b16 %v4941, %v4939
        %v5126 = vpack.c.b16 %v4944, %v4942
        %v5127 = vpack.c.b16 %v4945, %v4943
        %v5128 = vpack.c.b16 %v4948, %v4946
        %v5129 = vpack.c.b16 %v4949, %v4947
        %v5130 = vpack.c.b16 %v4952, %v4950
        %v5131 = vpack.c.b16 %v4953, %v4951
        %v5132 = vpack.c.b16 %v4956, %v4954
        %v5133 = vpack.c.b16 %v4957, %v4955
        %v5134 = vpack.c.b16 %v4960, %v4958
        %v5135 = vpack.c.b16 %v4961, %v4959
        %v5136 = vpack.c.b16 %v4964, %v4962
        %v5137 = vpack.c.b16 %v4965, %v4963
        %v5138 = vpack.c.b16 %v4968, %v4966
        %v5139 = vpack.c.b16 %v4969, %v4967
        %v5140 = vpack.c.b16 %v4972, %v4970
        %v5141 = vpack.c.b16 %v4973, %v4971
        %v5142 = vpack.c.b16 %v4976, %v4974
        %v5143 = vpack.c.b16 %v4977, %v4975
        %v5144 = vpack.c.b16 %v4980, %v4978
        %v5145 = vpack.c.b16 %v4981, %v4979
        %v5146 = vpack.c.b16 %v4984, %v4982
        %v5147 = vpack.c.b16 %v4985, %v4983
        %v5148 = vpack.c.b16 %v4988, %v4986
        %v5149 = vpack.c.b16 %v4989, %v4987
        %v5150 = vpack.c.b16 %v4992, %v4990
        %v5151 = vpack.c.b16 %v4993, %v4991
        %v5152 = vpack.c.b16 %v4996, %v4994
        %v5153 = vpack.c.b16 %v4997, %v4995
        %v5154 = vpack.c.b16 %v5000, %v4998
        %v5155 = vpack.c.b16 %v5001, %v4999
        %v5156 = vpack.c.b16 %v5004, %v5002
        %v5157 = vpack.c.b16 %v5005, %v5003
        %v5158 = vpack.c.b16 %v5008, %v5006
        %v5159 = vpack.c.b16 %v5009, %v5007
        %v5160 = vpack.c.b16 %v5012, %v5010
        %v5161 = vpack.c.b16 %v5013, %v5011
        %v5162 = vpack.c.b16 %v5016, %v5014
        %v5163 = vpack.c.b16 %v5017, %v5015
        %v5164 = vpack.c.b16 %v5020, %v5018
        %v5165 = vpack.c.b16 %v5021, %v5019
        %v5166 = vpack.c.b16 %v5024, %v5022
        %v5167 = vpack.c.b16 %v5025, %v5023
        %v5168 = vpack.c.b16 %v5028, %v5026
        %v5169 = vpack.c.b16 %v5029, %v5027
        %v5170 = vpack.c.b16 %v5032, %v5030
        %v5171 = vpack.c.b16 %v5033, %v5031
        %v5172 = vpack.c.b16 %v5036, %v5034
        %v5173 = vpack.c.b16 %v5037, %v5035
        %v5174 = vpack.c.b16 %v5040, %v5038
        %v5175 = vpack.c.b16 %v5041, %v5039
        %v5176 = vpack.c.b16 %v5044, %v5042
        %v5177 = vpack.c.b16 %v5045, %v5043
        %v5178 = vpack.c.b16 %v5048, %v5046
        %v5179 = vpack.c.b16 %v5049, %v5047
        %v5180 = vpack.c.b16 %v5052, %v5050
        %v5181 = vpack.c.b16 %v5053, %v5051
        %5310 = vmatprep.subr.bf16.mxu0 %v5055
        %5311 = vmatpush1.bf16.msra.mxu0 %v5054
        %5312 = vmatprep.subr.bf16.mxu0 %v5057
        %5313 = vmatpush1.bf16.msra.mxu0 %v5056
        %5314 = vmatprep.subr.bf16.mxu0 %v5059
        %5315 = vmatpush1.bf16.msra.mxu0 %v5058
        %5316 = vmatprep.subr.bf16.mxu0 %v5061
        %5317 = vmatpush1.bf16.msra.mxu0 %v5060
        %5318 = vmatprep.subr.bf16.mxu0 %v5063
        %5319 = vmatpush1.bf16.msra.mxu0 %v5062
        %5320 = vmatprep.subr.bf16.mxu0 %v5065
        %5321 = vmatpush1.bf16.msra.mxu0 %v5064
        %5322 = vmatprep.subr.bf16.mxu0 %v5067
        %5323 = vmatpush1.bf16.msra.mxu0 %v5066
        %5324 = vmatprep.subr.bf16.mxu0 %v5069
        %5325 = vmatpush1.bf16.msra.mxu0 %v5068
        %5326 = vmatprep.subr.bf16.mxu0 %v5071
        %5327 = vmatpush1.bf16.msra.mxu0 %v5070
        %5328 = vmatprep.subr.bf16.mxu0 %v5073
        %5329 = vmatpush1.bf16.msra.mxu0 %v5072
        %5330 = vmatprep.subr.bf16.mxu0 %v5075
        %5331 = vmatpush1.bf16.msra.mxu0 %v5074
        %5332 = vmatprep.subr.bf16.mxu0 %v5077
        %5333 = vmatpush1.bf16.msra.mxu0 %v5076
        %5334 = vmatprep.subr.bf16.mxu0 %v5079
        %5335 = vmatpush1.bf16.msra.mxu0 %v5078
        %5336 = vmatprep.subr.bf16.mxu0 %v5081
        %5337 = vmatpush1.bf16.msra.mxu0 %v5080
        %5338 = vmatprep.subr.bf16.mxu0 %v5083
        %5339 = vmatpush1.bf16.msra.mxu0 %v5082
        %5340 = vmatprep.subr.bf16.mxu0 %v5085
        %5341 = vmatpush1.bf16.msra.mxu0 %v5084
        %5342 = vmatprep.mubr.bf16.mxu0 %v4467
        %5343 = vmatmul.mubr.bf16.gmra.mrb[0].mxu0 %v4466
        %v5344 = vpop.f32.mrb[0].mxu0
        %v5345 = vadd.f32 %v4663, %v5344
        %v5346 = vpop.f32.mrb[0].mxu0
        %v5347 = vadd.f32 %v4667, %v5346
        %v5348 = vpop.f32.mrb[0].mxu0
        %v5349 = vadd.f32 %v4663, %v5348
        %v5350 = vpop.f32.mrb[0].mxu0
        %v5351 = vadd.f32 %v4667, %v5350
        %5352 = vmatprep.mubr.bf16.mxu0 %v4475
        %5353 = vmatmul.mubr.bf16.gmra.mrb[0].mxu0 %v4474
        %v5354 = vpop.f32.mrb[0].mxu0
        %v5355 = vadd.f32 %v4663, %v5354
        %v5356 = vpop.f32.mrb[0].mxu0
        %v5357 = vadd.f32 %v4667, %v5356
        %v5358 = vpop.f32.mrb[0].mxu0
        %v5359 = vadd.f32 %v4663, %v5358
        %v5360 = vpop.f32.mrb[0].mxu0
        %v5361 = vadd.f32 %v4667, %v5360
        %5362 = vmatprep.mubr.bf16.mxu0 %v4483
        %5363 = vmatmul.mubr.bf16.gmra.mrb[0].mxu0 %v4482
        %v5364 = vpop.f32.mrb[0].mxu0
        %v5365 = vadd.f32 %v4663, %v5364
        %v5366 = vpop.f32.mrb[0].mxu0
        %v5367 = vadd.f32 %v4667, %v5366
        %v5368 = vpop.f32.mrb[0].mxu0
        %v5369 = vadd.f32 %v4663, %v5368
        %v5370 = vpop.f32.mrb[0].mxu0
        %v5371 = vadd.f32 %v4667, %v5370
        %5372 = vmatprep.mubr.bf16.mxu0 %v4491
        %5373 = vmatmul.mubr.bf16.gmra.mrb[0].mxu0 %v4490
        %v5374 = vpop.f32.mrb[0].mxu0
        %v5375 = vadd.f32 %v4663, %v5374
        %v5376 = vpop.f32.mrb[0].mxu0
        %v5377 = vadd.f32 %v4667, %v5376
        %v5378 = vpop.f32.mrb[0].mxu0
        %v5379 = vadd.f32 %v4663, %v5378
        %v5380 = vpop.f32.mrb[0].mxu0
        %v5381 = vadd.f32 %v4667, %v5380
        %5382 = vmatprep.mubr.bf16.mxu0 %v4499
        %5383 = vmatmul.mubr.bf16.gmra.mrb[0].mxu0 %v4498
        %v5384 = vpop.f32.mrb[0].mxu0
        %v5385 = vadd.f32 %v4663, %v5384
        %v5386 = vpop.f32.mrb[0].mxu0
        %v5387 = vadd.f32 %v4667, %v5386
        %v5388 = vpop.f32.mrb[0].mxu0
        %v5389 = vadd.f32 %v4663, %v5388
        %v5390 = vpop.f32.mrb[0].mxu0
        %v5391 = vadd.f32 %v4667, %v5390
        %5392 = vmatprep.mubr.bf16.mxu0 %v4507
        %5393 = vmatmul.mubr.bf16.gmra.mrb[0].mxu0 %v4506
        %v5394 = vpop.f32.mrb[0].mxu0
        %v5395 = vadd.f32 %v4663, %v5394
        %v5396 = vpop.f32.mrb[0].mxu0
        %v5397 = vadd.f32 %v4667, %v5396
        %v5398 = vpop.f32.mrb[0].mxu0
        %v5399 = vadd.f32 %v4663, %v5398
        %v5400 = vpop.f32.mrb[0].mxu0
        %v5401 = vadd.f32 %v4667, %v5400
        %5402 = vmatprep.mubr.bf16.mxu0 %v4515
        %5403 = vmatmul.mubr.bf16.gmra.mrb[0].mxu0 %v4514
        %v5404 = vpop.f32.mrb[0].mxu0
        %v5405 = vadd.f32 %v4663, %v5404
        %v5406 = vpop.f32.mrb[0].mxu0
        %v5407 = vadd.f32 %v4667, %v5406
        %v5408 = vpop.f32.mrb[0].mxu0
        %v5409 = vadd.f32 %v4663, %v5408
        %v5410 = vpop.f32.mrb[0].mxu0
        %v5411 = vadd.f32 %v4667, %v5410
        %5412 = vmatprep.mubr.bf16.mxu0 %v4523
        %5413 = vmatmul.mubr.bf16.gmra.mrb[0].mxu0 %v4522
        %v5414 = vpop.f32.mrb[0].mxu0
        %v5415 = vadd.f32 %v4663, %v5414
        %v5416 = vpop.f32.mrb[0].mxu0
        %v5417 = vadd.f32 %v4667, %v5416
        %v5418 = vpop.f32.mrb[0].mxu0
        %v5419 = vadd.f32 %v4663, %v5418
        %v5420 = vpop.f32.mrb[0].mxu0
        %v5421 = vadd.f32 %v4667, %v5420
        %5422 = vdwg.mxu0
        %5423 = vmatprep.subr.bf16.mxu0 %v5087
        %5424 = vmatpush1.bf16.msra.mxu0 %v5086
        %5425 = vmatprep.subr.bf16.mxu0 %v5089
        %5426 = vmatpush1.bf16.msra.mxu0 %v5088
        %5427 = vmatprep.subr.bf16.mxu0 %v5091
        %5428 = vmatpush1.bf16.msra.mxu0 %v5090
        %5429 = vmatprep.subr.bf16.mxu0 %v5093
        %5430 = vmatpush1.bf16.msra.mxu0 %v5092
        %5431 = vmatprep.subr.bf16.mxu0 %v5095
        %5432 = vmatpush1.bf16.msra.mxu0 %v5094
        %5433 = vmatprep.subr.bf16.mxu0 %v5097
        %5434 = vmatpush1.bf16.msra.mxu0 %v5096
        %5435 = vmatprep.subr.bf16.mxu0 %v5099
        %5436 = vmatpush1.bf16.msra.mxu0 %v5098
        %5437 = vmatprep.subr.bf16.mxu0 %v5101
        %5438 = vmatpush1.bf16.msra.mxu0 %v5100
        %5439 = vmatprep.subr.bf16.mxu0 %v5103
        %5440 = vmatpush1.bf16.msra.mxu0 %v5102
        %5441 = vmatprep.subr.bf16.mxu0 %v5105
        %5442 = vmatpush1.bf16.msra.mxu0 %v5104
        %5443 = vmatprep.subr.bf16.mxu0 %v5107
        %5444 = vmatpush1.bf16.msra.mxu0 %v5106
        %5445 = vmatprep.subr.bf16.mxu0 %v5109
        %5446 = vmatpush1.bf16.msra.mxu0 %v5108
        %5447 = vmatprep.subr.bf16.mxu0 %v5111
        %5448 = vmatpush1.bf16.msra.mxu0 %v5110
        %5449 = vmatprep.subr.bf16.mxu0 %v5113
        %5450 = vmatpush1.bf16.msra.mxu0 %v5112
        %5451 = vmatprep.subr.bf16.mxu0 %v5115
        %5452 = vmatpush1.bf16.msra.mxu0 %v5114
        %5453 = vmatprep.subr.bf16.mxu0 %v5117
        %5454 = vmatpush1.bf16.msra.mxu0 %v5116
        %5455 = vmatprep.mubr.bf16.mxu0 %v4469
        %5456 = vmatmul.mubr.bf16.gmra.mrb[0].mxu0 %v4468
        %v5457 = vpop.f32.mrb[0].mxu0
        %v5458 = vadd.f32 %v5345, %v5457
        %v5459 = vpop.f32.mrb[0].mxu0
        %v5460 = vadd.f32 %v5347, %v5459
        %v5461 = vpop.f32.mrb[0].mxu0
        %v5462 = vadd.f32 %v5349, %v5461
        %v5463 = vpop.f32.mrb[0].mxu0
        %v5464 = vadd.f32 %v5351, %v5463
        %5465 = vmatprep.mubr.bf16.mxu0 %v4477
        %5466 = vmatmul.mubr.bf16.gmra.mrb[0].mxu0 %v4476
        %v5467 = vpop.f32.mrb[0].mxu0
        %v5468 = vadd.f32 %v5355, %v5467
        %v5469 = vpop.f32.mrb[0].mxu0
        %v5470 = vadd.f32 %v5357, %v5469
        %v5471 = vpop.f32.mrb[0].mxu0
        %v5472 = vadd.f32 %v5359, %v5471
        %v5473 = vpop.f32.mrb[0].mxu0
        %v5474 = vadd.f32 %v5361, %v5473
        %5475 = vmatprep.mubr.bf16.mxu0 %v4485
        %5476 = vmatmul.mubr.bf16.gmra.mrb[0].mxu0 %v4484
        %v5477 = vpop.f32.mrb[0].mxu0
        %v5478 = vadd.f32 %v5365, %v5477
        %v5479 = vpop.f32.mrb[0].mxu0
        %v5480 = vadd.f32 %v5367, %v5479
        %v5481 = vpop.f32.mrb[0].mxu0
        %v5482 = vadd.f32 %v5369, %v5481
        %v5483 = vpop.f32.mrb[0].mxu0
        %v5484 = vadd.f32 %v5371, %v5483
        %5485 = vmatprep.mubr.bf16.mxu0 %v4493
        %5486 = vmatmul.mubr.bf16.gmra.mrb[0].mxu0 %v4492
        %v5487 = vpop.f32.mrb[0].mxu0
        %v5488 = vadd.f32 %v5375, %v5487
        %v5489 = vpop.f32.mrb[0].mxu0
        %v5490 = vadd.f32 %v5377, %v5489
        %v5491 = vpop.f32.mrb[0].mxu0
        %v5492 = vadd.f32 %v5379, %v5491
        %v5493 = vpop.f32.mrb[0].mxu0
        %v5494 = vadd.f32 %v5381, %v5493
        %5495 = vmatprep.mubr.bf16.mxu0 %v4501
        %5496 = vmatmul.mubr.bf16.gmra.mrb[0].mxu0 %v4500
        %v5497 = vpop.f32.mrb[0].mxu0
        %v5498 = vadd.f32 %v5385, %v5497
        %v5499 = vpop.f32.mrb[0].mxu0
        %v5500 = vadd.f32 %v5387, %v5499
        %v5501 = vpop.f32.mrb[0].mxu0
        %v5502 = vadd.f32 %v5389, %v5501
        %v5503 = vpop.f32.mrb[0].mxu0
        %v5504 = vadd.f32 %v5391, %v5503
        %5505 = vmatprep.mubr.bf16.mxu0 %v4509
        %5506 = vmatmul.mubr.bf16.gmra.mrb[0].mxu0 %v4508
        %v5507 = vpop.f32.mrb[0].mxu0
        %v5508 = vadd.f32 %v5395, %v5507
        %v5509 = vpop.f32.mrb[0].mxu0
        %v5510 = vadd.f32 %v5397, %v5509
        %v5511 = vpop.f32.mrb[0].mxu0
        %v5512 = vadd.f32 %v5399, %v5511
        %v5513 = vpop.f32.mrb[0].mxu0
        %v5514 = vadd.f32 %v5401, %v5513
        %5515 = vmatprep.mubr.bf16.mxu0 %v4517
        %5516 = vmatmul.mubr.bf16.gmra.mrb[0].mxu0 %v4516
        %v5517 = vpop.f32.mrb[0].mxu0
        %v5518 = vadd.f32 %v5405, %v5517
        %v5519 = vpop.f32.mrb[0].mxu0
        %v5520 = vadd.f32 %v5407, %v5519
        %v5521 = vpop.f32.mrb[0].mxu0
        %v5522 = vadd.f32 %v5409, %v5521
        %v5523 = vpop.f32.mrb[0].mxu0
        %v5524 = vadd.f32 %v5411, %v5523
        %5525 = vmatprep.mubr.bf16.mxu0 %v4525
        %5526 = vmatmul.mubr.bf16.gmra.mrb[0].mxu0 %v4524
        %v5527 = vpop.f32.mrb[0].mxu0
        %v5528 = vadd.f32 %v5415, %v5527
        %v5529 = vpop.f32.mrb[0].mxu0
        %v5530 = vadd.f32 %v5417, %v5529
        %v5531 = vpop.f32.mrb[0].mxu0
        %v5532 = vadd.f32 %v5419, %v5531
        %v5533 = vpop.f32.mrb[0].mxu0
        %v5534 = vadd.f32 %v5421, %v5533
        %5535 = vdwg.mxu0
        %5536 = vmatprep.subr.bf16.mxu0 %v5119
        %5537 = vmatpush1.bf16.msra.mxu0 %v5118
        %5538 = vmatprep.subr.bf16.mxu0 %v5121
        %5539 = vmatpush1.bf16.msra.mxu0 %v5120
        %5540 = vmatprep.subr.bf16.mxu0 %v5123
        %5541 = vmatpush1.bf16.msra.mxu0 %v5122
        %5542 = vmatprep.subr.bf16.mxu0 %v5125
        %5543 = vmatpush1.bf16.msra.mxu0 %v5124
        %5544 = vmatprep.subr.bf16.mxu0 %v5127
        %5545 = vmatpush1.bf16.msra.mxu0 %v5126
        %5546 = vmatprep.subr.bf16.mxu0 %v5129
        %5547 = vmatpush1.bf16.msra.mxu0 %v5128
        %5548 = vmatprep.subr.bf16.mxu0 %v5131
        %5549 = vmatpush1.bf16.msra.mxu0 %v5130
        %5550 = vmatprep.subr.bf16.mxu0 %v5133
        %5551 = vmatpush1.bf16.msra.mxu0 %v5132
        %5552 = vmatprep.subr.bf16.mxu0 %v5135
        %5553 = vmatpush1.bf16.msra.mxu0 %v5134
        %5554 = vmatprep.subr.bf16.mxu0 %v5137
        %5555 = vmatpush1.bf16.msra.mxu0 %v5136
        %5556 = vmatprep.subr.bf16.mxu0 %v5139
        %5557 = vmatpush1.bf16.msra.mxu0 %v5138
        %5558 = vmatprep.subr.bf16.mxu0 %v5141
        %5559 = vmatpush1.bf16.msra.mxu0 %v5140
        %5560 = vmatprep.subr.bf16.mxu0 %v5143
        %5561 = vmatpush1.bf16.msra.mxu0 %v5142
        %5562 = vmatprep.subr.bf16.mxu0 %v5145
        %5563 = vmatpush1.bf16.msra.mxu0 %v5144
        %5564 = vmatprep.subr.bf16.mxu0 %v5147
        %5565 = vmatpush1.bf16.msra.mxu0 %v5146
        %5566 = vmatprep.subr.bf16.mxu0 %v5149
        %5567 = vmatpush1.bf16.msra.mxu0 %v5148
        %5568 = vmatprep.mubr.bf16.mxu0 %v4471
        %5569 = vmatmul.mubr.bf16.gmra.mrb[0].mxu0 %v4470
        %v5570 = vpop.f32.mrb[0].mxu0
        %v5571 = vadd.f32 %v5458, %v5570
        %v5572 = vpop.f32.mrb[0].mxu0
        %v5573 = vadd.f32 %v5460, %v5572
        %v5574 = vpop.f32.mrb[0].mxu0
        %v5575 = vadd.f32 %v5462, %v5574
        %v5576 = vpop.f32.mrb[0].mxu0
        %v5577 = vadd.f32 %v5464, %v5576
        %5578 = vmatprep.mubr.bf16.mxu0 %v4479
        %5579 = vmatmul.mubr.bf16.gmra.mrb[0].mxu0 %v4478
        %v5580 = vpop.f32.mrb[0].mxu0
        %v5581 = vadd.f32 %v5468, %v5580
        %v5582 = vpop.f32.mrb[0].mxu0
        %v5583 = vadd.f32 %v5470, %v5582
        %v5584 = vpop.f32.mrb[0].mxu0
        %v5585 = vadd.f32 %v5472, %v5584
        %v5586 = vpop.f32.mrb[0].mxu0
        %v5587 = vadd.f32 %v5474, %v5586
        %5588 = vmatprep.mubr.bf16.mxu0 %v4487
        %5589 = vmatmul.mubr.bf16.gmra.mrb[0].mxu0 %v4486
        %v5590 = vpop.f32.mrb[0].mxu0
        %v5591 = vadd.f32 %v5478, %v5590
        %v5592 = vpop.f32.mrb[0].mxu0
        %v5593 = vadd.f32 %v5480, %v5592
        %v5594 = vpop.f32.mrb[0].mxu0
        %v5595 = vadd.f32 %v5482, %v5594
        %v5596 = vpop.f32.mrb[0].mxu0
        %v5597 = vadd.f32 %v5484, %v5596
        %5598 = vmatprep.mubr.bf16.mxu0 %v4495
        %5599 = vmatmul.mubr.bf16.gmra.mrb[0].mxu0 %v4494
        %v5600 = vpop.f32.mrb[0].mxu0
        %v5601 = vadd.f32 %v5488, %v5600
        %v5602 = vpop.f32.mrb[0].mxu0
        %v5603 = vadd.f32 %v5490, %v5602
        %v5604 = vpop.f32.mrb[0].mxu0
        %v5605 = vadd.f32 %v5492, %v5604
        %v5606 = vpop.f32.mrb[0].mxu0
        %v5607 = vadd.f32 %v5494, %v5606
        %5608 = vmatprep.mubr.bf16.mxu0 %v4503
        %5609 = vmatmul.mubr.bf16.gmra.mrb[0].mxu0 %v4502
        %v5610 = vpop.f32.mrb[0].mxu0
        %v5611 = vadd.f32 %v5498, %v5610
        %v5612 = vpop.f32.mrb[0].mxu0
        %v5613 = vadd.f32 %v5500, %v5612
        %v5614 = vpop.f32.mrb[0].mxu0
        %v5615 = vadd.f32 %v5502, %v5614
        %v5616 = vpop.f32.mrb[0].mxu0
        %v5617 = vadd.f32 %v5504, %v5616
        %5618 = vmatprep.mubr.bf16.mxu0 %v4511
        %5619 = vmatmul.mubr.bf16.gmra.mrb[0].mxu0 %v4510
        %v5620 = vpop.f32.mrb[0].mxu0
        %v5621 = vadd.f32 %v5508, %v5620
        %v5622 = vpop.f32.mrb[0].mxu0
        %v5623 = vadd.f32 %v5510, %v5622
        %v5624 = vpop.f32.mrb[0].mxu0
        %v5625 = vadd.f32 %v5512, %v5624
        %v5626 = vpop.f32.mrb[0].mxu0
        %v5627 = vadd.f32 %v5514, %v5626
        %5628 = vmatprep.mubr.bf16.mxu0 %v4519
        %5629 = vmatmul.mubr.bf16.gmra.mrb[0].mxu0 %v4518
        %v5630 = vpop.f32.mrb[0].mxu0
        %v5631 = vadd.f32 %v5518, %v5630
        %v5632 = vpop.f32.mrb[0].mxu0
        %v5633 = vadd.f32 %v5520, %v5632
        %v5634 = vpop.f32.mrb[0].mxu0
        %v5635 = vadd.f32 %v5522, %v5634
        %v5636 = vpop.f32.mrb[0].mxu0
        %v5637 = vadd.f32 %v5524, %v5636
        %5638 = vmatprep.mubr.bf16.mxu0 %v4527
        %5639 = vmatmul.mubr.bf16.gmra.mrb[0].mxu0 %v4526
        %v5640 = vpop.f32.mrb[0].mxu0
        %v5641 = vadd.f32 %v5528, %v5640
        %v5642 = vpop.f32.mrb[0].mxu0
        %v5643 = vadd.f32 %v5530, %v5642
        %v5644 = vpop.f32.mrb[0].mxu0
        %v5645 = vadd.f32 %v5532, %v5644
        %v5646 = vpop.f32.mrb[0].mxu0
        %v5647 = vadd.f32 %v5534, %v5646
        %5648 = vdwg.mxu0
        %5649 = vmatprep.subr.bf16.mxu0 %v5151
        %5650 = vmatpush1.bf16.msra.mxu0 %v5150
        %5651 = vmatprep.subr.bf16.mxu0 %v5153
        %5652 = vmatpush1.bf16.msra.mxu0 %v5152
        %5653 = vmatprep.subr.bf16.mxu0 %v5155
        %5654 = vmatpush1.bf16.msra.mxu0 %v5154
        %5655 = vmatprep.subr.bf16.mxu0 %v5157
        %5656 = vmatpush1.bf16.msra.mxu0 %v5156
        %5657 = vmatprep.subr.bf16.mxu0 %v5159
        %5658 = vmatpush1.bf16.msra.mxu0 %v5158
        %5659 = vmatprep.subr.bf16.mxu0 %v5161
        %5660 = vmatpush1.bf16.msra.mxu0 %v5160
        %5661 = vmatprep.subr.bf16.mxu0 %v5163
        %5662 = vmatpush1.bf16.msra.mxu0 %v5162
        %5663 = vmatprep.subr.bf16.mxu0 %v5165
        %5664 = vmatpush1.bf16.msra.mxu0 %v5164
        %5665 = vmatprep.subr.bf16.mxu0 %v5167
        %5666 = vmatpush1.bf16.msra.mxu0 %v5166
        %5667 = vmatprep.subr.bf16.mxu0 %v5169
        %5668 = vmatpush1.bf16.msra.mxu0 %v5168
        %5669 = vmatprep.subr.bf16.mxu0 %v5171
        %5670 = vmatpush1.bf16.msra.mxu0 %v5170
        %5671 = vmatprep.subr.bf16.mxu0 %v5173
        %5672 = vmatpush1.bf16.msra.mxu0 %v5172
        %5673 = vmatprep.subr.bf16.mxu0 %v5175
        %5674 = vmatpush1.bf16.msra.mxu0 %v5174
        %5675 = vmatprep.subr.bf16.mxu0 %v5177
        %5676 = vmatpush1.bf16.msra.mxu0 %v5176
        %5677 = vmatprep.subr.bf16.mxu0 %v5179
        %5678 = vmatpush1.bf16.msra.mxu0 %v5178
        %5679 = vmatprep.subr.bf16.mxu0 %v5181
        %5680 = vmatpush1.bf16.msra.mxu0 %v5180
        %5681 = vmatprep.mubr.bf16.mxu0 %v4473
        %5682 = vmatmul.mubr.bf16.gmra.mrb[0].mxu0 %v4472
        %v5683 = vpop.f32.mrb[0].mxu0
        %v5684 = vadd.f32 %v5571, %v5683
        %v5685 = vpop.f32.mrb[0].mxu0
        %v5686 = vadd.f32 %v5573, %v5685
        %v5687 = vpop.f32.mrb[0].mxu0
        %v5688 = vadd.f32 %v5575, %v5687
        %v5689 = vpop.f32.mrb[0].mxu0
        %v5690 = vadd.f32 %v5577, %v5689
        %5691 = vmatprep.mubr.bf16.mxu0 %v4481
        %5692 = vmatmul.mubr.bf16.gmra.mrb[0].mxu0 %v4480
        %v5693 = vpop.f32.mrb[0].mxu0
        %v5694 = vadd.f32 %v5581, %v5693
        %v5695 = vpop.f32.mrb[0].mxu0
        %v5696 = vadd.f32 %v5583, %v5695
        %v5697 = vpop.f32.mrb[0].mxu0
        %v5698 = vadd.f32 %v5585, %v5697
        %v5699 = vpop.f32.mrb[0].mxu0
        %v5700 = vadd.f32 %v5587, %v5699
        %5701 = vmatprep.mubr.bf16.mxu0 %v4489
        %5702 = vmatmul.mubr.bf16.gmra.mrb[0].mxu0 %v4488
        %v5703 = vpop.f32.mrb[0].mxu0
        %v5704 = vadd.f32 %v5591, %v5703
        %v5705 = vpop.f32.mrb[0].mxu0
        %v5706 = vadd.f32 %v5593, %v5705
        %v5707 = vpop.f32.mrb[0].mxu0
        %v5708 = vadd.f32 %v5595, %v5707
        %v5709 = vpop.f32.mrb[0].mxu0
        %v5710 = vadd.f32 %v5597, %v5709
        %5711 = vmatprep.mubr.bf16.mxu0 %v4497
        %5712 = vmatmul.mubr.bf16.gmra.mrb[0].mxu0 %v4496
        %v5713 = vpop.f32.mrb[0].mxu0
        %v5714 = vadd.f32 %v5601, %v5713
        %v5715 = vpop.f32.mrb[0].mxu0
        %v5716 = vadd.f32 %v5603, %v5715
        %v5717 = vpop.f32.mrb[0].mxu0
        %v5718 = vadd.f32 %v5605, %v5717
        %v5719 = vpop.f32.mrb[0].mxu0
        %v5720 = vadd.f32 %v5607, %v5719
        %5721 = vmatprep.mubr.bf16.mxu0 %v4505
        %5722 = vmatmul.mubr.bf16.gmra.mrb[0].mxu0 %v4504
        %v5723 = vpop.f32.mrb[0].mxu0
        %v5724 = vadd.f32 %v5611, %v5723
        %v5725 = vpop.f32.mrb[0].mxu0
        %v5726 = vadd.f32 %v5613, %v5725
        %v5727 = vpop.f32.mrb[0].mxu0
        %v5728 = vadd.f32 %v5615, %v5727
        %v5729 = vpop.f32.mrb[0].mxu0
        %v5730 = vadd.f32 %v5617, %v5729
        %5731 = vmatprep.mubr.bf16.mxu0 %v4513
        %5732 = vmatmul.mubr.bf16.gmra.mrb[0].mxu0 %v4512
        %v5733 = vpop.f32.mrb[0].mxu0
        %v5734 = vadd.f32 %v5621, %v5733
        %v5735 = vpop.f32.mrb[0].mxu0
        %v5736 = vadd.f32 %v5623, %v5735
        %v5737 = vpop.f32.mrb[0].mxu0
        %v5738 = vadd.f32 %v5625, %v5737
        %v5739 = vpop.f32.mrb[0].mxu0
        %v5740 = vadd.f32 %v5627, %v5739
        %5741 = vmatprep.mubr.bf16.mxu0 %v4521
        %5742 = vmatmul.mubr.bf16.gmra.mrb[0].mxu0 %v4520
        %v5743 = vpop.f32.mrb[0].mxu0
        %v5744 = vadd.f32 %v5631, %v5743
        %v5745 = vpop.f32.mrb[0].mxu0
        %v5746 = vadd.f32 %v5633, %v5745
        %v5747 = vpop.f32.mrb[0].mxu0
        %v5748 = vadd.f32 %v5635, %v5747
        %v5749 = vpop.f32.mrb[0].mxu0
        %v5750 = vadd.f32 %v5637, %v5749
        %5751 = vmatprep.mubr.bf16.mxu0 %v4529
        %5752 = vmatmul.mubr.bf16.gmra.mrb[0].mxu0 %v4528
        %v5753 = vpop.f32.mrb[0].mxu0
        %v5754 = vadd.f32 %v5641, %v5753
        %v5755 = vpop.f32.mrb[0].mxu0
        %v5756 = vadd.f32 %v5643, %v5755
        %v5757 = vpop.f32.mrb[0].mxu0
        %v5758 = vadd.f32 %v5645, %v5757
        %v5759 = vpop.f32.mrb[0].mxu0
        %v5760 = vadd.f32 %v5647, %v5759
        %5761 = vdwg.mxu0
        %v5762 = vadd.f32 %v2684, %v5684
        %v5763 = vadd.f32 %v2685, %v5686
        %v5764 = vadd.f32 %v2686, %v5688
        %v5765 = vadd.f32 %v2687, %v5690
        %v5766 = vadd.f32 %v2688, %v5694
        %v5767 = vadd.f32 %v2689, %v5696
        %v5768 = vadd.f32 %v2690, %v5698
        %v5769 = vadd.f32 %v2691, %v5700
        %v5770 = vadd.f32 %v2692, %v5704
        %v5771 = vadd.f32 %v2693, %v5706
        %v5772 = vadd.f32 %v2694, %v5708
        %v5773 = vadd.f32 %v2695, %v5710
        %v5774 = vadd.f32 %v2696, %v5714
        %v5775 = vadd.f32 %v2697, %v5716
        %v5776 = vadd.f32 %v2698, %v5718
        %v5777 = vadd.f32 %v2699, %v5720
        %v5778 = vadd.f32 %v2700, %v5724
        %v5779 = vadd.f32 %v2701, %v5726
        %v5780 = vadd.f32 %v2702, %v5728
        %v5781 = vadd.f32 %v2703, %v5730
        %v5782 = vadd.f32 %v2704, %v5734
        %v5783 = vadd.f32 %v2705, %v5736
        %v5784 = vadd.f32 %v2706, %v5738
        %v5785 = vadd.f32 %v2707, %v5740
        %v5786 = vadd.f32 %v2708, %v5744
        %v5787 = vadd.f32 %v2709, %v5746
        %v5788 = vadd.f32 %v2710, %v5748
        %v5789 = vadd.f32 %v2711, %v5750
        %v5790 = vadd.f32 %v2712, %v5754
        %v5791 = vadd.f32 %v2713, %v5756
        %v5792 = vadd.f32 %v2714, %v5758
        %v5793 = vadd.f32 %v2715, %v5760
        %5794 = vst [vmem:[%s490] sm:$0xff] %v5762
        %5795 = vst [vmem:[%s490 + $0x8] sm:$0xff] %v5763
        %5796 = vst [vmem:[%s490 + $0x10] sm:$0xff] %v5764
        %5797 = vst [vmem:[%s490 + $0x18] sm:$0xff] %v5765
        %5798 = vst [vmem:[%s490 + $0x20] sm:$0xff] %v5766
        %5799 = vst [vmem:[%s490 + $0x28] sm:$0xff] %v5767
        %5800 = vst [vmem:[%s490 + $0x30] sm:$0xff] %v5768
        %5801 = vst [vmem:[%s490 + $0x38] sm:$0xff] %v5769
        %5802 = vst [vmem:[%s490 + $0x40] sm:$0xff] %v5770
        %5803 = vst [vmem:[%s490 + $0x48] sm:$0xff] %v5771
        %5804 = vst [vmem:[%s490 + $0x50] sm:$0xff] %v5772
        %5805 = vst [vmem:[%s490 + $0x58] sm:$0xff] %v5773
        %5806 = vst [vmem:[%s490 + $0x60] sm:$0xff] %v5774
        %5807 = vst [vmem:[%s490 + $0x68] sm:$0xff] %v5775
        %5808 = vst [vmem:[%s490 + $0x70] sm:$0xff] %v5776
        %5809 = vst [vmem:[%s490 + $0x78] sm:$0xff] %v5777
        %5810 = vst [vmem:[%s490 + $0x80] sm:$0xff] %v5778
        %5811 = vst [vmem:[%s490 + $0x88] sm:$0xff] %v5779
        %5812 = vst [vmem:[%s490 + $0x90] sm:$0xff] %v5780
        %5813 = vst [vmem:[%s490 + $0x98] sm:$0xff] %v5781
        %5814 = vst [vmem:[%s490 + $0xa0] sm:$0xff] %v5782
        %5815 = vst [vmem:[%s490 + $0xa8] sm:$0xff] %v5783
        %5816 = vst [vmem:[%s490 + $0xb0] sm:$0xff] %v5784
        %5817 = vst [vmem:[%s490 + $0xb8] sm:$0xff] %v5785
        %5818 = vst [vmem:[%s490 + $0xc0] sm:$0xff] %v5786
        %5819 = vst [vmem:[%s490 + $0xc8] sm:$0xff] %v5787
        %5820 = vst [vmem:[%s490 + $0xd0] sm:$0xff] %v5788
        %5821 = vst [vmem:[%s490 + $0xd8] sm:$0xff] %v5789
        %5822 = vst [vmem:[%s490 + $0xe0] sm:$0xff] %v5790
        %5823 = vst [vmem:[%s490 + $0xe8] sm:$0xff] %v5791
        %5824 = vst [vmem:[%s490 + $0xf0] sm:$0xff] %v5792
        %5825 = vst [vmem:[%s490 + $0xf8] sm:$0xff] %v5793
        %s5826 = sand.u32 %s296, 1
        %s5827 = scalar_lea.sflag [#allocation4], %s5826
        %s5828 = sand.u32 %s296, 1
        %s5829 = smul.addr %s5828, 256
        %s5830 = scalar_lea.vmem [#allocation11], %s5829
        // Predicated region
        $region89: #{tpu_custom_call.1} parent=67 // pred_check
          %p5831 = pneg %p306
        $region90: #{tpu_custom_call.1} parent=67 // pred_check_branch
          %5833 = sbr.rel (%p5831) target = $region92
        $region91: #{tpu_custom_call.1} parent=67 // pred_region
          %s5834 = smul.u32 2, %s31
          %s5836 = ssub.s32 4096, 4096
          %5837 = vsyncadd %s5827, %s5836
          %s5838 = smul.addr %s5834, 16
          %s5839 = smul.addr %s5838, 128
          %s5840 = scalar_lea.hbm %s12, %s5839
          %s5841 = sshll.u32 %s5830, 4
          %s5842 = int_to_ptr.vmem [resolvable:$true] %s5841
          %5847 = dma.vmem_to_hbm [thread:$0]  %s5842, 4096, %s5840, %s5827, 256, 256, 16
        $region92: #{tpu_custom_call.1} parent=67 // pred_fallthru
          _
      $region68: #{tpu_custom_call.1} parent=5 // pred_fallthru
        _
      %p5848 = scmp.le.s32.totalorder 2, %s26
      // Predicated region
      $region93: #{tpu_custom_call.1} parent=5 // pred_check
        %p5849 = pneg %p5848
      $region94: #{tpu_custom_call.1} parent=5 // pred_check_branch
        %5851 = sbr.rel (%p5849) target = $region96
      $region95: #{tpu_custom_call.1} parent=5 // pred_region
        %s5852 = ssub.s32 %s26, 2
        // Predicated region
        $region97: #{tpu_custom_call.1} parent=95 // pred_check
          %p5853 = pneg %p312
        $region98: #{tpu_custom_call.1} parent=95 // pred_check_branch
          %5855 = sbr.rel (%p5853) target = $region100
        $region99: #{tpu_custom_call.1} parent=95 // pred_region
          %s5856 = sand.u32 %s297, 1
          %s5857 = scalar_lea.sflag [#allocation4], %s5856
          %s5858 = sand.u32 %s297, 1
          %s5859 = smul.addr %s5858, 256
          %s5860 = scalar_lea.vmem [#allocation11], %s5859
          %5861 = dma.done %s5857, 4096
        $region100: #{tpu_custom_call.1} parent=95 // pred_fallthru
          _
      $region96: #{tpu_custom_call.1} parent=5 // pred_fallthru
        _
    $region6: #{tpu_custom_call.1} parent=1 // loop_footer
      %s30 = sadd.s32 1, %s26
    $region7: #{tpu_custom_call.1} parent=1 // loop_footer_branch
      %25 = sbr.rel target = $region3
    $region8: #{tpu_custom_call.1} parent=1 // loop_exit
      _
    %5862 = vsyncpa [#allocation3], 1
    %s5863 = scalar_lea.sflag [#allocation3], 1
    %5864 = vsyncpa %s5863, 1
    %5865 = vsyncpa [#allocation6], 1
    %5866 = vsyncpa [#allocation9], 1
    %5867 = vsyncpa [#allocation4], 1
    %s5868 = scalar_lea.sflag [#allocation4], 1
    %5869 = vsyncpa %s5868, 1

</llo_original>
